<compile_context>
chip_gen: v6e
topology: v6e:2x2x1
jax: 0.10.0
libtpu: 0.0.40
codegen_flags: <defaults>
</compile_context>

<pallas_src>
import functools

import jax
import jax.numpy as jnp
from jax import lax
from jax.experimental import pallas as pl
from jax.experimental.pallas import tpu as pltpu

BN_EPS = 1e-5


# --------------------------------------------------------------------------- #
# Pallas kernels
# --------------------------------------------------------------------------- #

def _fused_matmul_bn_relu_kernel(x_ref, w_ref, g_ref, b_ref, o_ref, *,
                                 groups, n_valid, eps):
    """relu(batchnorm(x @ w)) with the whole layer resident in VMEM.

    x: (Mp, Kp)          matmul dtype (bf16 or f32); padded region is exact zeros
    w: (Kp, groups*Co)   columns ordered (group, channel)
    g, b: (1, Co)        BN gamma / beta (float32)
    o: (Mp, groups*Co)

    A BN "channel" appears in `groups` column blocks (the 4 sub-pixel parities
    for stride-2 layers, the 16 spatial taps for conv1), so per-channel stats
    reduce over the M rows AND the `groups` column blocks.  Only the first
    `n_valid` rows are real data.
    """
    mp = x_ref.shape[0]
    co = w_ref.shape[1] // groups
    inv_cnt = 1.0 / float(n_valid * groups)

    y = jnp.dot(x_ref[...], w_ref[...], preferred_element_type=jnp.float32)

    # Mean: padded rows are exactly zero, so just divide by the real count.
    s = jnp.sum(y, axis=0, keepdims=True)                    # (1, G*Co)
    s_co = s[:, 0:co]
    for g in range(1, groups):
        s_co = s_co + s[:, g * co:(g + 1) * co]
    mean_co = s_co * inv_cnt                                 # (1, Co)
    mean = jnp.concatenate([mean_co] * groups, axis=1)       # (1, G*Co)

    # Centered (two-pass) variance; mask out padded rows explicitly.
    row = lax.broadcasted_iota(jnp.int32, (mp, 1), 0)
    yc = jnp.where(row < n_valid, y - mean, 0.0)
    ss = jnp.sum(yc * yc, axis=0, keepdims=True)
    ss_co = ss[:, 0:co]
    for g in range(1, groups):
        ss_co = ss_co + ss[:, g * co:(g + 1) * co]
    var_co = ss_co * inv_cnt

    scale_co = g_ref[...] * lax.rsqrt(var_co + eps)          # (1, Co)
    shift_co = b_ref[...] - mean_co * scale_co
    scale = jnp.concatenate([scale_co] * groups, axis=1)
    shift = jnp.concatenate([shift_co] * groups, axis=1)

    o_ref[...] = jnp.maximum(y * scale + shift, 0.0).astype(o_ref.dtype)


def _matmul_tanh_t_kernel(wt_ref, xt_ref, o_ref):
    """o = tanh(wt @ xt): transposed GEMM so M (not Co=3) sits on lanes."""
    o_ref[...] = jnp.tanh(
        jnp.dot(wt_ref[...], xt_ref[...], preferred_element_type=jnp.float32)
    ).astype(o_ref.dtype)


# --------------------------------------------------------------------------- #
# pallas_call wrappers
# --------------------------------------------------------------------------- #

def fused_matmul_bn_relu(x2d, w2d, gamma, beta, *, groups, n_valid,
                         out_dtype, eps=BN_EPS):
    """One no-grid pallas_call per layer: matmul + BN(train) + ReLU fused."""
    m, k = x2d.shape
    k2, c = w2d.shape
    assert k == k2 and c % groups == 0
    mp = -(-m // 8) * 8            # sublane multiple (only conv1 actually pads)
    kp = -(-k // 128) * 128        # keep the contraction lane-aligned, real zeros
    if (mp, kp) != (m, k):
        x2d = jnp.pad(x2d, ((0, mp - m), (0, kp - k)))
    if kp != k:
        w2d = jnp.pad(w2d, ((0, kp - k), (0, 0)))
    co = c // groups
    out = pl.pallas_call(
        functools.partial(_fused_matmul_bn_relu_kernel, groups=groups,
                          n_valid=n_valid, eps=eps),
        out_shape=jax.ShapeDtypeStruct((mp, c), out_dtype),
    )(x2d, w2d,
      gamma.reshape(1, co).astype(jnp.float32),
      beta.reshape(1, co).astype(jnp.float32))
    return out[:m]


def matmul_tanh_transposed(wt, xt, *, tile_m=1152):
    """tanh(wt @ xt) with M on lanes, tiled into "parallel" blocks (v7x 2 TCs)."""
    cop, k = wt.shape
    k2, m = xt.shape
    assert k == k2
    n_tiles = -(-m // tile_m)
    mp = n_tiles * tile_m
    if mp != m:
        xt = jnp.pad(xt, ((0, 0), (0, mp - m)))
    out = pl.pallas_call(
        _matmul_tanh_t_kernel,
        out_shape=jax.ShapeDtypeStruct((cop, mp), jnp.float32),
        grid=(n_tiles,),
        in_specs=[pl.BlockSpec((cop, k), lambda i: (0, 0)),
                  pl.BlockSpec((k, tile_m), lambda i: (0, i))],
        out_specs=pl.BlockSpec((cop, tile_m), lambda i: (0, i)),
        compiler_params=pltpu.CompilerParams(
            dimension_semantics=("parallel",)),
    )(wt, xt)
    return out[:, :m]


# --------------------------------------------------------------------------- #
# JAX glue: ConvTranspose2d lowerings
# --------------------------------------------------------------------------- #

# Sub-pixel decomposition of ConvTranspose2d(k=4, s=2, p=1):
# output row 2i+di uses input rows {i-1, i} (kernel rows {3, 1}) for di=0 and
# {i, i+1} (kernel rows {2, 0}) for di=1; same for columns.  _KY[di][a] is the
# kernel row used by window position a (input row i-1+a); -1 means no tap.
_KY = ((3, 1, -1), (-1, 2, 0))


def _subpixel_weight(w):
    """(Ci, Co, 4, 4) ConvTranspose weight -> (9*Ci, 4*Co) sub-pixel GEMM weight."""
    ci, co = w.shape[0], w.shape[1]
    w_eff = jnp.zeros((3, 3, ci, 2, 2, co), w.dtype)
    for a in range(3):
        for di in range(2):
            ky = _KY[di][a]
            if ky < 0:
                continue
            for b in range(3):
                for dj in range(2):
                    kx = _KY[dj][b]
                    if kx < 0:
                        continue
                    w_eff = w_eff.at[a, b, :, di, dj, :].set(w[:, :, ky, kx])
    # rows ordered (a, b, ci), cols ordered (di, dj, co)
    return w_eff.reshape(9 * ci, 4 * co)


def _subpixel_convt_bn_relu(x_nhwc, w, gamma, beta, *, compute_dtype):
    """ConvTranspose2d(k=4, s=2, p=1) + BN + ReLU via one fused Pallas matmul."""
    n, h, wd, ci = x_nhwc.shape
    co = w.shape[1]
    # TODO(synk): patch extraction / pixel shuffle are XLA glue; folding them
    # into the kernel (manual DMA of shifted windows) would remove the last
    # extra HBM pass over the activations.
    xp = jnp.pad(x_nhwc.astype(compute_dtype), ((0, 0), (1, 1), (1, 1), (0, 0)))
    cols = [xp[:, a:a + h, b:b + wd, :] for a in range(3) for b in range(3)]
    patches = jnp.concatenate(cols, axis=-1).reshape(n * h * wd, 9 * ci)
    w_eff = _subpixel_weight(w).astype(compute_dtype)
    y = fused_matmul_bn_relu(patches, w_eff, gamma, beta, groups=4,
                             n_valid=n * h * wd, out_dtype=compute_dtype)
    # pixel shuffle: (n, i, j, di, dj, co) -> (n, 2i+di, 2j+dj, co)
    y = y.reshape(n, h, wd, 2, 2, co).transpose(0, 1, 3, 2, 4, 5)
    return y.reshape(n, 2 * h, 2 * wd, co)


def _conv5_tanh(x_nhwc, w, *, compute_dtype, tile_m=1152):
    """ConvTranspose2d(k=4, s=1, p=1) + tanh as a lane-dense transposed GEMM."""
    n, h, wd, ci = x_nhwc.shape
    co, k = w.shape[1], w.shape[2]
    pad = k - 1 - 1
    oh, ow = h + 2 * pad - k + 1, wd + 2 * pad - k + 1
    xp = jnp.pad(x_nhwc.astype(compute_dtype),
                 ((0, 0), (pad, pad), (pad, pad), (0, 0)))
    cols = [xp[:, a:a + oh, b:b + ow, :] for a in range(k) for b in range(k)]
    patches = jnp.concatenate(cols, axis=-1).reshape(n * oh * ow, k * k * ci)
    xt = patches.T                                           # (K, M): M on lanes
    w_mat = jnp.flip(w, (2, 3)).transpose(2, 3, 0, 1).reshape(k * k * ci, co)
    cop = 8                                                  # pad Co=3 -> 8 rows
    wt = jnp.zeros((cop, k * k * ci), w.dtype).at[:co].set(w_mat.T)
    kk = xt.shape[0]
    kp = -(-kk // 128) * 128
    if kp != kk:
        xt = jnp.pad(xt, ((0, kp - kk), (0, 0)))
        wt = jnp.pad(wt, ((0, 0), (0, kp - kk)))
    out = matmul_tanh_transposed(wt.astype(compute_dtype), xt, tile_m=tile_m)
    out = out[:co].reshape(co, n, oh, ow)
    return jnp.transpose(out, (1, 0, 2, 3))                  # NCHW


def generator_forward(x_nchw, params, *, compute_dtype=jnp.bfloat16):
    """DCGAN Generator forward pass.  Returns NCHW float32."""
    cd = compute_dtype
    n = x_nchw.shape[0]

    # conv1: ConvTranspose2d(k=4, s=1, p=0) on a 1x1 input == plain matmul.
    w1 = params["conv1"]
    ci, co1 = w1.shape[0], w1.shape[1]
    x2d = x_nchw.reshape(n, ci).astype(cd)
    w_mat = jnp.transpose(w1, (0, 2, 3, 1)).reshape(ci, 16 * co1).astype(cd)
    y = fused_matmul_bn_relu(x2d, w_mat, params["conv1_gamma"],
                             params["conv1_beta"], groups=16, n_valid=n,
                             out_dtype=cd)
    x = y.reshape(n, 4, 4, co1)                              # NHWC

    # conv2..conv4: ConvTranspose2d(k=4, s=2, p=1) + BN + ReLU.
    for name in ("conv2", "conv3", "conv4"):
        x = _subpixel_convt_bn_relu(x, params[name], params[name + "_gamma"],
                                    params[name + "_beta"], compute_dtype=cd)

    # conv5: ConvTranspose2d(k=4, s=1, p=1) + tanh.
    return _conv5_tanh(x, params["conv5"], compute_dtype=cd)


# --------------------------------------------------------------------------- #
# Pure-JAX reference (mirrors the PyTorch module, training-mode BN) + params
# --------------------------------------------------------------------------- #

def reference_forward(x_nchw, params):
    def convt(x, w, stride, padding):
        kern = jnp.flip(w, (2, 3)).transpose(1, 0, 2, 3)     # (Co, Ci, k, k)
        pad = w.shape[2] - 1 - padding
        return lax.conv_general_dilated(
            x, kern, window_strides=(1, 1), padding=[(pad, pad), (pad, pad)],
            lhs_dilation=(stride, stride),
            dimension_numbers=("NCHW", "OIHW", "NCHW"),
            precision=lax.Precision.HIGHEST)

    def bn_relu(x, gamma, beta):
        mean = jnp.mean(x, axis=(0, 2, 3), keepdims=True)
        var = jnp.var(x, axis=(0, 2, 3), keepdims=True)      # biased (train mode)
        xh = (x - mean) * lax.rsqrt(var + BN_EPS)
        return jax.nn.relu(xh * gamma[None, :, None, None]
                           + beta[None, :, None, None])

    h = bn_relu(convt(x_nchw, params["conv1"], 1, 0),
                params["conv1_gamma"], params["conv1_beta"])
    h = bn_relu(convt(h, params["conv2"], 2, 1),
                params["conv2_gamma"], params["conv2_beta"])
    h = bn_relu(convt(h, params["conv3"], 2, 1),
                params["conv3_gamma"], params["conv3_beta"])
    h = bn_relu(convt(h, params["conv4"], 2, 1),
                params["conv4_gamma"], params["conv4_beta"])
    return jnp.tanh(convt(h, params["conv5"], 1, 1))


def init_params(key, input_size=32, gf=8):
    conv_shapes = {
        "conv1": (input_size, gf * 8, 4, 4),
        "conv2": (gf * 8, gf * 4, 4, 4),
        "conv3": (gf * 4, gf * 2, 4, 4),
        "conv4": (gf * 2, gf, 4, 4),
        "conv5": (gf, 3, 4, 4),
    }
    params = {}
    keys = jax.random.split(key, 3 * len(conv_shapes))
    for i, (name, shp) in enumerate(conv_shapes.items()):
        params[name] = 0.05 * jax.random.normal(keys[3 * i], shp, jnp.float32)
        if name != "conv5":
            c = shp[1]
            # mildly perturbed gamma/beta so the BN affine path is exercised
            params[name + "_gamma"] = (
                1.0 + 0.1 * jax.random.normal(keys[3 * i + 1], (c,), jnp.float32))
            params[name + "_beta"] = (
                0.1 * jax.random.normal(keys[3 * i + 2], (c,), jnp.float32))
    return params


if __name__ == "__main__":
    key = jax.random.PRNGKey(0)
    pkey, xkey = jax.random.split(key)

    # Small, module-consistent sizes: latent (batch, input_size, 1, 1).
    batch, input_size, gen_features = 2, 32, 8
    params = init_params(pkey, input_size=input_size, gf=gen_features)
    x = jax.random.normal(xkey, (batch, input_size, 1, 1), dtype=jnp.float32)

    ref = jax.block_until_ready(reference_forward(x, params))
    fwd = jax.jit(generator_forward, static_argnames=("compute_dtype",))

    # f32-operand path: tight check of the lowering (sub-pixel / im2col / BN).
    out_f32 = jax.block_until_ready(fwd(x, params, compute_dtype=jnp.float32))
    # ConvTranspose chain: 1 -> 4 -> 8 -> 16 -> 32 -> 33
    assert out_f32.shape == (batch, 3, 33, 33), out_f32.shape
    err_f32 = float(jnp.max(jnp.abs(out_f32 - ref)))
    assert err_f32 < 3e-2, f"f32 path max|diff|={err_f32}"

    # bf16 MXU-operand path (recommended on v5e/v6e/v7x): loose check.
    out_bf16 = jax.block_until_ready(fwd(x, params, compute_dtype=jnp.bfloat16))
    assert out_bf16.shape == (batch, 3, 33, 33), out_bf16.shape
    assert bool(jnp.all(jnp.isfinite(out_bf16)))
    err_bf16 = float(jnp.max(jnp.abs(out_bf16 - ref)))
    assert err_bf16 < 0.15, f"bf16 path max|diff|={err_bf16}"

    print("KERNEL_OK")
</pallas_src>

<mosaic_0001>
module attributes {stable_mosaic.version = 11 : i64} {
  func.func @_fused_matmul_bn_relu_kernel(%arg0: memref<8x128xf32, #tpu.memory_space<vmem>>, %arg1: memref<128x1024xf32, #tpu.memory_space<vmem>>, %arg2: memref<1x64xf32, #tpu.memory_space<vmem>>, %arg3: memref<1x64xf32, #tpu.memory_space<vmem>>, %arg4: memref<8x1024xf32, #tpu.memory_space<vmem>>) attributes {dimension_semantics = [], scalar_prefetch = 0 : i64, scratch_operands = 0 : i64, tpu.core_type = #tpu.core_type<tc>} {
    %c0 = arith.constant 0 : index
    %c0_0 = arith.constant 0 : index
    %0 = vector.load %arg0[%c0, %c0_0] : memref<8x128xf32, #tpu.memory_space<vmem>>, vector<8x128xf32>
    %c0_1 = arith.constant 0 : index
    %c0_2 = arith.constant 0 : index
    %1 = vector.load %arg1[%c0_1, %c0_2] : memref<128x1024xf32, #tpu.memory_space<vmem>>, vector<128x1024xf32>
    %cst = arith.constant dense<0.000000e+00> : vector<8x1024xf32>
    %2 = tpu.matmul %0, %1, %cst {dimension_numbers = #tpu.dot_dimension_numbers<[1], [0], [0], [1], [0, 0, 1, 1], [], []>} : vector<8x128xf32>, vector<128x1024xf32>, vector<8x1024xf32> -> vector<8x1024xf32>
    %cst_3 = arith.constant dense<0.000000e+00> : vector<1024xf32>
    %3 = vector.multi_reduction <add>, %2, %cst_3 [0] : vector<8x1024xf32> to vector<1024xf32>
    %4 = vector.shape_cast %3 : vector<1024xf32> to vector<1x1024xf32>
    %5 = vector.extract_strided_slice %4 {offsets = [0, 0], sizes = [1, 64], strides = [1, 1]} : vector<1x1024xf32> to vector<1x64xf32>
    %6 = vector.extract_strided_slice %4 {offsets = [0, 64], sizes = [1, 64], strides = [1, 1]} : vector<1x1024xf32> to vector<1x64xf32>
    %7 = arith.addf %5, %6 : vector<1x64xf32>
    %8 = vector.extract_strided_slice %4 {offsets = [0, 128], sizes = [1, 64], strides = [1, 1]} : vector<1x1024xf32> to vector<1x64xf32>
    %9 = arith.addf %7, %8 : vector<1x64xf32>
    %10 = vector.extract_strided_slice %4 {offsets = [0, 192], sizes = [1, 64], strides = [1, 1]} : vector<1x1024xf32> to vector<1x64xf32>
    %11 = arith.addf %9, %10 : vector<1x64xf32>
    %12 = vector.extract_strided_slice %4 {offsets = [0, 256], sizes = [1, 64], strides = [1, 1]} : vector<1x1024xf32> to vector<1x64xf32>
    %13 = arith.addf %11, %12 : vector<1x64xf32>
    %14 = vector.extract_strided_slice %4 {offsets = [0, 320], sizes = [1, 64], strides = [1, 1]} : vector<1x1024xf32> to vector<1x64xf32>
    %15 = arith.addf %13, %14 : vector<1x64xf32>
    %16 = vector.extract_strided_slice %4 {offsets = [0, 384], sizes = [1, 64], strides = [1, 1]} : vector<1x1024xf32> to vector<1x64xf32>
    %17 = arith.addf %15, %16 : vector<1x64xf32>
    %18 = vector.extract_strided_slice %4 {offsets = [0, 448], sizes = [1, 64], strides = [1, 1]} : vector<1x1024xf32> to vector<1x64xf32>
    %19 = arith.addf %17, %18 : vector<1x64xf32>
    %20 = vector.extract_strided_slice %4 {offsets = [0, 512], sizes = [1, 64], strides = [1, 1]} : vector<1x1024xf32> to vector<1x64xf32>
    %21 = arith.addf %19, %20 : vector<1x64xf32>
    %22 = vector.extract_strided_slice %4 {offsets = [0, 576], sizes = [1, 64], strides = [1, 1]} : vector<1x1024xf32> to vector<1x64xf32>
    %23 = arith.addf %21, %22 : vector<1x64xf32>
    %24 = vector.extract_strided_slice %4 {offsets = [0, 640], sizes = [1, 64], strides = [1, 1]} : vector<1x1024xf32> to vector<1x64xf32>
    %25 = arith.addf %23, %24 : vector<1x64xf32>
    %26 = vector.extract_strided_slice %4 {offsets = [0, 704], sizes = [1, 64], strides = [1, 1]} : vector<1x1024xf32> to vector<1x64xf32>
    %27 = arith.addf %25, %26 : vector<1x64xf32>
    %28 = vector.extract_strided_slice %4 {offsets = [0, 768], sizes = [1, 64], strides = [1, 1]} : vector<1x1024xf32> to vector<1x64xf32>
    %29 = arith.addf %27, %28 : vector<1x64xf32>
    %30 = vector.extract_strided_slice %4 {offsets = [0, 832], sizes = [1, 64], strides = [1, 1]} : vector<1x1024xf32> to vector<1x64xf32>
    %31 = arith.addf %29, %30 : vector<1x64xf32>
    %32 = vector.extract_strided_slice %4 {offsets = [0, 896], sizes = [1, 64], strides = [1, 1]} : vector<1x1024xf32> to vector<1x64xf32>
    %33 = arith.addf %31, %32 : vector<1x64xf32>
    %34 = vector.extract_strided_slice %4 {offsets = [0, 960], sizes = [1, 64], strides = [1, 1]} : vector<1x1024xf32> to vector<1x64xf32>
    %35 = arith.addf %33, %34 : vector<1x64xf32>
    %cst_4 = arith.constant 3.125000e-02 : f32
    %36 = vector.broadcast %cst_4 : f32 to vector<1x64xf32>
    %37 = arith.mulf %35, %36 : vector<1x64xf32>
    %38 = tpu.concatenate %37, %37, %37, %37, %37, %37, %37, %37, %37, %37, %37, %37, %37, %37, %37, %37 in 1 : vector<1x64xf32>, vector<1x64xf32>, vector<1x64xf32>, vector<1x64xf32>, vector<1x64xf32>, vector<1x64xf32>, vector<1x64xf32>, vector<1x64xf32>, vector<1x64xf32>, vector<1x64xf32>, vector<1x64xf32>, vector<1x64xf32>, vector<1x64xf32>, vector<1x64xf32>, vector<1x64xf32>, vector<1x64xf32> -> vector<1x1024xf32>
    %39 = tpu.iota {dimensions = array<i32: 0>} : vector<8x1xi32>
    %c2_i32 = arith.constant 2 : i32
    %40 = vector.broadcast %c2_i32 : i32 to vector<8x1xi32>
    %41 = arith.cmpi slt, %39, %40 : vector<8x1xi32>
    %42 = vector.broadcast %38 : vector<1x1024xf32> to vector<8x1024xf32>
    %43 = arith.subf %2, %42 : vector<8x1024xf32>
    %cst_5 = arith.constant 0.000000e+00 : f32
    %44 = vector.shape_cast %41 : vector<8x1xi1> to vector<8x1xi1>
    %45 = vector.broadcast %44 : vector<8x1xi1> to vector<8x1024xi1>
    %46 = vector.broadcast %cst_5 : f32 to vector<8x1024xf32>
    %47 = arith.select %45, %43, %46 : vector<8x1024xi1>, vector<8x1024xf32>
    %48 = arith.mulf %47, %47 : vector<8x1024xf32>
    %cst_6 = arith.constant dense<0.000000e+00> : vector<1024xf32>
    %49 = vector.multi_reduction <add>, %48, %cst_6 [0] : vector<8x1024xf32> to vector<1024xf32>
    %50 = vector.shape_cast %49 : vector<1024xf32> to vector<1x1024xf32>
    %51 = vector.extract_strided_slice %50 {offsets = [0, 0], sizes = [1, 64], strides = [1, 1]} : vector<1x1024xf32> to vector<1x64xf32>
    %52 = vector.extract_strided_slice %50 {offsets = [0, 64], sizes = [1, 64], strides = [1, 1]} : vector<1x1024xf32> to vector<1x64xf32>
    %53 = arith.addf %51, %52 : vector<1x64xf32>
    %54 = vector.extract_strided_slice %50 {offsets = [0, 128], sizes = [1, 64], strides = [1, 1]} : vector<1x1024xf32> to vector<1x64xf32>
    %55 = arith.addf %53, %54 : vector<1x64xf32>
    %56 = vector.extract_strided_slice %50 {offsets = [0, 192], sizes = [1, 64], strides = [1, 1]} : vector<1x1024xf32> to vector<1x64xf32>
    %57 = arith.addf %55, %56 : vector<1x64xf32>
    %58 = vector.extract_strided_slice %50 {offsets = [0, 256], sizes = [1, 64], strides = [1, 1]} : vector<1x1024xf32> to vector<1x64xf32>
    %59 = arith.addf %57, %58 : vector<1x64xf32>
    %60 = vector.extract_strided_slice %50 {offsets = [0, 320], sizes = [1, 64], strides = [1, 1]} : vector<1x1024xf32> to vector<1x64xf32>
    %61 = arith.addf %59, %60 : vector<1x64xf32>
    %62 = vector.extract_strided_slice %50 {offsets = [0, 384], sizes = [1, 64], strides = [1, 1]} : vector<1x1024xf32> to vector<1x64xf32>
    %63 = arith.addf %61, %62 : vector<1x64xf32>
    %64 = vector.extract_strided_slice %50 {offsets = [0, 448], sizes = [1, 64], strides = [1, 1]} : vector<1x1024xf32> to vector<1x64xf32>
    %65 = arith.addf %63, %64 : vector<1x64xf32>
    %66 = vector.extract_strided_slice %50 {offsets = [0, 512], sizes = [1, 64], strides = [1, 1]} : vector<1x1024xf32> to vector<1x64xf32>
    %67 = arith.addf %65, %66 : vector<1x64xf32>
    %68 = vector.extract_strided_slice %50 {offsets = [0, 576], sizes = [1, 64], strides = [1, 1]} : vector<1x1024xf32> to vector<1x64xf32>
    %69 = arith.addf %67, %68 : vector<1x64xf32>
    %70 = vector.extract_strided_slice %50 {offsets = [0, 640], sizes = [1, 64], strides = [1, 1]} : vector<1x1024xf32> to vector<1x64xf32>
    %71 = arith.addf %69, %70 : vector<1x64xf32>
    %72 = vector.extract_strided_slice %50 {offsets = [0, 704], sizes = [1, 64], strides = [1, 1]} : vector<1x1024xf32> to vector<1x64xf32>
    %73 = arith.addf %71, %72 : vector<1x64xf32>
    %74 = vector.extract_strided_slice %50 {offsets = [0, 768], sizes = [1, 64], strides = [1, 1]} : vector<1x1024xf32> to vector<1x64xf32>
    %75 = arith.addf %73, %74 : vector<1x64xf32>
    %76 = vector.extract_strided_slice %50 {offsets = [0, 832], sizes = [1, 64], strides = [1, 1]} : vector<1x1024xf32> to vector<1x64xf32>
    %77 = arith.addf %75, %76 : vector<1x64xf32>
    %78 = vector.extract_strided_slice %50 {offsets = [0, 896], sizes = [1, 64], strides = [1, 1]} : vector<1x1024xf32> to vector<1x64xf32>
    %79 = arith.addf %77, %78 : vector<1x64xf32>
    %80 = vector.extract_strided_slice %50 {offsets = [0, 960], sizes = [1, 64], strides = [1, 1]} : vector<1x1024xf32> to vector<1x64xf32>
    %81 = arith.addf %79, %80 : vector<1x64xf32>
    %cst_7 = arith.constant 3.125000e-02 : f32
    %82 = vector.broadcast %cst_7 : f32 to vector<1x64xf32>
    %83 = arith.mulf %81, %82 : vector<1x64xf32>
    %c0_8 = arith.constant 0 : index
    %c0_9 = arith.constant 0 : index
    %84 = vector.load %arg2[%c0_8, %c0_9] : memref<1x64xf32, #tpu.memory_space<vmem>>, vector<1x64xf32>
    %cst_10 = arith.constant 9.99999974E-6 : f32
    %85 = vector.broadcast %cst_10 : f32 to vector<1x64xf32>
    %86 = arith.addf %83, %85 : vector<1x64xf32>
    %87 = math.rsqrt %86 : vector<1x64xf32>
    %88 = arith.mulf %84, %87 : vector<1x64xf32>
    %c0_11 = arith.constant 0 : index
    %c0_12 = arith.constant 0 : index
    %89 = vector.load %arg3[%c0_11, %c0_12] : memref<1x64xf32, #tpu.memory_space<vmem>>, vector<1x64xf32>
    %90 = arith.mulf %37, %88 : vector<1x64xf32>
    %91 = arith.subf %89, %90 : vector<1x64xf32>
    %92 = tpu.concatenate %88, %88, %88, %88, %88, %88, %88, %88, %88, %88, %88, %88, %88, %88, %88, %88 in 1 : vector<1x64xf32>, vector<1x64xf32>, vector<1x64xf32>, vector<1x64xf32>, vector<1x64xf32>, vector<1x64xf32>, vector<1x64xf32>, vector<1x64xf32>, vector<1x64xf32>, vector<1x64xf32>, vector<1x64xf32>, vector<1x64xf32>, vector<1x64xf32>, vector<1x64xf32>, vector<1x64xf32>, vector<1x64xf32> -> vector<1x1024xf32>
    %93 = tpu.concatenate %91, %91, %91, %91, %91, %91, %91, %91, %91, %91, %91, %91, %91, %91, %91, %91 in 1 : vector<1x64xf32>, vector<1x64xf32>, vector<1x64xf32>, vector<1x64xf32>, vector<1x64xf32>, vector<1x64xf32>, vector<1x64xf32>, vector<1x64xf32>, vector<1x64xf32>, vector<1x64xf32>, vector<1x64xf32>, vector<1x64xf32>, vector<1x64xf32>, vector<1x64xf32>, vector<1x64xf32>, vector<1x64xf32> -> vector<1x1024xf32>
    %94 = vector.broadcast %92 : vector<1x1024xf32> to vector<8x1024xf32>
    %95 = arith.mulf %2, %94 : vector<8x1024xf32>
    %96 = vector.broadcast %93 : vector<1x1024xf32> to vector<8x1024xf32>
    %97 = arith.addf %95, %96 : vector<8x1024xf32>
    %cst_13 = arith.constant 0.000000e+00 : f32
    %98 = vector.broadcast %cst_13 : f32 to vector<8x1024xf32>
    %99 = arith.maximumf %97, %98 : vector<8x1024xf32>
    %c0_14 = arith.constant 0 : index
    %c0_15 = arith.constant 0 : index
    %100 = vector.load %arg4[%c0_14, %c0_15] : memref<8x1024xf32, #tpu.memory_space<vmem>>, vector<8x1024xf32>
    tpu.vector_store %arg4[%c0_14, %c0_15], %99 {strides = array<i32>} : memref<8x1024xf32, #tpu.memory_space<vmem>>, vector<8x1024xf32>,
    return
  }
}

module attributes {stable_mosaic.version = 11 : i64} {
  func.func @_fused_matmul_bn_relu_kernel(%arg0: memref<32x640xf32, #tpu.memory_space<vmem>>, %arg1: memref<640x128xf32, #tpu.memory_space<vmem>>, %arg2: memref<1x32xf32, #tpu.memory_space<vmem>>, %arg3: memref<1x32xf32, #tpu.memory_space<vmem>>, %arg4: memref<32x128xf32, #tpu.memory_space<vmem>>) attributes {dimension_semantics = [], scalar_prefetch = 0 : i64, scratch_operands = 0 : i64, tpu.core_type = #tpu.core_type<tc>} {
    %c0 = arith.constant 0 : index
    %c0_0 = arith.constant 0 : index
    %0 = vector.load %arg0[%c0, %c0_0] : memref<32x640xf32, #tpu.memory_space<vmem>>, vector<32x640xf32>
    %c0_1 = arith.constant 0 : index
    %c0_2 = arith.constant 0 : index
    %1 = vector.load %arg1[%c0_1, %c0_2] : memref<640x128xf32, #tpu.memory_space<vmem>>, vector<640x128xf32>
    %cst = arith.constant dense<0.000000e+00> : vector<32x128xf32>
    %2 = tpu.matmul %0, %1, %cst {dimension_numbers = #tpu.dot_dimension_numbers<[1], [0], [0], [1], [0, 0, 1, 1], [], []>} : vector<32x640xf32>, vector<640x128xf32>, vector<32x128xf32> -> vector<32x128xf32>
    %cst_3 = arith.constant dense<0.000000e+00> : vector<128xf32>
    %3 = vector.multi_reduction <add>, %2, %cst_3 [0] : vector<32x128xf32> to vector<128xf32>
    %4 = vector.shape_cast %3 : vector<128xf32> to vector<1x128xf32>
    %5 = vector.extract_strided_slice %4 {offsets = [0, 0], sizes = [1, 32], strides = [1, 1]} : vector<1x128xf32> to vector<1x32xf32>
    %6 = vector.extract_strided_slice %4 {offsets = [0, 32], sizes = [1, 32], strides = [1, 1]} : vector<1x128xf32> to vector<1x32xf32>
    %7 = arith.addf %5, %6 : vector<1x32xf32>
    %8 = vector.extract_strided_slice %4 {offsets = [0, 64], sizes = [1, 32], strides = [1, 1]} : vector<1x128xf32> to vector<1x32xf32>
    %9 = arith.addf %7, %8 : vector<1x32xf32>
    %10 = vector.extract_strided_slice %4 {offsets = [0, 96], sizes = [1, 32], strides = [1, 1]} : vector<1x128xf32> to vector<1x32xf32>
    %11 = arith.addf %9, %10 : vector<1x32xf32>
    %cst_4 = arith.constant 7.812500e-03 : f32
    %12 = vector.broadcast %cst_4 : f32 to vector<1x32xf32>
    %13 = arith.mulf %11, %12 : vector<1x32xf32>
    %14 = tpu.concatenate %13, %13, %13, %13 in 1 : vector<1x32xf32>, vector<1x32xf32>, vector<1x32xf32>, vector<1x32xf32> -> vector<1x128xf32>
    %15 = tpu.iota {dimensions = array<i32: 0>} : vector<32x1xi32>
    %c32_i32 = arith.constant 32 : i32
    %16 = vector.broadcast %c32_i32 : i32 to vector<32x1xi32>
    %17 = arith.cmpi slt, %15, %16 : vector<32x1xi32>
    %18 = vector.broadcast %14 : vector<1x128xf32> to vector<32x128xf32>
    %19 = arith.subf %2, %18 : vector<32x128xf32>
    %cst_5 = arith.constant 0.000000e+00 : f32
    %20 = vector.shape_cast %17 : vector<32x1xi1> to vector<32x1xi1>
    %21 = vector.broadcast %20 : vector<32x1xi1> to vector<32x128xi1>
    %22 = vector.broadcast %cst_5 : f32 to vector<32x128xf32>
    %23 = arith.select %21, %19, %22 : vector<32x128xi1>, vector<32x128xf32>
    %24 = arith.mulf %23, %23 : vector<32x128xf32>
    %cst_6 = arith.constant dense<0.000000e+00> : vector<128xf32>
    %25 = vector.multi_reduction <add>, %24, %cst_6 [0] : vector<32x128xf32> to vector<128xf32>
    %26 = vector.shape_cast %25 : vector<128xf32> to vector<1x128xf32>
    %27 = vector.extract_strided_slice %26 {offsets = [0, 0], sizes = [1, 32], strides = [1, 1]} : vector<1x128xf32> to vector<1x32xf32>
    %28 = vector.extract_strided_slice %26 {offsets = [0, 32], sizes = [1, 32], strides = [1, 1]} : vector<1x128xf32> to vector<1x32xf32>
    %29 = arith.addf %27, %28 : vector<1x32xf32>
    %30 = vector.extract_strided_slice %26 {offsets = [0, 64], sizes = [1, 32], strides = [1, 1]} : vector<1x128xf32> to vector<1x32xf32>
    %31 = arith.addf %29, %30 : vector<1x32xf32>
    %32 = vector.extract_strided_slice %26 {offsets = [0, 96], sizes = [1, 32], strides = [1, 1]} : vector<1x128xf32> to vector<1x32xf32>
    %33 = arith.addf %31, %32 : vector<1x32xf32>
    %cst_7 = arith.constant 7.812500e-03 : f32
    %34 = vector.broadcast %cst_7 : f32 to vector<1x32xf32>
    %35 = arith.mulf %33, %34 : vector<1x32xf32>
    %c0_8 = arith.constant 0 : index
    %c0_9 = arith.constant 0 : index
    %36 = vector.load %arg2[%c0_8, %c0_9] : memref<1x32xf32, #tpu.memory_space<vmem>>, vector<1x32xf32>
    %cst_10 = arith.constant 9.99999974E-6 : f32
    %37 = vector.broadcast %cst_10 : f32 to vector<1x32xf32>
    %38 = arith.addf %35, %37 : vector<1x32xf32>
    %39 = math.rsqrt %38 : vector<1x32xf32>
    %40 = arith.mulf %36, %39 : vector<1x32xf32>
    %c0_11 = arith.constant 0 : index
    %c0_12 = arith.constant 0 : index
    %41 = vector.load %arg3[%c0_11, %c0_12] : memref<1x32xf32, #tpu.memory_space<vmem>>, vector<1x32xf32>
    %42 = arith.mulf %13, %40 : vector<1x32xf32>
    %43 = arith.subf %41, %42 : vector<1x32xf32>
    %44 = tpu.concatenate %40, %40, %40, %40 in 1 : vector<1x32xf32>, vector<1x32xf32>, vector<1x32xf32>, vector<1x32xf32> -> vector<1x128xf32>
    %45 = tpu.concatenate %43, %43, %43, %43 in 1 : vector<1x32xf32>, vector<1x32xf32>, vector<1x32xf32>, vector<1x32xf32> -> vector<1x128xf32>
    %46 = vector.broadcast %44 : vector<1x128xf32> to vector<32x128xf32>
    %47 = arith.mulf %2, %46 : vector<32x128xf32>
    %48 = vector.broadcast %45 : vector<1x128xf32> to vector<32x128xf32>
    %49 = arith.addf %47, %48 : vector<32x128xf32>
    %cst_13 = arith.constant 0.000000e+00 : f32
    %50 = vector.broadcast %cst_13 : f32 to vector<32x128xf32>
    %51 = arith.maximumf %49, %50 : vector<32x128xf32>
    %c0_14 = arith.constant 0 : index
    %c0_15 = arith.constant 0 : index
    %52 = vector.load %arg4[%c0_14, %c0_15] : memref<32x128xf32, #tpu.memory_space<vmem>>, vector<32x128xf32>
    tpu.vector_store %arg4[%c0_14, %c0_15], %51 {strides = array<i32>} : memref<32x128xf32, #tpu.memory_space<vmem>>, vector<32x128xf32>,
    return
  }
}

module attributes {stable_mosaic.version = 11 : i64} {
  func.func @_fused_matmul_bn_relu_kernel(%arg0: memref<128x384xf32, #tpu.memory_space<vmem>>, %arg1: memref<384x64xf32, #tpu.memory_space<vmem>>, %arg2: memref<1x16xf32, #tpu.memory_space<vmem>>, %arg3: memref<1x16xf32, #tpu.memory_space<vmem>>, %arg4: memref<128x64xf32, #tpu.memory_space<vmem>>) attributes {dimension_semantics = [], scalar_prefetch = 0 : i64, scratch_operands = 0 : i64, tpu.core_type = #tpu.core_type<tc>} {
    %c0 = arith.constant 0 : index
    %c0_0 = arith.constant 0 : index
    %0 = vector.load %arg0[%c0, %c0_0] : memref<128x384xf32, #tpu.memory_space<vmem>>, vector<128x384xf32>
    %c0_1 = arith.constant 0 : index
    %c0_2 = arith.constant 0 : index
    %1 = vector.load %arg1[%c0_1, %c0_2] : memref<384x64xf32, #tpu.memory_space<vmem>>, vector<384x64xf32>
    %cst = arith.constant dense<0.000000e+00> : vector<128x64xf32>
    %2 = tpu.matmul %0, %1, %cst {dimension_numbers = #tpu.dot_dimension_numbers<[1], [0], [0], [1], [0, 0, 1, 1], [], []>} : vector<128x384xf32>, vector<384x64xf32>, vector<128x64xf32> -> vector<128x64xf32>
    %cst_3 = arith.constant dense<0.000000e+00> : vector<64xf32>
    %3 = vector.multi_reduction <add>, %2, %cst_3 [0] : vector<128x64xf32> to vector<64xf32>
    %4 = vector.shape_cast %3 : vector<64xf32> to vector<1x64xf32>
    %5 = vector.extract_strided_slice %4 {offsets = [0, 0], sizes = [1, 16], strides = [1, 1]} : vector<1x64xf32> to vector<1x16xf32>
    %6 = vector.extract_strided_slice %4 {offsets = [0, 16], sizes = [1, 16], strides = [1, 1]} : vector<1x64xf32> to vector<1x16xf32>
    %7 = arith.addf %5, %6 : vector<1x16xf32>
    %8 = vector.extract_strided_slice %4 {offsets = [0, 32], sizes = [1, 16], strides = [1, 1]} : vector<1x64xf32> to vector<1x16xf32>
    %9 = arith.addf %7, %8 : vector<1x16xf32>
    %10 = vector.extract_strided_slice %4 {offsets = [0, 48], sizes = [1, 16], strides = [1, 1]} : vector<1x64xf32> to vector<1x16xf32>
    %11 = arith.addf %9, %10 : vector<1x16xf32>
    %cst_4 = arith.constant 0.001953125 : f32
    %12 = vector.broadcast %cst_4 : f32 to vector<1x16xf32>
    %13 = arith.mulf %11, %12 : vector<1x16xf32>
    %14 = tpu.concatenate %13, %13, %13, %13 in 1 : vector<1x16xf32>, vector<1x16xf32>, vector<1x16xf32>, vector<1x16xf32> -> vector<1x64xf32>
    %15 = tpu.iota {dimensions = array<i32: 0>} : vector<128x1xi32>
    %c128_i32 = arith.constant 128 : i32
    %16 = vector.broadcast %c128_i32 : i32 to vector<128x1xi32>
    %17 = arith.cmpi slt, %15, %16 : vector<128x1xi32>
    %18 = vector.broadcast %14 : vector<1x64xf32> to vector<128x64xf32>
    %19 = arith.subf %2, %18 : vector<128x64xf32>
    %cst_5 = arith.constant 0.000000e+00 : f32
    %20 = vector.shape_cast %17 : vector<128x1xi1> to vector<128x1xi1>
    %21 = vector.broadcast %20 : vector<128x1xi1> to vector<128x64xi1>
    %22 = vector.broadcast %cst_5 : f32 to vector<128x64xf32>
    %23 = arith.select %21, %19, %22 : vector<128x64xi1>, vector<128x64xf32>
    %24 = arith.mulf %23, %23 : vector<128x64xf32>
    %cst_6 = arith.constant dense<0.000000e+00> : vector<64xf32>
    %25 = vector.multi_reduction <add>, %24, %cst_6 [0] : vector<128x64xf32> to vector<64xf32>
    %26 = vector.shape_cast %25 : vector<64xf32> to vector<1x64xf32>
    %27 = vector.extract_strided_slice %26 {offsets = [0, 0], sizes = [1, 16], strides = [1, 1]} : vector<1x64xf32> to vector<1x16xf32>
    %28 = vector.extract_strided_slice %26 {offsets = [0, 16], sizes = [1, 16], strides = [1, 1]} : vector<1x64xf32> to vector<1x16xf32>
    %29 = arith.addf %27, %28 : vector<1x16xf32>
    %30 = vector.extract_strided_slice %26 {offsets = [0, 32], sizes = [1, 16], strides = [1, 1]} : vector<1x64xf32> to vector<1x16xf32>
    %31 = arith.addf %29, %30 : vector<1x16xf32>
    %32 = vector.extract_strided_slice %26 {offsets = [0, 48], sizes = [1, 16], strides = [1, 1]} : vector<1x64xf32> to vector<1x16xf32>
    %33 = arith.addf %31, %32 : vector<1x16xf32>
    %cst_7 = arith.constant 0.001953125 : f32
    %34 = vector.broadcast %cst_7 : f32 to vector<1x16xf32>
    %35 = arith.mulf %33, %34 : vector<1x16xf32>
    %c0_8 = arith.constant 0 : index
    %c0_9 = arith.constant 0 : index
    %36 = vector.load %arg2[%c0_8, %c0_9] : memref<1x16xf32, #tpu.memory_space<vmem>>, vector<1x16xf32>
    %cst_10 = arith.constant 9.99999974E-6 : f32
    %37 = vector.broadcast %cst_10 : f32 to vector<1x16xf32>
    %38 = arith.addf %35, %37 : vector<1x16xf32>
    %39 = math.rsqrt %38 : vector<1x16xf32>
    %40 = arith.mulf %36, %39 : vector<1x16xf32>
    %c0_11 = arith.constant 0 : index
    %c0_12 = arith.constant 0 : index
    %41 = vector.load %arg3[%c0_11, %c0_12] : memref<1x16xf32, #tpu.memory_space<vmem>>, vector<1x16xf32>
    %42 = arith.mulf %13, %40 : vector<1x16xf32>
    %43 = arith.subf %41, %42 : vector<1x16xf32>
    %44 = tpu.concatenate %40, %40, %40, %40 in 1 : vector<1x16xf32>, vector<1x16xf32>, vector<1x16xf32>, vector<1x16xf32> -> vector<1x64xf32>
    %45 = tpu.concatenate %43, %43, %43, %43 in 1 : vector<1x16xf32>, vector<1x16xf32>, vector<1x16xf32>, vector<1x16xf32> -> vector<1x64xf32>
    %46 = vector.broadcast %44 : vector<1x64xf32> to vector<128x64xf32>
    %47 = arith.mulf %2, %46 : vector<128x64xf32>
    %48 = vector.broadcast %45 : vector<1x64xf32> to vector<128x64xf32>
    %49 = arith.addf %47, %48 : vector<128x64xf32>
    %cst_13 = arith.constant 0.000000e+00 : f32
    %50 = vector.broadcast %cst_13 : f32 to vector<128x64xf32>
    %51 = arith.maximumf %49, %50 : vector<128x64xf32>
    %c0_14 = arith.constant 0 : index
    %c0_15 = arith.constant 0 : index
    %52 = vector.load %arg4[%c0_14, %c0_15] : memref<128x64xf32, #tpu.memory_space<vmem>>, vector<128x64xf32>
    tpu.vector_store %arg4[%c0_14, %c0_15], %51 {strides = array<i32>} : memref<128x64xf32, #tpu.memory_space<vmem>>, vector<128x64xf32>,
    return
  }
}

module attributes {stable_mosaic.version = 11 : i64} {
  func.func @_fused_matmul_bn_relu_kernel(%arg0: memref<512x256xf32, #tpu.memory_space<vmem>>, %arg1: memref<256x32xf32, #tpu.memory_space<vmem>>, %arg2: memref<1x8xf32, #tpu.memory_space<vmem>>, %arg3: memref<1x8xf32, #tpu.memory_space<vmem>>, %arg4: memref<512x32xf32, #tpu.memory_space<vmem>>) attributes {dimension_semantics = [], scalar_prefetch = 0 : i64, scratch_operands = 0 : i64, tpu.core_type = #tpu.core_type<tc>} {
    %c0 = arith.constant 0 : index
    %c0_0 = arith.constant 0 : index
    %0 = vector.load %arg0[%c0, %c0_0] : memref<512x256xf32, #tpu.memory_space<vmem>>, vector<512x256xf32>
    %c0_1 = arith.constant 0 : index
    %c0_2 = arith.constant 0 : index
    %1 = vector.load %arg1[%c0_1, %c0_2] : memref<256x32xf32, #tpu.memory_space<vmem>>, vector<256x32xf32>
    %cst = arith.constant dense<0.000000e+00> : vector<512x32xf32>
    %2 = tpu.matmul %0, %1, %cst {dimension_numbers = #tpu.dot_dimension_numbers<[1], [0], [0], [1], [0, 0, 1, 1], [], []>} : vector<512x256xf32>, vector<256x32xf32>, vector<512x32xf32> -> vector<512x32xf32>
    %cst_3 = arith.constant dense<0.000000e+00> : vector<32xf32>
    %3 = vector.multi_reduction <add>, %2, %cst_3 [0] : vector<512x32xf32> to vector<32xf32>
    %4 = vector.shape_cast %3 : vector<32xf32> to vector<1x32xf32>
    %5 = vector.extract_strided_slice %4 {offsets = [0, 0], sizes = [1, 8], strides = [1, 1]} : vector<1x32xf32> to vector<1x8xf32>
    %6 = vector.extract_strided_slice %4 {offsets = [0, 8], sizes = [1, 8], strides = [1, 1]} : vector<1x32xf32> to vector<1x8xf32>
    %7 = arith.addf %5, %6 : vector<1x8xf32>
    %8 = vector.extract_strided_slice %4 {offsets = [0, 16], sizes = [1, 8], strides = [1, 1]} : vector<1x32xf32> to vector<1x8xf32>
    %9 = arith.addf %7, %8 : vector<1x8xf32>
    %10 = vector.extract_strided_slice %4 {offsets = [0, 24], sizes = [1, 8], strides = [1, 1]} : vector<1x32xf32> to vector<1x8xf32>
    %11 = arith.addf %9, %10 : vector<1x8xf32>
    %cst_4 = arith.constant 4.8828125E-4 : f32
    %12 = vector.broadcast %cst_4 : f32 to vector<1x8xf32>
    %13 = arith.mulf %11, %12 : vector<1x8xf32>
    %14 = tpu.concatenate %13, %13, %13, %13 in 1 : vector<1x8xf32>, vector<1x8xf32>, vector<1x8xf32>, vector<1x8xf32> -> vector<1x32xf32>
    %15 = tpu.iota {dimensions = array<i32: 0>} : vector<512x1xi32>
    %c512_i32 = arith.constant 512 : i32
    %16 = vector.broadcast %c512_i32 : i32 to vector<512x1xi32>
    %17 = arith.cmpi slt, %15, %16 : vector<512x1xi32>
    %18 = vector.broadcast %14 : vector<1x32xf32> to vector<512x32xf32>
    %19 = arith.subf %2, %18 : vector<512x32xf32>
    %cst_5 = arith.constant 0.000000e+00 : f32
    %20 = vector.shape_cast %17 : vector<512x1xi1> to vector<512x1xi1>
    %21 = vector.broadcast %20 : vector<512x1xi1> to vector<512x32xi1>
    %22 = vector.broadcast %cst_5 : f32 to vector<512x32xf32>
    %23 = arith.select %21, %19, %22 : vector<512x32xi1>, vector<512x32xf32>
    %24 = arith.mulf %23, %23 : vector<512x32xf32>
    %cst_6 = arith.constant dense<0.000000e+00> : vector<32xf32>
    %25 = vector.multi_reduction <add>, %24, %cst_6 [0] : vector<512x32xf32> to vector<32xf32>
    %26 = vector.shape_cast %25 : vector<32xf32> to vector<1x32xf32>
    %27 = vector.extract_strided_slice %26 {offsets = [0, 0], sizes = [1, 8], strides = [1, 1]} : vector<1x32xf32> to vector<1x8xf32>
    %28 = vector.extract_strided_slice %26 {offsets = [0, 8], sizes = [1, 8], strides = [1, 1]} : vector<1x32xf32> to vector<1x8xf32>
    %29 = arith.addf %27, %28 : vector<1x8xf32>
    %30 = vector.extract_strided_slice %26 {offsets = [0, 16], sizes = [1, 8], strides = [1, 1]} : vector<1x32xf32> to vector<1x8xf32>
    %31 = arith.addf %29, %30 : vector<1x8xf32>
    %32 = vector.extract_strided_slice %26 {offsets = [0, 24], sizes = [1, 8], strides = [1, 1]} : vector<1x32xf32> to vector<1x8xf32>
    %33 = arith.addf %31, %32 : vector<1x8xf32>
    %cst_7 = arith.constant 4.8828125E-4 : f32
    %34 = vector.broadcast %cst_7 : f32 to vector<1x8xf32>
    %35 = arith.mulf %33, %34 : vector<1x8xf32>
    %c0_8 = arith.constant 0 : index
    %c0_9 = arith.constant 0 : index
    %36 = vector.load %arg2[%c0_8, %c0_9] : memref<1x8xf32, #tpu.memory_space<vmem>>, vector<1x8xf32>
    %cst_10 = arith.constant 9.99999974E-6 : f32
    %37 = vector.broadcast %cst_10 : f32 to vector<1x8xf32>
    %38 = arith.addf %35, %37 : vector<1x8xf32>
    %39 = math.rsqrt %38 : vector<1x8xf32>
    %40 = arith.mulf %36, %39 : vector<1x8xf32>
    %c0_11 = arith.constant 0 : index
    %c0_12 = arith.constant 0 : index
    %41 = vector.load %arg3[%c0_11, %c0_12] : memref<1x8xf32, #tpu.memory_space<vmem>>, vector<1x8xf32>
    %42 = arith.mulf %13, %40 : vector<1x8xf32>
    %43 = arith.subf %41, %42 : vector<1x8xf32>
    %44 = tpu.concatenate %40, %40, %40, %40 in 1 : vector<1x8xf32>, vector<1x8xf32>, vector<1x8xf32>, vector<1x8xf32> -> vector<1x32xf32>
    %45 = tpu.concatenate %43, %43, %43, %43 in 1 : vector<1x8xf32>, vector<1x8xf32>, vector<1x8xf32>, vector<1x8xf32> -> vector<1x32xf32>
    %46 = vector.broadcast %44 : vector<1x32xf32> to vector<512x32xf32>
    %47 = arith.mulf %2, %46 : vector<512x32xf32>
    %48 = vector.broadcast %45 : vector<1x32xf32> to vector<512x32xf32>
    %49 = arith.addf %47, %48 : vector<512x32xf32>
    %cst_13 = arith.constant 0.000000e+00 : f32
    %50 = vector.broadcast %cst_13 : f32 to vector<512x32xf32>
    %51 = arith.maximumf %49, %50 : vector<512x32xf32>
    %c0_14 = arith.constant 0 : index
    %c0_15 = arith.constant 0 : index
    %52 = vector.load %arg4[%c0_14, %c0_15] : memref<512x32xf32, #tpu.memory_space<vmem>>, vector<512x32xf32>
    tpu.vector_store %arg4[%c0_14, %c0_15], %51 {strides = array<i32>} : memref<512x32xf32, #tpu.memory_space<vmem>>, vector<512x32xf32>,
    return
  }
}

module attributes {stable_mosaic.version = 11 : i64} {
  func.func @_matmul_tanh_t_kernel(%arg0: i32, %arg1: memref<8x128xf32, #tpu.memory_space<vmem>>, %arg2: memref<128x1152xf32, #tpu.memory_space<vmem>>, %arg3: memref<8x1152xf32, #tpu.memory_space<vmem>>) attributes {dimension_semantics = [#tpu.dimension_semantics<parallel>], iteration_bounds = array<i64: 2>, scalar_prefetch = 0 : i64, scratch_operands = 0 : i64, tpu.core_type = #tpu.core_type<tc>, window_params = [{pipeline_mode = #tpu.pipeline_mode<synchronous>, transform_indices = @transform_0, window_bounds = array<i64: 8, 128>}, {transform_indices = @transform_1, window_bounds = array<i64: 128, 1152>}, {transform_indices = @transform_2, window_bounds = array<i64: 8, 1152>}]} {
    %c0 = arith.constant 0 : index
    %c0_0 = arith.constant 0 : index
    %0 = vector.load %arg1[%c0, %c0_0] : memref<8x128xf32, #tpu.memory_space<vmem>>, vector<8x128xf32>
    %c0_1 = arith.constant 0 : index
    %c0_2 = arith.constant 0 : index
    %1 = vector.load %arg2[%c0_1, %c0_2] : memref<128x1152xf32, #tpu.memory_space<vmem>>, vector<128x1152xf32>
    %cst = arith.constant dense<0.000000e+00> : vector<8x1152xf32>
    %2 = tpu.matmul %0, %1, %cst {dimension_numbers = #tpu.dot_dimension_numbers<[1], [0], [0], [1], [0, 0, 1, 1], [], []>} : vector<8x128xf32>, vector<128x1152xf32>, vector<8x1152xf32> -> vector<8x1152xf32>
    %3 = math.tanh %2 : vector<8x1152xf32>
    %c0_3 = arith.constant 0 : index
    %c0_4 = arith.constant 0 : index
    %4 = vector.load %arg3[%c0_3, %c0_4] : memref<8x1152xf32, #tpu.memory_space<vmem>>, vector<8x1152xf32>
    tpu.vector_store %arg3[%c0_3, %c0_4], %3 {strides = array<i32>} : memref<8x1152xf32, #tpu.memory_space<vmem>>, vector<8x1152xf32>,
    return
  }
  func.func @transform_0(%arg0: i32) -> (i32, i32) {
    %c0_i32 = arith.constant 0 : i32
    %c0_i32_0 = arith.constant 0 : i32
    %c0_i32_1 = arith.constant 0 : i32
    return %c0_i32, %c0_i32_0 : i32, i32
  }
  func.func @transform_1(%arg0: i32) -> (i32, i32) {
    %c0_i32 = arith.constant 0 : i32
    %c0_i32_0 = arith.constant 0 : i32
    return %c0_i32, %arg0 : i32, i32
  }
  func.func @transform_2(%arg0: i32) -> (i32, i32) {
    %c0_i32 = arith.constant 0 : i32
    %c0_i32_0 = arith.constant 0 : i32
    return %c0_i32, %arg0 : i32, i32
  }
}

</mosaic_0001>

<llo_original>
// kernel: generator_forward.5
$region0: #{generator_forward.5}
  #allocation0 [shape = 'u32[]', space=smem, size = 0x4, offset = 0x4, fixed_abs, tag = 'smem constant byte address 0x4 - core index']
  #allocation1 [shape = 'u32[144,128]{1,0:T(1,128)}', space=vmem, size = 0x12000, scoped, tag = 'internal scratch']
  %s0 = inlined_call_operand.vmem [shape: f32[8,128], index: 0, kind: input, shape index: {}]
  %s1 = inlined_call_operand.vmem [shape: f32[128,1024], index: 1, kind: input, shape index: {}]
  %s2 = inlined_call_operand.vmem [shape: f32[1,64], index: 2, kind: input, shape index: {}]
  %s3 = inlined_call_operand.vmem [shape: f32[1,64], index: 3, kind: input, shape index: {}]
  %s4 = inlined_call_operand.vmem [shape: f32[8,1024], index: 4, kind: output, shape index: {}]
  %s5 = sld [smem:[#allocation0]]
  $region26: #{generator_forward.5} parent=0
    _
  %s7 = ssub.s32 1, %s5
  %s8 = scalar_select 0, %s7, %s5
  // Predicated region
  $region2: #{generator_forward.5} parent=0 // pred_check
    _
  $region3: #{generator_forward.5} parent=0 // pred_check_branch
    %10 = sbr.rel (0) target = $region5
  $region4: #{generator_forward.5} parent=0 // pred_region
    _
  $region5: #{generator_forward.5} parent=0 // pred_fallthru
    _
  // Predicated region
  $region6: #{generator_forward.5} parent=0 // pred_check
    _
  $region7: #{generator_forward.5} parent=0 // pred_check_branch
    %12 = sbr.rel (0) target = $region9
  $region8: #{generator_forward.5} parent=0 // pred_region
    _
  $region9: #{generator_forward.5} parent=0 // pred_fallthru
    _
  // Predicated region
  $region10: #{generator_forward.5} parent=0 // pred_check
    _
  $region11: #{generator_forward.5} parent=0 // pred_check_branch
    %14 = sbr.rel (0) target = $region13
  $region12: #{generator_forward.5} parent=0 // pred_region
    _
  $region13: #{generator_forward.5} parent=0 // pred_fallthru
    _
  // Predicated region
  $region14: #{generator_forward.5} parent=0 // pred_check
    _
  $region15: #{generator_forward.5} parent=0 // pred_check_branch
    %16 = sbr.rel (0) target = $region17
  $region16: #{generator_forward.5} parent=0 // pred_region
    _
  $region17: #{generator_forward.5} parent=0 // pred_fallthru
    _
  %v17 = vld [vmem:[%s0] sm:$0xff]
  %v18 = vld [vmem:[%s1] sm:$0xff]
  %v19 = vld [vmem:[%s1 + $0x8] sm:$0xff]
  %v20 = vld [vmem:[%s1 + $0x10] sm:$0xff]
  %v21 = vld [vmem:[%s1 + $0x18] sm:$0xff]
  %v22 = vld [vmem:[%s1 + $0x20] sm:$0xff]
  %v23 = vld [vmem:[%s1 + $0x28] sm:$0xff]
  %v24 = vld [vmem:[%s1 + $0x30] sm:$0xff]
  %v25 = vld [vmem:[%s1 + $0x38] sm:$0xff]
  %v26 = vld [vmem:[%s1 + $0x40] sm:$0xff]
  %v27 = vld [vmem:[%s1 + $0x48] sm:$0xff]
  %v28 = vld [vmem:[%s1 + $0x50] sm:$0xff]
  %v29 = vld [vmem:[%s1 + $0x58] sm:$0xff]
  %v30 = vld [vmem:[%s1 + $0x60] sm:$0xff]
  %v31 = vld [vmem:[%s1 + $0x68] sm:$0xff]
  %v32 = vld [vmem:[%s1 + $0x70] sm:$0xff]
  %v33 = vld [vmem:[%s1 + $0x78] sm:$0xff]
  %v34 = vld [vmem:[%s1 + $0x80] sm:$0xff]
  %v35 = vld [vmem:[%s1 + $0x88] sm:$0xff]
  %v36 = vld [vmem:[%s1 + $0x90] sm:$0xff]
  %v37 = vld [vmem:[%s1 + $0x98] sm:$0xff]
  %v38 = vld [vmem:[%s1 + $0xa0] sm:$0xff]
  %v39 = vld [vmem:[%s1 + $0xa8] sm:$0xff]
  %v40 = vld [vmem:[%s1 + $0xb0] sm:$0xff]
  %v41 = vld [vmem:[%s1 + $0xb8] sm:$0xff]
  %v42 = vld [vmem:[%s1 + $0xc0] sm:$0xff]
  %v43 = vld [vmem:[%s1 + $0xc8] sm:$0xff]
  %v44 = vld [vmem:[%s1 + $0xd0] sm:$0xff]
  %v45 = vld [vmem:[%s1 + $0xd8] sm:$0xff]
  %v46 = vld [vmem:[%s1 + $0xe0] sm:$0xff]
  %v47 = vld [vmem:[%s1 + $0xe8] sm:$0xff]
  %v48 = vld [vmem:[%s1 + $0xf0] sm:$0xff]
  %v49 = vld [vmem:[%s1 + $0xf8] sm:$0xff]
  %v50 = vld [vmem:[%s1 + $0x100] sm:$0xff]
  %v51 = vld [vmem:[%s1 + $0x108] sm:$0xff]
  %v52 = vld [vmem:[%s1 + $0x110] sm:$0xff]
  %v53 = vld [vmem:[%s1 + $0x118] sm:$0xff]
  %v54 = vld [vmem:[%s1 + $0x120] sm:$0xff]
  %v55 = vld [vmem:[%s1 + $0x128] sm:$0xff]
  %v56 = vld [vmem:[%s1 + $0x130] sm:$0xff]
  %v57 = vld [vmem:[%s1 + $0x138] sm:$0xff]
  %v58 = vld [vmem:[%s1 + $0x140] sm:$0xff]
  %v59 = vld [vmem:[%s1 + $0x148] sm:$0xff]
  %v60 = vld [vmem:[%s1 + $0x150] sm:$0xff]
  %v61 = vld [vmem:[%s1 + $0x158] sm:$0xff]
  %v62 = vld [vmem:[%s1 + $0x160] sm:$0xff]
  %v63 = vld [vmem:[%s1 + $0x168] sm:$0xff]
  %v64 = vld [vmem:[%s1 + $0x170] sm:$0xff]
  %v65 = vld [vmem:[%s1 + $0x178] sm:$0xff]
  %v66 = vld [vmem:[%s1 + $0x180] sm:$0xff]
  %v67 = vld [vmem:[%s1 + $0x188] sm:$0xff]
  %v68 = vld [vmem:[%s1 + $0x190] sm:$0xff]
  %v69 = vld [vmem:[%s1 + $0x198] sm:$0xff]
  %v70 = vld [vmem:[%s1 + $0x1a0] sm:$0xff]
  %v71 = vld [vmem:[%s1 + $0x1a8] sm:$0xff]
  %v72 = vld [vmem:[%s1 + $0x1b0] sm:$0xff]
  %v73 = vld [vmem:[%s1 + $0x1b8] sm:$0xff]
  %v74 = vld [vmem:[%s1 + $0x1c0] sm:$0xff]
  %v75 = vld [vmem:[%s1 + $0x1c8] sm:$0xff]
  %v76 = vld [vmem:[%s1 + $0x1d0] sm:$0xff]
  %v77 = vld [vmem:[%s1 + $0x1d8] sm:$0xff]
  %v78 = vld [vmem:[%s1 + $0x1e0] sm:$0xff]
  %v79 = vld [vmem:[%s1 + $0x1e8] sm:$0xff]
  %v80 = vld [vmem:[%s1 + $0x1f0] sm:$0xff]
  %v81 = vld [vmem:[%s1 + $0x1f8] sm:$0xff]
  %v82 = vld [vmem:[%s1 + $0x200] sm:$0xff]
  %v83 = vld [vmem:[%s1 + $0x208] sm:$0xff]
  %v84 = vld [vmem:[%s1 + $0x210] sm:$0xff]
  %v85 = vld [vmem:[%s1 + $0x218] sm:$0xff]
  %v86 = vld [vmem:[%s1 + $0x220] sm:$0xff]
  %v87 = vld [vmem:[%s1 + $0x228] sm:$0xff]
  %v88 = vld [vmem:[%s1 + $0x230] sm:$0xff]
  %v89 = vld [vmem:[%s1 + $0x238] sm:$0xff]
  %v90 = vld [vmem:[%s1 + $0x240] sm:$0xff]
  %v91 = vld [vmem:[%s1 + $0x248] sm:$0xff]
  %v92 = vld [vmem:[%s1 + $0x250] sm:$0xff]
  %v93 = vld [vmem:[%s1 + $0x258] sm:$0xff]
  %v94 = vld [vmem:[%s1 + $0x260] sm:$0xff]
  %v95 = vld [vmem:[%s1 + $0x268] sm:$0xff]
  %v96 = vld [vmem:[%s1 + $0x270] sm:$0xff]
  %v97 = vld [vmem:[%s1 + $0x278] sm:$0xff]
  %v98 = vld [vmem:[%s1 + $0x280] sm:$0xff]
  %v99 = vld [vmem:[%s1 + $0x288] sm:$0xff]
  %v100 = vld [vmem:[%s1 + $0x290] sm:$0xff]
  %v101 = vld [vmem:[%s1 + $0x298] sm:$0xff]
  %v102 = vld [vmem:[%s1 + $0x2a0] sm:$0xff]
  %v103 = vld [vmem:[%s1 + $0x2a8] sm:$0xff]
  %v104 = vld [vmem:[%s1 + $0x2b0] sm:$0xff]
  %v105 = vld [vmem:[%s1 + $0x2b8] sm:$0xff]
  %v106 = vld [vmem:[%s1 + $0x2c0] sm:$0xff]
  %v107 = vld [vmem:[%s1 + $0x2c8] sm:$0xff]
  %v108 = vld [vmem:[%s1 + $0x2d0] sm:$0xff]
  %v109 = vld [vmem:[%s1 + $0x2d8] sm:$0xff]
  %v110 = vld [vmem:[%s1 + $0x2e0] sm:$0xff]
  %v111 = vld [vmem:[%s1 + $0x2e8] sm:$0xff]
  %v112 = vld [vmem:[%s1 + $0x2f0] sm:$0xff]
  %v113 = vld [vmem:[%s1 + $0x2f8] sm:$0xff]
  %v114 = vld [vmem:[%s1 + $0x300] sm:$0xff]
  %v115 = vld [vmem:[%s1 + $0x308] sm:$0xff]
  %v116 = vld [vmem:[%s1 + $0x310] sm:$0xff]
  %v117 = vld [vmem:[%s1 + $0x318] sm:$0xff]
  %v118 = vld [vmem:[%s1 + $0x320] sm:$0xff]
  %v119 = vld [vmem:[%s1 + $0x328] sm:$0xff]
  %v120 = vld [vmem:[%s1 + $0x330] sm:$0xff]
  %v121 = vld [vmem:[%s1 + $0x338] sm:$0xff]
  %v122 = vld [vmem:[%s1 + $0x340] sm:$0xff]
  %v123 = vld [vmem:[%s1 + $0x348] sm:$0xff]
  %v124 = vld [vmem:[%s1 + $0x350] sm:$0xff]
  %v125 = vld [vmem:[%s1 + $0x358] sm:$0xff]
  %v126 = vld [vmem:[%s1 + $0x360] sm:$0xff]
  %v127 = vld [vmem:[%s1 + $0x368] sm:$0xff]
  %v128 = vld [vmem:[%s1 + $0x370] sm:$0xff]
  %v129 = vld [vmem:[%s1 + $0x378] sm:$0xff]
  %v130 = vld [vmem:[%s1 + $0x380] sm:$0xff]
  %v131 = vld [vmem:[%s1 + $0x388] sm:$0xff]
  %v132 = vld [vmem:[%s1 + $0x390] sm:$0xff]
  %v133 = vld [vmem:[%s1 + $0x398] sm:$0xff]
  %v134 = vld [vmem:[%s1 + $0x3a0] sm:$0xff]
  %v135 = vld [vmem:[%s1 + $0x3a8] sm:$0xff]
  %v136 = vld [vmem:[%s1 + $0x3b0] sm:$0xff]
  %v137 = vld [vmem:[%s1 + $0x3b8] sm:$0xff]
  %v138 = vld [vmem:[%s1 + $0x3c0] sm:$0xff]
  %v139 = vld [vmem:[%s1 + $0x3c8] sm:$0xff]
  %v140 = vld [vmem:[%s1 + $0x3d0] sm:$0xff]
  %v141 = vld [vmem:[%s1 + $0x3d8] sm:$0xff]
  %v142 = vld [vmem:[%s1 + $0x3e0] sm:$0xff]
  %v143 = vld [vmem:[%s1 + $0x3e8] sm:$0xff]
  %v144 = vld [vmem:[%s1 + $0x3f0] sm:$0xff]
  %v145 = vld [vmem:[%s1 + $0x3f8] sm:$0xff]
  %146 = vmatprep.subr.mxu0 %v139
  %147 = vmatpush1.msra.mxu0 %v138
  %148 = vmatprep.subr.mxu0 %v131
  %149 = vmatpush1.msra.mxu0 %v130
  %150 = vmatprep.subr.mxu0 %v123
  %151 = vmatpush1.msra.mxu0 %v122
  %152 = vmatprep.subr.mxu0 %v115
  %153 = vmatpush1.msra.mxu0 %v114
  %154 = vmatprep.subr.mxu0 %v107
  %155 = vmatpush1.msra.mxu0 %v106
  %156 = vmatprep.subr.mxu0 %v99
  %157 = vmatpush1.msra.mxu0 %v98
  %158 = vmatprep.subr.mxu0 %v91
  %159 = vmatpush1.msra.mxu0 %v90
  %160 = vmatprep.subr.mxu0 %v83
  %161 = vmatpush1.msra.mxu0 %v82
  %162 = vmatprep.subr.mxu0 %v75
  %163 = vmatpush1.msra.mxu0 %v74
  %164 = vmatprep.subr.mxu0 %v67
  %165 = vmatpush1.msra.mxu0 %v66
  %166 = vmatprep.subr.mxu0 %v59
  %167 = vmatpush1.msra.mxu0 %v58
  %168 = vmatprep.subr.mxu0 %v51
  %169 = vmatpush1.msra.mxu0 %v50
  %170 = vmatprep.subr.mxu0 %v43
  %171 = vmatpush1.msra.mxu0 %v42
  %172 = vmatprep.subr.mxu0 %v35
  %173 = vmatpush1.msra.mxu0 %v34
  %174 = vmatprep.subr.mxu0 %v27
  %175 = vmatpush1.msra.mxu0 %v26
  %176 = vmatprep.subr.mxu0 %v19
  %177 = vmatpush1.msra.mxu0 %v18
  %178 = vmatprep.subr.mxu0 0.0
  %179 = vmatpush2.msra.mxu0 0.0
  %180 = vmatprep.subr.mxu0 0.0
  %181 = vmatpush2.msra.mxu0 0.0
  %182 = vmatprep.subr.mxu0 0.0
  %183 = vmatpush2.msra.mxu0 0.0
  %184 = vmatprep.subr.mxu0 0.0
  %185 = vmatpush2.msra.mxu0 0.0
  %186 = vmatprep.subr.mxu0 0.0
  %187 = vmatpush2.msra.mxu0 0.0
  %188 = vmatprep.subr.mxu0 0.0
  %189 = vmatpush2.msra.mxu0 0.0
  %190 = vmatprep.subr.mxu0 0.0
  %191 = vmatpush2.msra.mxu0 0.0
  %192 = vmatprep.subr.mxu0 0.0
  %193 = vmatpush2.msra.mxu0 0.0
  %194 = vmatprep.subr.mxu0 0.0
  %195 = vmatpush2.msra.mxu0 0.0
  %196 = vmatprep.subr.mxu0 0.0
  %197 = vmatpush2.msra.mxu0 0.0
  %198 = vmatprep.subr.mxu0 0.0
  %199 = vmatpush2.msra.mxu0 0.0
  %200 = vmatprep.subr.mxu0 0.0
  %201 = vmatpush2.msra.mxu0 0.0
  %202 = vmatprep.subr.mxu0 0.0
  %203 = vmatpush2.msra.mxu0 0.0
  %204 = vmatprep.subr.mxu0 0.0
  %205 = vmatpush2.msra.mxu0 0.0
  %206 = vmatprep.subr.mxu0 0.0
  %207 = vmatpush2.msra.mxu0 0.0
  %208 = vmatprep.subr.mxu0 0.0
  %209 = vmatpush2.msra.mxu0 0.0
  %210 = vmatprep.mubr.f32.mxu0 0.0
  %211 = vmatmul.mubr.f32.gmra.mxu0 %v17
  %v212 = vpop.f32.mrf.mxu0
  %v213 = vadd.f32 0.0, %v212
  %v214 = vpop.f32.mrf.mxu0
  %v215 = vadd.f32 0.0, %v214
  %216 = vdwg.mxu0
  %217 = vmatprep.subr.mxu0 %v141
  %218 = vmatpush1.msra.mxu0 %v140
  %219 = vmatprep.subr.mxu0 %v133
  %220 = vmatpush1.msra.mxu0 %v132
  %221 = vmatprep.subr.mxu0 %v125
  %222 = vmatpush1.msra.mxu0 %v124
  %223 = vmatprep.subr.mxu0 %v117
  %224 = vmatpush1.msra.mxu0 %v116
  %225 = vmatprep.subr.mxu0 %v109
  %226 = vmatpush1.msra.mxu0 %v108
  %227 = vmatprep.subr.mxu0 %v101
  %228 = vmatpush1.msra.mxu0 %v100
  %229 = vmatprep.subr.mxu0 %v93
  %230 = vmatpush1.msra.mxu0 %v92
  %231 = vmatprep.subr.mxu0 %v85
  %232 = vmatpush1.msra.mxu0 %v84
  %233 = vmatprep.subr.mxu0 %v77
  %234 = vmatpush1.msra.mxu0 %v76
  %235 = vmatprep.subr.mxu0 %v69
  %236 = vmatpush1.msra.mxu0 %v68
  %237 = vmatprep.subr.mxu0 %v61
  %238 = vmatpush1.msra.mxu0 %v60
  %239 = vmatprep.subr.mxu0 %v53
  %240 = vmatpush1.msra.mxu0 %v52
  %241 = vmatprep.subr.mxu0 %v45
  %242 = vmatpush1.msra.mxu0 %v44
  %243 = vmatprep.subr.mxu0 %v37
  %244 = vmatpush1.msra.mxu0 %v36
  %245 = vmatprep.subr.mxu0 %v29
  %246 = vmatpush1.msra.mxu0 %v28
  %247 = vmatprep.subr.mxu0 %v21
  %248 = vmatpush1.msra.mxu0 %v20
  %249 = vmatprep.subr.mxu0 0.0
  %250 = vmatpush2.msra.mxu0 0.0
  %251 = vmatprep.subr.mxu0 0.0
  %252 = vmatpush2.msra.mxu0 0.0
  %253 = vmatprep.subr.mxu0 0.0
  %254 = vmatpush2.msra.mxu0 0.0
  %255 = vmatprep.subr.mxu0 0.0
  %256 = vmatpush2.msra.mxu0 0.0
  %257 = vmatprep.subr.mxu0 0.0
  %258 = vmatpush2.msra.mxu0 0.0
  %259 = vmatprep.subr.mxu0 0.0
  %260 = vmatpush2.msra.mxu0 0.0
  %261 = vmatprep.subr.mxu0 0.0
  %262 = vmatpush2.msra.mxu0 0.0
  %263 = vmatprep.subr.mxu0 0.0
  %264 = vmatpush2.msra.mxu0 0.0
  %265 = vmatprep.subr.mxu0 0.0
  %266 = vmatpush2.msra.mxu0 0.0
  %267 = vmatprep.subr.mxu0 0.0
  %268 = vmatpush2.msra.mxu0 0.0
  %269 = vmatprep.subr.mxu0 0.0
  %270 = vmatpush2.msra.mxu0 0.0
  %271 = vmatprep.subr.mxu0 0.0
  %272 = vmatpush2.msra.mxu0 0.0
  %273 = vmatprep.subr.mxu0 0.0
  %274 = vmatpush2.msra.mxu0 0.0
  %275 = vmatprep.subr.mxu0 0.0
  %276 = vmatpush2.msra.mxu0 0.0
  %277 = vmatprep.subr.mxu0 0.0
  %278 = vmatpush2.msra.mxu0 0.0
  %279 = vmatprep.subr.mxu0 0.0
  %280 = vmatpush2.msra.mxu0 0.0
  %281 = vmatprep.mubr.f32.mxu0 0.0
  %282 = vmatmul.mubr.f32.gmra.mxu0 %v17
  %v283 = vpop.f32.mrf.mxu0
  %v284 = vadd.f32 0.0, %v283
  %v285 = vpop.f32.mrf.mxu0
  %v286 = vadd.f32 0.0, %v285
  %287 = vdwg.mxu0
  %288 = vmatprep.subr.mxu0 %v143
  %289 = vmatpush1.msra.mxu0 %v142
  %290 = vmatprep.subr.mxu0 %v135
  %291 = vmatpush1.msra.mxu0 %v134
  %292 = vmatprep.subr.mxu0 %v127
  %293 = vmatpush1.msra.mxu0 %v126
  %294 = vmatprep.subr.mxu0 %v119
  %295 = vmatpush1.msra.mxu0 %v118
  %296 = vmatprep.subr.mxu0 %v111
  %297 = vmatpush1.msra.mxu0 %v110
  %298 = vmatprep.subr.mxu0 %v103
  %299 = vmatpush1.msra.mxu0 %v102
  %300 = vmatprep.subr.mxu0 %v95
  %301 = vmatpush1.msra.mxu0 %v94
  %302 = vmatprep.subr.mxu0 %v87
  %303 = vmatpush1.msra.mxu0 %v86
  %304 = vmatprep.subr.mxu0 %v79
  %305 = vmatpush1.msra.mxu0 %v78
  %306 = vmatprep.subr.mxu0 %v71
  %307 = vmatpush1.msra.mxu0 %v70
  %308 = vmatprep.subr.mxu0 %v63
  %309 = vmatpush1.msra.mxu0 %v62
  %310 = vmatprep.subr.mxu0 %v55
  %311 = vmatpush1.msra.mxu0 %v54
  %312 = vmatprep.subr.mxu0 %v47
  %313 = vmatpush1.msra.mxu0 %v46
  %314 = vmatprep.subr.mxu0 %v39
  %315 = vmatpush1.msra.mxu0 %v38
  %316 = vmatprep.subr.mxu0 %v31
  %317 = vmatpush1.msra.mxu0 %v30
  %318 = vmatprep.subr.mxu0 %v23
  %319 = vmatpush1.msra.mxu0 %v22
  %320 = vmatprep.subr.mxu0 0.0
  %321 = vmatpush2.msra.mxu0 0.0
  %322 = vmatprep.subr.mxu0 0.0
  %323 = vmatpush2.msra.mxu0 0.0
  %324 = vmatprep.subr.mxu0 0.0
  %325 = vmatpush2.msra.mxu0 0.0
  %326 = vmatprep.subr.mxu0 0.0
  %327 = vmatpush2.msra.mxu0 0.0
  %328 = vmatprep.subr.mxu0 0.0
  %329 = vmatpush2.msra.mxu0 0.0
  %330 = vmatprep.subr.mxu0 0.0
  %331 = vmatpush2.msra.mxu0 0.0
  %332 = vmatprep.subr.mxu0 0.0
  %333 = vmatpush2.msra.mxu0 0.0
  %334 = vmatprep.subr.mxu0 0.0
  %335 = vmatpush2.msra.mxu0 0.0
  %336 = vmatprep.subr.mxu0 0.0
  %337 = vmatpush2.msra.mxu0 0.0
  %338 = vmatprep.subr.mxu0 0.0
  %339 = vmatpush2.msra.mxu0 0.0
  %340 = vmatprep.subr.mxu0 0.0
  %341 = vmatpush2.msra.mxu0 0.0
  %342 = vmatprep.subr.mxu0 0.0
  %343 = vmatpush2.msra.mxu0 0.0
  %344 = vmatprep.subr.mxu0 0.0
  %345 = vmatpush2.msra.mxu0 0.0
  %346 = vmatprep.subr.mxu0 0.0
  %347 = vmatpush2.msra.mxu0 0.0
  %348 = vmatprep.subr.mxu0 0.0
  %349 = vmatpush2.msra.mxu0 0.0
  %350 = vmatprep.subr.mxu0 0.0
  %351 = vmatpush2.msra.mxu0 0.0
  %352 = vmatprep.mubr.f32.mxu0 0.0
  %353 = vmatmul.mubr.f32.gmra.mxu0 %v17
  %v354 = vpop.f32.mrf.mxu0
  %v355 = vadd.f32 0.0, %v354
  %v356 = vpop.f32.mrf.mxu0
  %v357 = vadd.f32 0.0, %v356
  %358 = vdwg.mxu0
  %359 = vmatprep.subr.mxu0 %v145
  %360 = vmatpush1.msra.mxu0 %v144
  %361 = vmatprep.subr.mxu0 %v137
  %362 = vmatpush1.msra.mxu0 %v136
  %363 = vmatprep.subr.mxu0 %v129
  %364 = vmatpush1.msra.mxu0 %v128
  %365 = vmatprep.subr.mxu0 %v121
  %366 = vmatpush1.msra.mxu0 %v120
  %367 = vmatprep.subr.mxu0 %v113
  %368 = vmatpush1.msra.mxu0 %v112
  %369 = vmatprep.subr.mxu0 %v105
  %370 = vmatpush1.msra.mxu0 %v104
  %371 = vmatprep.subr.mxu0 %v97
  %372 = vmatpush1.msra.mxu0 %v96
  %373 = vmatprep.subr.mxu0 %v89
  %374 = vmatpush1.msra.mxu0 %v88
  %375 = vmatprep.subr.mxu0 %v81
  %376 = vmatpush1.msra.mxu0 %v80
  %377 = vmatprep.subr.mxu0 %v73
  %378 = vmatpush1.msra.mxu0 %v72
  %379 = vmatprep.subr.mxu0 %v65
  %380 = vmatpush1.msra.mxu0 %v64
  %381 = vmatprep.subr.mxu0 %v57
  %382 = vmatpush1.msra.mxu0 %v56
  %383 = vmatprep.subr.mxu0 %v49
  %384 = vmatpush1.msra.mxu0 %v48
  %385 = vmatprep.subr.mxu0 %v41
  %386 = vmatpush1.msra.mxu0 %v40
  %387 = vmatprep.subr.mxu0 %v33
  %388 = vmatpush1.msra.mxu0 %v32
  %389 = vmatprep.subr.mxu0 %v25
  %390 = vmatpush1.msra.mxu0 %v24
  %391 = vmatprep.subr.mxu0 0.0
  %392 = vmatpush2.msra.mxu0 0.0
  %393 = vmatprep.subr.mxu0 0.0
  %394 = vmatpush2.msra.mxu0 0.0
  %395 = vmatprep.subr.mxu0 0.0
  %396 = vmatpush2.msra.mxu0 0.0
  %397 = vmatprep.subr.mxu0 0.0
  %398 = vmatpush2.msra.mxu0 0.0
  %399 = vmatprep.subr.mxu0 0.0
  %400 = vmatpush2.msra.mxu0 0.0
  %401 = vmatprep.subr.mxu0 0.0
  %402 = vmatpush2.msra.mxu0 0.0
  %403 = vmatprep.subr.mxu0 0.0
  %404 = vmatpush2.msra.mxu0 0.0
  %405 = vmatprep.subr.mxu0 0.0
  %406 = vmatpush2.msra.mxu0 0.0
  %407 = vmatprep.subr.mxu0 0.0
  %408 = vmatpush2.msra.mxu0 0.0
  %409 = vmatprep.subr.mxu0 0.0
  %410 = vmatpush2.msra.mxu0 0.0
  %411 = vmatprep.subr.mxu0 0.0
  %412 = vmatpush2.msra.mxu0 0.0
  %413 = vmatprep.subr.mxu0 0.0
  %414 = vmatpush2.msra.mxu0 0.0
  %415 = vmatprep.subr.mxu0 0.0
  %416 = vmatpush2.msra.mxu0 0.0
  %417 = vmatprep.subr.mxu0 0.0
  %418 = vmatpush2.msra.mxu0 0.0
  %419 = vmatprep.subr.mxu0 0.0
  %420 = vmatpush2.msra.mxu0 0.0
  %421 = vmatprep.subr.mxu0 0.0
  %422 = vmatpush2.msra.mxu0 0.0
  %423 = vmatprep.mubr.f32.mxu0 0.0
  %424 = vmatmul.mubr.f32.gmra.mxu0 %v17
  %v425 = vpop.f32.mrf.mxu0
  %v426 = vadd.f32 0.0, %v425
  %v427 = vpop.f32.mrf.mxu0
  %v428 = vadd.f32 0.0, %v427
  %429 = vdwg.mxu0
  %v430 = vrot.slane %v213, 4
  %v431 = vadd.f32 %v213, %v430
  %v432 = vrot.slane %v431, 2
  %v433 = vadd.f32 %v431, %v432
  %v434 = vrot.slane %v433, 1
  %v435 = vadd.f32 %v433, %v434
  %v436 = vrot.slane %v215, 4
  %v437 = vadd.f32 %v215, %v436
  %v438 = vrot.slane %v437, 2
  %v439 = vadd.f32 %v437, %v438
  %v440 = vrot.slane %v439, 1
  %v441 = vadd.f32 %v439, %v440
  %v442 = vrot.slane %v284, 4
  %v443 = vadd.f32 %v284, %v442
  %v444 = vrot.slane %v443, 2
  %v445 = vadd.f32 %v443, %v444
  %v446 = vrot.slane %v445, 1
  %v447 = vadd.f32 %v445, %v446
  %v448 = vrot.slane %v286, 4
  %v449 = vadd.f32 %v286, %v448
  %v450 = vrot.slane %v449, 2
  %v451 = vadd.f32 %v449, %v450
  %v452 = vrot.slane %v451, 1
  %v453 = vadd.f32 %v451, %v452
  %v454 = vrot.slane %v355, 4
  %v455 = vadd.f32 %v355, %v454
  %v456 = vrot.slane %v455, 2
  %v457 = vadd.f32 %v455, %v456
  %v458 = vrot.slane %v457, 1
  %v459 = vadd.f32 %v457, %v458
  %v460 = vrot.slane %v357, 4
  %v461 = vadd.f32 %v357, %v460
  %v462 = vrot.slane %v461, 2
  %v463 = vadd.f32 %v461, %v462
  %v464 = vrot.slane %v463, 1
  %v465 = vadd.f32 %v463, %v464
  %v466 = vrot.slane %v426, 4
  %v467 = vadd.f32 %v426, %v466
  %v468 = vrot.slane %v467, 2
  %v469 = vadd.f32 %v467, %v468
  %v470 = vrot.slane %v469, 1
  %v471 = vadd.f32 %v469, %v470
  %v472 = vrot.slane %v428, 4
  %v473 = vadd.f32 %v428, %v472
  %v474 = vrot.slane %v473, 2
  %v475 = vadd.f32 %v473, %v474
  %v476 = vrot.slane %v475, 1
  %v477 = vadd.f32 %v475, %v476
  %479 = vrot.lane.b32.xlu0 %v435, 64
  %v480 = vpop.permute.xlu0 %479
  %v482 = vadd.f32 %v435, %v480
  %v483 = vadd.f32 %v482, %v441
  %485 = vrot.lane.b32.xlu0 %v441, 64
  %v486 = vpop.permute.xlu0 %485
  %v488 = vadd.f32 %v483, %v486
  %v489 = vadd.f32 %v488, %v447
  %491 = vrot.lane.b32.xlu0 %v447, 64
  %v492 = vpop.permute.xlu0 %491
  %v494 = vadd.f32 %v489, %v492
  %v495 = vadd.f32 %v494, %v453
  %497 = vrot.lane.b32.xlu0 %v453, 64
  %v498 = vpop.permute.xlu0 %497
  %v500 = vadd.f32 %v495, %v498
  %v501 = vadd.f32 %v500, %v459
  %503 = vrot.lane.b32.xlu0 %v459, 64
  %v504 = vpop.permute.xlu0 %503
  %v506 = vadd.f32 %v501, %v504
  %v507 = vadd.f32 %v506, %v465
  %509 = vrot.lane.b32.xlu0 %v465, 64
  %v510 = vpop.permute.xlu0 %509
  %v512 = vadd.f32 %v507, %v510
  %v513 = vadd.f32 %v512, %v471
  %515 = vrot.lane.b32.xlu0 %v471, 64
  %v516 = vpop.permute.xlu0 %515
  %v518 = vadd.f32 %v513, %v516
  %v519 = vadd.f32 %v518, %v477
  %521 = vrot.lane.b32.xlu0 %v477, 64
  %v522 = vpop.permute.xlu0 %521
  %v524 = vadd.f32 %v519, %v522
  %v525 = vmul.f32 %v524, 0.03125
  %527 = vrot.lane.b32.xlu0 %v525, 64
  %v528 = vpop.permute.xlu0 %527
  %vm530 = vcmask 523264
  %v531 = vsel %vm530, %v525, %v528
  %v532 = vlaneseq
  %v533 = vshrl.u32 %v532, 7
  %vm534 = vcmp.lt.s32.totalorder %v533, 2
  %v535 = vlaneseq
  %v536 = vshrl.u32 %v535, 7
  %v537 = vsub.s32 0, %v536
  %v538 = vrot.slane %v531, %v537
  %v539 = vsub.f32 %v213, %v538
  %v540 = vsub.f32 %v215, %v538
  %v541 = vsub.f32 %v284, %v538
  %v542 = vsub.f32 %v286, %v538
  %v543 = vsub.f32 %v355, %v538
  %v544 = vsub.f32 %v357, %v538
  %v545 = vsub.f32 %v426, %v538
  %v546 = vsub.f32 %v428, %v538
  %v547 = vsel %vm534, 1, 0
  %vm548 = vcmp.eq.s32.totalorder %v547, 1
  %v549 = vsel %vm548, %v539, 0.0
  %v550 = vsel %vm548, %v540, 0.0
  %v551 = vsel %vm548, %v541, 0.0
  %v552 = vsel %vm548, %v542, 0.0
  %v553 = vsel %vm548, %v543, 0.0
  %v554 = vsel %vm548, %v544, 0.0
  %v555 = vsel %vm548, %v545, 0.0
  %v556 = vsel %vm548, %v546, 0.0
  %v557 = vmul.f32 %v549, %v549
  %v558 = vmul.f32 %v550, %v550
  %v559 = vmul.f32 %v551, %v551
  %v560 = vmul.f32 %v552, %v552
  %v561 = vmul.f32 %v553, %v553
  %v562 = vmul.f32 %v554, %v554
  %v563 = vmul.f32 %v555, %v555
  %v564 = vmul.f32 %v556, %v556
  %v565 = vrot.slane %v557, 4
  %v566 = vadd.f32 %v557, %v565
  %v567 = vrot.slane %v566, 2
  %v568 = vadd.f32 %v566, %v567
  %v569 = vrot.slane %v568, 1
  %v570 = vadd.f32 %v568, %v569
  %v571 = vrot.slane %v558, 4
  %v572 = vadd.f32 %v558, %v571
  %v573 = vrot.slane %v572, 2
  %v574 = vadd.f32 %v572, %v573
  %v575 = vrot.slane %v574, 1
  %v576 = vadd.f32 %v574, %v575
  %v577 = vrot.slane %v559, 4
  %v578 = vadd.f32 %v559, %v577
  %v579 = vrot.slane %v578, 2
  %v580 = vadd.f32 %v578, %v579
  %v581 = vrot.slane %v580, 1
  %v582 = vadd.f32 %v580, %v581
  %v583 = vrot.slane %v560, 4
  %v584 = vadd.f32 %v560, %v583
  %v585 = vrot.slane %v584, 2
  %v586 = vadd.f32 %v584, %v585
  %v587 = vrot.slane %v586, 1
  %v588 = vadd.f32 %v586, %v587
  %v589 = vrot.slane %v561, 4
  %v590 = vadd.f32 %v561, %v589
  %v591 = vrot.slane %v590, 2
  %v592 = vadd.f32 %v590, %v591
  %v593 = vrot.slane %v592, 1
  %v594 = vadd.f32 %v592, %v593
  %v595 = vrot.slane %v562, 4
  %v596 = vadd.f32 %v562, %v595
  %v597 = vrot.slane %v596, 2
  %v598 = vadd.f32 %v596, %v597
  %v599 = vrot.slane %v598, 1
  %v600 = vadd.f32 %v598, %v599
  %v601 = vrot.slane %v563, 4
  %v602 = vadd.f32 %v563, %v601
  %v603 = vrot.slane %v602, 2
  %v604 = vadd.f32 %v602, %v603
  %v605 = vrot.slane %v604, 1
  %v606 = vadd.f32 %v604, %v605
  %v607 = vrot.slane %v564, 4
  %v608 = vadd.f32 %v564, %v607
  %v609 = vrot.slane %v608, 2
  %v610 = vadd.f32 %v608, %v609
  %v611 = vrot.slane %v610, 1
  %v612 = vadd.f32 %v610, %v611
  %614 = vrot.lane.b32.xlu0 %v570, 64
  %v615 = vpop.permute.xlu0 %614
  %v617 = vadd.f32 %v570, %v615
  %v618 = vadd.f32 %v617, %v576
  %620 = vrot.lane.b32.xlu0 %v576, 64
  %v621 = vpop.permute.xlu0 %620
  %v623 = vadd.f32 %v618, %v621
  %v624 = vadd.f32 %v623, %v582
  %626 = vrot.lane.b32.xlu0 %v582, 64
  %v627 = vpop.permute.xlu0 %626
  %v629 = vadd.f32 %v624, %v627
  %v630 = vadd.f32 %v629, %v588
  %632 = vrot.lane.b32.xlu0 %v588, 64
  %v633 = vpop.permute.xlu0 %632
  %v635 = vadd.f32 %v630, %v633
  %v636 = vadd.f32 %v635, %v594
  %638 = vrot.lane.b32.xlu0 %v594, 64
  %v639 = vpop.permute.xlu0 %638
  %v641 = vadd.f32 %v636, %v639
  %v642 = vadd.f32 %v641, %v600
  %644 = vrot.lane.b32.xlu0 %v600, 64
  %v645 = vpop.permute.xlu0 %644
  %v647 = vadd.f32 %v642, %v645
  %v648 = vadd.f32 %v647, %v606
  %650 = vrot.lane.b32.xlu0 %v606, 64
  %v651 = vpop.permute.xlu0 %650
  %v653 = vadd.f32 %v648, %v651
  %v654 = vadd.f32 %v653, %v612
  %656 = vrot.lane.b32.xlu0 %v612, 64
  %v657 = vpop.permute.xlu0 %656
  %v659 = vadd.f32 %v654, %v657
  %v660 = vmul.f32 %v659, 0.03125
  %v661 = vld [vmem:[%s2] sm:$0x1]
  %v662 = vadd.f32 %v660, 1e-05
  %v663 = vrsqrt.pop %v662
  %v664 = vmul.f32 %v661, %v663
  %v665 = vld [vmem:[%s3] sm:$0x1]
  %v666 = vmul.f32 %v525, %v664
  %v667 = vsub.f32 %v665, %v666
  %v669 = vlaneseq
  %v670 = vshrl.u32 %v669, 7
  %v671 = vsub.s32 0, %v670
  %v672 = vrot.slane %v664, %v671
  %673 = vrot.lane.b32.xlu0 %v672, 64
  %v674 = vpop.permute.xlu0 %673
  %v676 = vsel %vm530, %v664, %v674
  %v678 = vlaneseq
  %v679 = vshrl.u32 %v678, 7
  %v680 = vsub.s32 0, %v679
  %v681 = vrot.slane %v667, %v680
  %682 = vrot.lane.b32.xlu0 %v681, 64
  %v683 = vpop.permute.xlu0 %682
  %v685 = vsel %vm530, %v667, %v683
  %v686 = vlaneseq
  %v687 = vshrl.u32 %v686, 7
  %v688 = vsub.s32 0, %v687
  %v689 = vrot.slane %v676, %v688
  %v690 = vmul.f32 %v213, %v689
  %v691 = vmul.f32 %v215, %v689
  %v692 = vmul.f32 %v284, %v689
  %v693 = vmul.f32 %v286, %v689
  %v694 = vmul.f32 %v355, %v689
  %v695 = vmul.f32 %v357, %v689
  %v696 = vmul.f32 %v426, %v689
  %v697 = vmul.f32 %v428, %v689
  %v698 = vlaneseq
  %v699 = vshrl.u32 %v698, 7
  %v700 = vsub.s32 0, %v699
  %v701 = vrot.slane %v685, %v700
  %v702 = vadd.f32 %v690, %v701
  %v703 = vadd.f32 %v691, %v701
  %v704 = vadd.f32 %v692, %v701
  %v705 = vadd.f32 %v693, %v701
  %v706 = vadd.f32 %v694, %v701
  %v707 = vadd.f32 %v695, %v701
  %v708 = vadd.f32 %v696, %v701
  %v709 = vadd.f32 %v697, %v701
  %v710 = vmax.f32 %v702, 0.0
  %v711 = vmax.f32 %v703, 0.0
  %v712 = vmax.f32 %v704, 0.0
  %v713 = vmax.f32 %v705, 0.0
  %v714 = vmax.f32 %v706, 0.0
  %v715 = vmax.f32 %v707, 0.0
  %v716 = vmax.f32 %v708, 0.0
  %v717 = vmax.f32 %v709, 0.0
  %718 = vst [vmem:[%s4] sm:$0xff] %v710
  %719 = vst [vmem:[%s4 + $0x8] sm:$0xff] %v711
  %720 = vst [vmem:[%s4 + $0x10] sm:$0xff] %v712
  %721 = vst [vmem:[%s4 + $0x18] sm:$0xff] %v713
  %722 = vst [vmem:[%s4 + $0x20] sm:$0xff] %v714
  %723 = vst [vmem:[%s4 + $0x28] sm:$0xff] %v715
  %724 = vst [vmem:[%s4 + $0x30] sm:$0xff] %v716
  %725 = vst [vmem:[%s4 + $0x38] sm:$0xff] %v717
  // Predicated region
  $region18: #{generator_forward.5} parent=0 // pred_check
    _
  $region19: #{generator_forward.5} parent=0 // pred_check_branch
    %727 = sbr.rel (0) target = $region21
  $region20: #{generator_forward.5} parent=0 // pred_region
    _
  $region21: #{generator_forward.5} parent=0 // pred_fallthru
    _
  // Predicated region
  $region22: #{generator_forward.5} parent=0 // pred_check
    _
  $region23: #{generator_forward.5} parent=0 // pred_check_branch
    %729 = sbr.rel (0) target = $region25
  $region24: #{generator_forward.5} parent=0 // pred_region
    _
  $region25: #{generator_forward.5} parent=0 // pred_fallthru
    _

// kernel: generator_forward.6
$region0: #{generator_forward.6}
  #allocation0 [shape = 'u32[]', space=smem, size = 0x4, offset = 0x4, fixed_abs, tag = 'smem constant byte address 0x4 - core index']
  #allocation1 [shape = 'u32[144,128]{1,0:T(1,128)}', space=vmem, size = 0x12000, scoped, tag = 'internal scratch']
  %s0 = inlined_call_operand.vmem [shape: f32[32,640], index: 0, kind: input, shape index: {}]
  %s1 = inlined_call_operand.vmem [shape: f32[640,128], index: 1, kind: input, shape index: {}]
  %s2 = inlined_call_operand.vmem [shape: f32[1,32], index: 2, kind: input, shape index: {}]
  %s3 = inlined_call_operand.vmem [shape: f32[1,32], index: 3, kind: input, shape index: {}]
  %s4 = inlined_call_operand.vmem [shape: f32[32,128], index: 4, kind: output, shape index: {}]
  %s5 = sld [smem:[#allocation0]]
  $region26: #{generator_forward.6} parent=0
    _
  %s7 = ssub.s32 1, %s5
  %s8 = scalar_select 0, %s7, %s5
  // Predicated region
  $region2: #{generator_forward.6} parent=0 // pred_check
    _
  $region3: #{generator_forward.6} parent=0 // pred_check_branch
    %10 = sbr.rel (0) target = $region5
  $region4: #{generator_forward.6} parent=0 // pred_region
    _
  $region5: #{generator_forward.6} parent=0 // pred_fallthru
    _
  // Predicated region
  $region6: #{generator_forward.6} parent=0 // pred_check
    _
  $region7: #{generator_forward.6} parent=0 // pred_check_branch
    %12 = sbr.rel (0) target = $region9
  $region8: #{generator_forward.6} parent=0 // pred_region
    _
  $region9: #{generator_forward.6} parent=0 // pred_fallthru
    _
  // Predicated region
  $region10: #{generator_forward.6} parent=0 // pred_check
    _
  $region11: #{generator_forward.6} parent=0 // pred_check_branch
    %14 = sbr.rel (0) target = $region13
  $region12: #{generator_forward.6} parent=0 // pred_region
    _
  $region13: #{generator_forward.6} parent=0 // pred_fallthru
    _
  // Predicated region
  $region14: #{generator_forward.6} parent=0 // pred_check
    _
  $region15: #{generator_forward.6} parent=0 // pred_check_branch
    %16 = sbr.rel (0) target = $region17
  $region16: #{generator_forward.6} parent=0 // pred_region
    _
  $region17: #{generator_forward.6} parent=0 // pred_fallthru
    _
  %v17 = vld [vmem:[%s0] sm:$0xff]
  %v18 = vld [vmem:[%s0 + $0x8] sm:$0xff]
  %v19 = vld [vmem:[%s0 + $0x10] sm:$0xff]
  %v20 = vld [vmem:[%s0 + $0x18] sm:$0xff]
  %v21 = vld [vmem:[%s0 + $0x20] sm:$0xff]
  %v22 = vld [vmem:[%s0 + $0x28] sm:$0xff]
  %v23 = vld [vmem:[%s0 + $0x30] sm:$0xff]
  %v24 = vld [vmem:[%s0 + $0x38] sm:$0xff]
  %v25 = vld [vmem:[%s0 + $0x40] sm:$0xff]
  %v26 = vld [vmem:[%s0 + $0x48] sm:$0xff]
  %v27 = vld [vmem:[%s0 + $0x50] sm:$0xff]
  %v28 = vld [vmem:[%s0 + $0x58] sm:$0xff]
  %v29 = vld [vmem:[%s0 + $0x60] sm:$0xff]
  %v30 = vld [vmem:[%s0 + $0x68] sm:$0xff]
  %v31 = vld [vmem:[%s0 + $0x70] sm:$0xff]
  %v32 = vld [vmem:[%s0 + $0x78] sm:$0xff]
  %v33 = vld [vmem:[%s0 + $0x80] sm:$0xff]
  %v34 = vld [vmem:[%s0 + $0x88] sm:$0xff]
  %v35 = vld [vmem:[%s0 + $0x90] sm:$0xff]
  %v36 = vld [vmem:[%s0 + $0x98] sm:$0xff]
  %v37 = vld [vmem:[%s1] sm:$0xff]
  %v38 = vld [vmem:[%s1 + $0x8] sm:$0xff]
  %v39 = vld [vmem:[%s1 + $0x10] sm:$0xff]
  %v40 = vld [vmem:[%s1 + $0x18] sm:$0xff]
  %v41 = vld [vmem:[%s1 + $0x20] sm:$0xff]
  %v42 = vld [vmem:[%s1 + $0x28] sm:$0xff]
  %v43 = vld [vmem:[%s1 + $0x30] sm:$0xff]
  %v44 = vld [vmem:[%s1 + $0x38] sm:$0xff]
  %v45 = vld [vmem:[%s1 + $0x40] sm:$0xff]
  %v46 = vld [vmem:[%s1 + $0x48] sm:$0xff]
  %v47 = vld [vmem:[%s1 + $0x50] sm:$0xff]
  %v48 = vld [vmem:[%s1 + $0x58] sm:$0xff]
  %v49 = vld [vmem:[%s1 + $0x60] sm:$0xff]
  %v50 = vld [vmem:[%s1 + $0x68] sm:$0xff]
  %v51 = vld [vmem:[%s1 + $0x70] sm:$0xff]
  %v52 = vld [vmem:[%s1 + $0x78] sm:$0xff]
  %v53 = vld [vmem:[%s1 + $0x80] sm:$0xff]
  %v54 = vld [vmem:[%s1 + $0x88] sm:$0xff]
  %v55 = vld [vmem:[%s1 + $0x90] sm:$0xff]
  %v56 = vld [vmem:[%s1 + $0x98] sm:$0xff]
  %v57 = vld [vmem:[%s1 + $0xa0] sm:$0xff]
  %v58 = vld [vmem:[%s1 + $0xa8] sm:$0xff]
  %v59 = vld [vmem:[%s1 + $0xb0] sm:$0xff]
  %v60 = vld [vmem:[%s1 + $0xb8] sm:$0xff]
  %v61 = vld [vmem:[%s1 + $0xc0] sm:$0xff]
  %v62 = vld [vmem:[%s1 + $0xc8] sm:$0xff]
  %v63 = vld [vmem:[%s1 + $0xd0] sm:$0xff]
  %v64 = vld [vmem:[%s1 + $0xd8] sm:$0xff]
  %v65 = vld [vmem:[%s1 + $0xe0] sm:$0xff]
  %v66 = vld [vmem:[%s1 + $0xe8] sm:$0xff]
  %v67 = vld [vmem:[%s1 + $0xf0] sm:$0xff]
  %v68 = vld [vmem:[%s1 + $0xf8] sm:$0xff]
  %v69 = vld [vmem:[%s1 + $0x100] sm:$0xff]
  %v70 = vld [vmem:[%s1 + $0x108] sm:$0xff]
  %v71 = vld [vmem:[%s1 + $0x110] sm:$0xff]
  %v72 = vld [vmem:[%s1 + $0x118] sm:$0xff]
  %v73 = vld [vmem:[%s1 + $0x120] sm:$0xff]
  %v74 = vld [vmem:[%s1 + $0x128] sm:$0xff]
  %v75 = vld [vmem:[%s1 + $0x130] sm:$0xff]
  %v76 = vld [vmem:[%s1 + $0x138] sm:$0xff]
  %v77 = vld [vmem:[%s1 + $0x140] sm:$0xff]
  %v78 = vld [vmem:[%s1 + $0x148] sm:$0xff]
  %v79 = vld [vmem:[%s1 + $0x150] sm:$0xff]
  %v80 = vld [vmem:[%s1 + $0x158] sm:$0xff]
  %v81 = vld [vmem:[%s1 + $0x160] sm:$0xff]
  %v82 = vld [vmem:[%s1 + $0x168] sm:$0xff]
  %v83 = vld [vmem:[%s1 + $0x170] sm:$0xff]
  %v84 = vld [vmem:[%s1 + $0x178] sm:$0xff]
  %v85 = vld [vmem:[%s1 + $0x180] sm:$0xff]
  %v86 = vld [vmem:[%s1 + $0x188] sm:$0xff]
  %v87 = vld [vmem:[%s1 + $0x190] sm:$0xff]
  %v88 = vld [vmem:[%s1 + $0x198] sm:$0xff]
  %v89 = vld [vmem:[%s1 + $0x1a0] sm:$0xff]
  %v90 = vld [vmem:[%s1 + $0x1a8] sm:$0xff]
  %v91 = vld [vmem:[%s1 + $0x1b0] sm:$0xff]
  %v92 = vld [vmem:[%s1 + $0x1b8] sm:$0xff]
  %v93 = vld [vmem:[%s1 + $0x1c0] sm:$0xff]
  %v94 = vld [vmem:[%s1 + $0x1c8] sm:$0xff]
  %v95 = vld [vmem:[%s1 + $0x1d0] sm:$0xff]
  %v96 = vld [vmem:[%s1 + $0x1d8] sm:$0xff]
  %v97 = vld [vmem:[%s1 + $0x1e0] sm:$0xff]
  %v98 = vld [vmem:[%s1 + $0x1e8] sm:$0xff]
  %v99 = vld [vmem:[%s1 + $0x1f0] sm:$0xff]
  %v100 = vld [vmem:[%s1 + $0x1f8] sm:$0xff]
  %v101 = vld [vmem:[%s1 + $0x200] sm:$0xff]
  %v102 = vld [vmem:[%s1 + $0x208] sm:$0xff]
  %v103 = vld [vmem:[%s1 + $0x210] sm:$0xff]
  %v104 = vld [vmem:[%s1 + $0x218] sm:$0xff]
  %v105 = vld [vmem:[%s1 + $0x220] sm:$0xff]
  %v106 = vld [vmem:[%s1 + $0x228] sm:$0xff]
  %v107 = vld [vmem:[%s1 + $0x230] sm:$0xff]
  %v108 = vld [vmem:[%s1 + $0x238] sm:$0xff]
  %v109 = vld [vmem:[%s1 + $0x240] sm:$0xff]
  %v110 = vld [vmem:[%s1 + $0x248] sm:$0xff]
  %v111 = vld [vmem:[%s1 + $0x250] sm:$0xff]
  %v112 = vld [vmem:[%s1 + $0x258] sm:$0xff]
  %v113 = vld [vmem:[%s1 + $0x260] sm:$0xff]
  %v114 = vld [vmem:[%s1 + $0x268] sm:$0xff]
  %v115 = vld [vmem:[%s1 + $0x270] sm:$0xff]
  %v116 = vld [vmem:[%s1 + $0x278] sm:$0xff]
  %117 = vmatprep.subr.mxu0 0.0
  %118 = vmatpush1.msra.mxu0 %v52
  %119 = vmatprep.subr.mxu0 0.0
  %120 = vmatpush1.msra.mxu0 %v51
  %121 = vmatprep.subr.mxu0 0.0
  %122 = vmatpush1.msra.mxu0 %v50
  %123 = vmatprep.subr.mxu0 0.0
  %124 = vmatpush1.msra.mxu0 %v49
  %125 = vmatprep.subr.mxu0 0.0
  %126 = vmatpush1.msra.mxu0 %v48
  %127 = vmatprep.subr.mxu0 0.0
  %128 = vmatpush1.msra.mxu0 %v47
  %129 = vmatprep.subr.mxu0 0.0
  %130 = vmatpush1.msra.mxu0 %v46
  %131 = vmatprep.subr.mxu0 0.0
  %132 = vmatpush1.msra.mxu0 %v45
  %133 = vmatprep.subr.mxu0 0.0
  %134 = vmatpush1.msra.mxu0 %v44
  %135 = vmatprep.subr.mxu0 0.0
  %136 = vmatpush1.msra.mxu0 %v43
  %137 = vmatprep.subr.mxu0 0.0
  %138 = vmatpush1.msra.mxu0 %v42
  %139 = vmatprep.subr.mxu0 0.0
  %140 = vmatpush1.msra.mxu0 %v41
  %141 = vmatprep.subr.mxu0 0.0
  %142 = vmatpush1.msra.mxu0 %v40
  %143 = vmatprep.subr.mxu0 0.0
  %144 = vmatpush1.msra.mxu0 %v39
  %145 = vmatprep.subr.mxu0 0.0
  %146 = vmatpush1.msra.mxu0 %v38
  %147 = vmatprep.subr.mxu0 0.0
  %148 = vmatpush1.msra.mxu0 %v37
  %149 = vmatprep.subr.mxu0 0.0
  %150 = vmatpush2.msra.mxu0 %v68
  %151 = vmatprep.subr.mxu0 0.0
  %152 = vmatpush2.msra.mxu0 %v67
  %153 = vmatprep.subr.mxu0 0.0
  %154 = vmatpush2.msra.mxu0 %v66
  %155 = vmatprep.subr.mxu0 0.0
  %156 = vmatpush2.msra.mxu0 %v65
  %157 = vmatprep.subr.mxu0 0.0
  %158 = vmatpush2.msra.mxu0 %v64
  %159 = vmatprep.subr.mxu0 0.0
  %160 = vmatpush2.msra.mxu0 %v63
  %161 = vmatprep.subr.mxu0 0.0
  %162 = vmatpush2.msra.mxu0 %v62
  %163 = vmatprep.subr.mxu0 0.0
  %164 = vmatpush2.msra.mxu0 %v61
  %165 = vmatprep.subr.mxu0 0.0
  %166 = vmatpush2.msra.mxu0 %v60
  %167 = vmatprep.subr.mxu0 0.0
  %168 = vmatpush2.msra.mxu0 %v59
  %169 = vmatprep.subr.mxu0 0.0
  %170 = vmatpush2.msra.mxu0 %v58
  %171 = vmatprep.subr.mxu0 0.0
  %172 = vmatpush2.msra.mxu0 %v57
  %173 = vmatprep.subr.mxu0 0.0
  %174 = vmatpush2.msra.mxu0 %v56
  %175 = vmatprep.subr.mxu0 0.0
  %176 = vmatpush2.msra.mxu0 %v55
  %177 = vmatprep.subr.mxu0 0.0
  %178 = vmatpush2.msra.mxu0 %v54
  %179 = vmatprep.subr.mxu0 0.0
  %180 = vmatpush2.msra.mxu0 %v53
  %181 = vmatprep.mubr.f32.mxu0 %v18
  %182 = vmatmul.mubr.f32.gmra.mxu0 %v17
  %v183 = vpop.f32.mrf.mxu0
  %v184 = vadd.f32 0.0, %v183
  %v185 = vpop.f32.mrf.mxu0
  %186 = vmatprep.mubr.f32.mxu0 %v23
  %187 = vmatmul.mubr.f32.gmra.mxu0 %v22
  %v188 = vpop.f32.mrf.mxu0
  %v189 = vadd.f32 0.0, %v188
  %v190 = vpop.f32.mrf.mxu0
  %191 = vmatprep.mubr.f32.mxu0 %v28
  %192 = vmatmul.mubr.f32.gmra.mxu0 %v27
  %v193 = vpop.f32.mrf.mxu0
  %v194 = vadd.f32 0.0, %v193
  %v195 = vpop.f32.mrf.mxu0
  %196 = vmatprep.mubr.f32.mxu0 %v33
  %197 = vmatmul.mubr.f32.gmra.mxu0 %v32
  %v198 = vpop.f32.mrf.mxu0
  %v199 = vadd.f32 0.0, %v198
  %v200 = vpop.f32.mrf.mxu0
  %201 = vdwg.mxu0
  %202 = vmatprep.subr.mxu0 0.0
  %203 = vmatpush1.msra.mxu0 %v84
  %204 = vmatprep.subr.mxu0 0.0
  %205 = vmatpush1.msra.mxu0 %v83
  %206 = vmatprep.subr.mxu0 0.0
  %207 = vmatpush1.msra.mxu0 %v82
  %208 = vmatprep.subr.mxu0 0.0
  %209 = vmatpush1.msra.mxu0 %v81
  %210 = vmatprep.subr.mxu0 0.0
  %211 = vmatpush1.msra.mxu0 %v80
  %212 = vmatprep.subr.mxu0 0.0
  %213 = vmatpush1.msra.mxu0 %v79
  %214 = vmatprep.subr.mxu0 0.0
  %215 = vmatpush1.msra.mxu0 %v78
  %216 = vmatprep.subr.mxu0 0.0
  %217 = vmatpush1.msra.mxu0 %v77
  %218 = vmatprep.subr.mxu0 0.0
  %219 = vmatpush1.msra.mxu0 %v76
  %220 = vmatprep.subr.mxu0 0.0
  %221 = vmatpush1.msra.mxu0 %v75
  %222 = vmatprep.subr.mxu0 0.0
  %223 = vmatpush1.msra.mxu0 %v74
  %224 = vmatprep.subr.mxu0 0.0
  %225 = vmatpush1.msra.mxu0 %v73
  %226 = vmatprep.subr.mxu0 0.0
  %227 = vmatpush1.msra.mxu0 %v72
  %228 = vmatprep.subr.mxu0 0.0
  %229 = vmatpush1.msra.mxu0 %v71
  %230 = vmatprep.subr.mxu0 0.0
  %231 = vmatpush1.msra.mxu0 %v70
  %232 = vmatprep.subr.mxu0 0.0
  %233 = vmatpush1.msra.mxu0 %v69
  %234 = vmatprep.subr.mxu0 0.0
  %235 = vmatpush2.msra.mxu0 %v100
  %236 = vmatprep.subr.mxu0 0.0
  %237 = vmatpush2.msra.mxu0 %v99
  %238 = vmatprep.subr.mxu0 0.0
  %239 = vmatpush2.msra.mxu0 %v98
  %240 = vmatprep.subr.mxu0 0.0
  %241 = vmatpush2.msra.mxu0 %v97
  %242 = vmatprep.subr.mxu0 0.0
  %243 = vmatpush2.msra.mxu0 %v96
  %244 = vmatprep.subr.mxu0 0.0
  %245 = vmatpush2.msra.mxu0 %v95
  %246 = vmatprep.subr.mxu0 0.0
  %247 = vmatpush2.msra.mxu0 %v94
  %248 = vmatprep.subr.mxu0 0.0
  %249 = vmatpush2.msra.mxu0 %v93
  %250 = vmatprep.subr.mxu0 0.0
  %251 = vmatpush2.msra.mxu0 %v92
  %252 = vmatprep.subr.mxu0 0.0
  %253 = vmatpush2.msra.mxu0 %v91
  %254 = vmatprep.subr.mxu0 0.0
  %255 = vmatpush2.msra.mxu0 %v90
  %256 = vmatprep.subr.mxu0 0.0
  %257 = vmatpush2.msra.mxu0 %v89
  %258 = vmatprep.subr.mxu0 0.0
  %259 = vmatpush2.msra.mxu0 %v88
  %260 = vmatprep.subr.mxu0 0.0
  %261 = vmatpush2.msra.mxu0 %v87
  %262 = vmatprep.subr.mxu0 0.0
  %263 = vmatpush2.msra.mxu0 %v86
  %264 = vmatprep.subr.mxu0 0.0
  %265 = vmatpush2.msra.mxu0 %v85
  %266 = vmatprep.mubr.f32.mxu0 %v20
  %267 = vmatmul.mubr.f32.gmra.mxu0 %v19
  %v268 = vpop.f32.mrf.mxu0
  %v269 = vadd.f32 %v184, %v268
  %v270 = vpop.f32.mrf.mxu0
  %271 = vmatprep.mubr.f32.mxu0 %v25
  %272 = vmatmul.mubr.f32.gmra.mxu0 %v24
  %v273 = vpop.f32.mrf.mxu0
  %v274 = vadd.f32 %v189, %v273
  %v275 = vpop.f32.mrf.mxu0
  %276 = vmatprep.mubr.f32.mxu0 %v30
  %277 = vmatmul.mubr.f32.gmra.mxu0 %v29
  %v278 = vpop.f32.mrf.mxu0
  %v279 = vadd.f32 %v194, %v278
  %v280 = vpop.f32.mrf.mxu0
  %281 = vmatprep.mubr.f32.mxu0 %v35
  %282 = vmatmul.mubr.f32.gmra.mxu0 %v34
  %v283 = vpop.f32.mrf.mxu0
  %v284 = vadd.f32 %v199, %v283
  %v285 = vpop.f32.mrf.mxu0
  %286 = vdwg.mxu0
  %287 = vmatprep.subr.mxu0 0.0
  %288 = vmatpush1.msra.mxu0 %v116
  %289 = vmatprep.subr.mxu0 0.0
  %290 = vmatpush1.msra.mxu0 %v115
  %291 = vmatprep.subr.mxu0 0.0
  %292 = vmatpush1.msra.mxu0 %v114
  %293 = vmatprep.subr.mxu0 0.0
  %294 = vmatpush1.msra.mxu0 %v113
  %295 = vmatprep.subr.mxu0 0.0
  %296 = vmatpush1.msra.mxu0 %v112
  %297 = vmatprep.subr.mxu0 0.0
  %298 = vmatpush1.msra.mxu0 %v111
  %299 = vmatprep.subr.mxu0 0.0
  %300 = vmatpush1.msra.mxu0 %v110
  %301 = vmatprep.subr.mxu0 0.0
  %302 = vmatpush1.msra.mxu0 %v109
  %303 = vmatprep.subr.mxu0 0.0
  %304 = vmatpush1.msra.mxu0 %v108
  %305 = vmatprep.subr.mxu0 0.0
  %306 = vmatpush1.msra.mxu0 %v107
  %307 = vmatprep.subr.mxu0 0.0
  %308 = vmatpush1.msra.mxu0 %v106
  %309 = vmatprep.subr.mxu0 0.0
  %310 = vmatpush1.msra.mxu0 %v105
  %311 = vmatprep.subr.mxu0 0.0
  %312 = vmatpush1.msra.mxu0 %v104
  %313 = vmatprep.subr.mxu0 0.0
  %314 = vmatpush1.msra.mxu0 %v103
  %315 = vmatprep.subr.mxu0 0.0
  %316 = vmatpush1.msra.mxu0 %v102
  %317 = vmatprep.subr.mxu0 0.0
  %318 = vmatpush1.msra.mxu0 %v101
  %319 = vmatprep.subr.mxu0 0.0
  %320 = vmatpush2.msra.mxu0 0.0
  %321 = vmatprep.subr.mxu0 0.0
  %322 = vmatpush2.msra.mxu0 0.0
  %323 = vmatprep.subr.mxu0 0.0
  %324 = vmatpush2.msra.mxu0 0.0
  %325 = vmatprep.subr.mxu0 0.0
  %326 = vmatpush2.msra.mxu0 0.0
  %327 = vmatprep.subr.mxu0 0.0
  %328 = vmatpush2.msra.mxu0 0.0
  %329 = vmatprep.subr.mxu0 0.0
  %330 = vmatpush2.msra.mxu0 0.0
  %331 = vmatprep.subr.mxu0 0.0
  %332 = vmatpush2.msra.mxu0 0.0
  %333 = vmatprep.subr.mxu0 0.0
  %334 = vmatpush2.msra.mxu0 0.0
  %335 = vmatprep.subr.mxu0 0.0
  %336 = vmatpush2.msra.mxu0 0.0
  %337 = vmatprep.subr.mxu0 0.0
  %338 = vmatpush2.msra.mxu0 0.0
  %339 = vmatprep.subr.mxu0 0.0
  %340 = vmatpush2.msra.mxu0 0.0
  %341 = vmatprep.subr.mxu0 0.0
  %342 = vmatpush2.msra.mxu0 0.0
  %343 = vmatprep.subr.mxu0 0.0
  %344 = vmatpush2.msra.mxu0 0.0
  %345 = vmatprep.subr.mxu0 0.0
  %346 = vmatpush2.msra.mxu0 0.0
  %347 = vmatprep.subr.mxu0 0.0
  %348 = vmatpush2.msra.mxu0 0.0
  %349 = vmatprep.subr.mxu0 0.0
  %350 = vmatpush2.msra.mxu0 0.0
  %351 = vmatprep.mubr.f32.mxu0 0.0
  %352 = vmatmul.mubr.f32.gmra.mxu0 %v21
  %v353 = vpop.f32.mrf.mxu0
  %v354 = vadd.f32 %v269, %v353
  %v355 = vpop.f32.mrf.mxu0
  %356 = vmatprep.mubr.f32.mxu0 0.0
  %357 = vmatmul.mubr.f32.gmra.mxu0 %v26
  %v358 = vpop.f32.mrf.mxu0
  %v359 = vadd.f32 %v274, %v358
  %v360 = vpop.f32.mrf.mxu0
  %361 = vmatprep.mubr.f32.mxu0 0.0
  %362 = vmatmul.mubr.f32.gmra.mxu0 %v31
  %v363 = vpop.f32.mrf.mxu0
  %v364 = vadd.f32 %v279, %v363
  %v365 = vpop.f32.mrf.mxu0
  %366 = vmatprep.mubr.f32.mxu0 0.0
  %367 = vmatmul.mubr.f32.gmra.mxu0 %v36
  %v368 = vpop.f32.mrf.mxu0
  %v369 = vadd.f32 %v284, %v368
  %v370 = vpop.f32.mrf.mxu0
  %371 = vdwg.mxu0
  %v372 = vadd.f32 %v354, %v359
  %v373 = vadd.f32 %v372, %v364
  %v374 = vadd.f32 %v373, %v369
  %v375 = vrot.slane %v374, 4
  %v376 = vadd.f32 %v374, %v375
  %v377 = vrot.slane %v376, 2
  %v378 = vadd.f32 %v376, %v377
  %v379 = vrot.slane %v378, 1
  %v380 = vadd.f32 %v378, %v379
  %382 = vrot.lane.b32.xlu0 %v380, 96
  %v383 = vpop.permute.xlu0 %382
  %v385 = vadd.f32 %v380, %v383
  %386 = vrot.lane.b32.xlu0 %v380, 64
  %v387 = vpop.permute.xlu0 %386
  %v389 = vadd.f32 %v385, %v387
  %390 = vrot.lane.b32.xlu0 %v380, 32
  %v391 = vpop.permute.xlu0 %390
  %v393 = vadd.f32 %v389, %v391
  %v394 = vmul.f32 %v393, 0.0078125
  %396 = vrot.lane.b32.xlu0 %v394, 32
  %v397 = vpop.permute.xlu0 %396
  %399 = vrot.lane.b32.xlu0 %v394, 64
  %v400 = vpop.permute.xlu0 %399
  %402 = vrot.lane.b32.xlu0 %v394, 96
  %v403 = vpop.permute.xlu0 %402
  %vm405 = vcmask 261120
  %v406 = vsel %vm405, %v394, %v397
  %vm407 = vcmask 523264
  %v408 = vsel %vm407, %v406, %v400
  %vm409 = vcmask 785408
  %v410 = vsel %vm409, %v408, %v403
  %v411 = vlaneseq
  %v412 = vshrl.u32 %v411, 7
  %v413 = vadd.s32 %v412, 8
  %v414 = vadd.s32 %v412, 16
  %v415 = vadd.s32 %v412, 24
  %vm416 = vcmp.lt.s32.totalorder %v412, 32
  %vm417 = vcmp.lt.s32.totalorder %v413, 32
  %vm418 = vcmp.lt.s32.totalorder %v414, 32
  %vm419 = vcmp.lt.s32.totalorder %v415, 32
  %v420 = vlaneseq
  %v421 = vshrl.u32 %v420, 7
  %v422 = vsub.s32 0, %v421
  %v423 = vrot.slane %v410, %v422
  %v424 = vsub.f32 %v354, %v423
  %v425 = vsub.f32 %v359, %v423
  %v426 = vsub.f32 %v364, %v423
  %v427 = vsub.f32 %v369, %v423
  %v428 = vsel %vm416, 1, 0
  %v429 = vsel %vm417, 1, 0
  %v430 = vsel %vm418, 1, 0
  %v431 = vsel %vm419, 1, 0
  %vm432 = vcmp.eq.s32.totalorder %v428, 1
  %vm433 = vcmp.eq.s32.totalorder %v429, 1
  %vm434 = vcmp.eq.s32.totalorder %v430, 1
  %vm435 = vcmp.eq.s32.totalorder %v431, 1
  %v436 = vsel %vm432, %v424, 0.0
  %v437 = vsel %vm433, %v425, 0.0
  %v438 = vsel %vm434, %v426, 0.0
  %v439 = vsel %vm435, %v427, 0.0
  %v440 = vmul.f32 %v436, %v436
  %v441 = vmul.f32 %v437, %v437
  %v442 = vmul.f32 %v438, %v438
  %v443 = vmul.f32 %v439, %v439
  %v444 = vadd.f32 %v440, %v441
  %v445 = vadd.f32 %v444, %v442
  %v446 = vadd.f32 %v445, %v443
  %v447 = vrot.slane %v446, 4
  %v448 = vadd.f32 %v446, %v447
  %v449 = vrot.slane %v448, 2
  %v450 = vadd.f32 %v448, %v449
  %v451 = vrot.slane %v450, 1
  %v452 = vadd.f32 %v450, %v451
  %454 = vrot.lane.b32.xlu0 %v452, 96
  %v455 = vpop.permute.xlu0 %454
  %v457 = vadd.f32 %v452, %v455
  %458 = vrot.lane.b32.xlu0 %v452, 64
  %v459 = vpop.permute.xlu0 %458
  %v461 = vadd.f32 %v457, %v459
  %462 = vrot.lane.b32.xlu0 %v452, 32
  %v463 = vpop.permute.xlu0 %462
  %v465 = vadd.f32 %v461, %v463
  %v466 = vmul.f32 %v465, 0.0078125
  %v467 = vld [vmem:[%s2] sm:$0x1]
  %v468 = vadd.f32 %v466, 1e-05
  %v469 = vrsqrt.pop %v468
  %v470 = vmul.f32 %v467, %v469
  %v471 = vld [vmem:[%s3] sm:$0x1]
  %v472 = vmul.f32 %v394, %v470
  %v473 = vsub.f32 %v471, %v472
  %v475 = vlaneseq
  %v476 = vshrl.u32 %v475, 7
  %v477 = vsub.s32 0, %v476
  %v478 = vrot.slane %v470, %v477
  %479 = vrot.lane.b32.xlu0 %v478, 32
  %v480 = vpop.permute.xlu0 %479
  %482 = vrot.lane.b32.xlu0 %v478, 64
  %v483 = vpop.permute.xlu0 %482
  %485 = vrot.lane.b32.xlu0 %v478, 96
  %v486 = vpop.permute.xlu0 %485
  %v488 = vsel %vm405, %v470, %v480
  %v489 = vsel %vm407, %v488, %v483
  %v490 = vsel %vm409, %v489, %v486
  %v492 = vlaneseq
  %v493 = vshrl.u32 %v492, 7
  %v494 = vsub.s32 0, %v493
  %v495 = vrot.slane %v473, %v494
  %496 = vrot.lane.b32.xlu0 %v495, 32
  %v497 = vpop.permute.xlu0 %496
  %499 = vrot.lane.b32.xlu0 %v495, 64
  %v500 = vpop.permute.xlu0 %499
  %502 = vrot.lane.b32.xlu0 %v495, 96
  %v503 = vpop.permute.xlu0 %502
  %v505 = vsel %vm405, %v473, %v497
  %v506 = vsel %vm407, %v505, %v500
  %v507 = vsel %vm409, %v506, %v503
  %v508 = vlaneseq
  %v509 = vshrl.u32 %v508, 7
  %v510 = vsub.s32 0, %v509
  %v511 = vrot.slane %v490, %v510
  %v512 = vmul.f32 %v354, %v511
  %v513 = vmul.f32 %v359, %v511
  %v514 = vmul.f32 %v364, %v511
  %v515 = vmul.f32 %v369, %v511
  %v516 = vlaneseq
  %v517 = vshrl.u32 %v516, 7
  %v518 = vsub.s32 0, %v517
  %v519 = vrot.slane %v507, %v518
  %v520 = vadd.f32 %v512, %v519
  %v521 = vadd.f32 %v513, %v519
  %v522 = vadd.f32 %v514, %v519
  %v523 = vadd.f32 %v515, %v519
  %v524 = vmax.f32 %v520, 0.0
  %v525 = vmax.f32 %v521, 0.0
  %v526 = vmax.f32 %v522, 0.0
  %v527 = vmax.f32 %v523, 0.0
  %528 = vst [vmem:[%s4] sm:$0xff] %v524
  %529 = vst [vmem:[%s4 + $0x8] sm:$0xff] %v525
  %530 = vst [vmem:[%s4 + $0x10] sm:$0xff] %v526
  %531 = vst [vmem:[%s4 + $0x18] sm:$0xff] %v527
  // Predicated region
  $region18: #{generator_forward.6} parent=0 // pred_check
    _
  $region19: #{generator_forward.6} parent=0 // pred_check_branch
    %533 = sbr.rel (0) target = $region21
  $region20: #{generator_forward.6} parent=0 // pred_region
    _
  $region21: #{generator_forward.6} parent=0 // pred_fallthru
    _
  // Predicated region
  $region22: #{generator_forward.6} parent=0 // pred_check
    _
  $region23: #{generator_forward.6} parent=0 // pred_check_branch
    %535 = sbr.rel (0) target = $region25
  $region24: #{generator_forward.6} parent=0 // pred_region
    _
  $region25: #{generator_forward.6} parent=0 // pred_fallthru
    _

// kernel: generator_forward.7
$region0: #{generator_forward.7}
  #allocation0 [shape = 'u32[]', space=smem, size = 0x4, offset = 0x4, fixed_abs, tag = 'smem constant byte address 0x4 - core index']
  #allocation1 [shape = 'u32[144,128]{1,0:T(1,128)}', space=vmem, size = 0x12000, scoped, tag = 'internal scratch']
  %s0 = inlined_call_operand.vmem [shape: f32[128,384], index: 0, kind: input, shape index: {}]
  %s1 = inlined_call_operand.vmem [shape: f32[384,64], index: 1, kind: input, shape index: {}]
  %s2 = inlined_call_operand.vmem [shape: f32[1,16], index: 2, kind: input, shape index: {}]
  %s3 = inlined_call_operand.vmem [shape: f32[1,16], index: 3, kind: input, shape index: {}]
  %s4 = inlined_call_operand.vmem [shape: f32[128,64], index: 4, kind: output, shape index: {}]
  %s5 = sld [smem:[#allocation0]]
  $region26: #{generator_forward.7} parent=0
    _
  %s7 = ssub.s32 1, %s5
  %s8 = scalar_select 0, %s7, %s5
  // Predicated region
  $region2: #{generator_forward.7} parent=0 // pred_check
    _
  $region3: #{generator_forward.7} parent=0 // pred_check_branch
    %10 = sbr.rel (0) target = $region5
  $region4: #{generator_forward.7} parent=0 // pred_region
    _
  $region5: #{generator_forward.7} parent=0 // pred_fallthru
    _
  // Predicated region
  $region6: #{generator_forward.7} parent=0 // pred_check
    _
  $region7: #{generator_forward.7} parent=0 // pred_check_branch
    %12 = sbr.rel (0) target = $region9
  $region8: #{generator_forward.7} parent=0 // pred_region
    _
  $region9: #{generator_forward.7} parent=0 // pred_fallthru
    _
  // Predicated region
  $region10: #{generator_forward.7} parent=0 // pred_check
    _
  $region11: #{generator_forward.7} parent=0 // pred_check_branch
    %14 = sbr.rel (0) target = $region13
  $region12: #{generator_forward.7} parent=0 // pred_region
    _
  $region13: #{generator_forward.7} parent=0 // pred_fallthru
    _
  // Predicated region
  $region14: #{generator_forward.7} parent=0 // pred_check
    _
  $region15: #{generator_forward.7} parent=0 // pred_check_branch
    %16 = sbr.rel (0) target = $region17
  $region16: #{generator_forward.7} parent=0 // pred_region
    _
  $region17: #{generator_forward.7} parent=0 // pred_fallthru
    _
  %v17 = vld [vmem:[%s0] sm:$0xff]
  %v18 = vld [vmem:[%s0 + $0x8] sm:$0xff]
  %v19 = vld [vmem:[%s0 + $0x10] sm:$0xff]
  %v20 = vld [vmem:[%s0 + $0x18] sm:$0xff]
  %v21 = vld [vmem:[%s0 + $0x20] sm:$0xff]
  %v22 = vld [vmem:[%s0 + $0x28] sm:$0xff]
  %v23 = vld [vmem:[%s0 + $0x30] sm:$0xff]
  %v24 = vld [vmem:[%s0 + $0x38] sm:$0xff]
  %v25 = vld [vmem:[%s0 + $0x40] sm:$0xff]
  %v26 = vld [vmem:[%s0 + $0x48] sm:$0xff]
  %v27 = vld [vmem:[%s0 + $0x50] sm:$0xff]
  %v28 = vld [vmem:[%s0 + $0x58] sm:$0xff]
  %v29 = vld [vmem:[%s0 + $0x60] sm:$0xff]
  %v30 = vld [vmem:[%s0 + $0x68] sm:$0xff]
  %v31 = vld [vmem:[%s0 + $0x70] sm:$0xff]
  %v32 = vld [vmem:[%s0 + $0x78] sm:$0xff]
  %v33 = vld [vmem:[%s0 + $0x80] sm:$0xff]
  %v34 = vld [vmem:[%s0 + $0x88] sm:$0xff]
  %v35 = vld [vmem:[%s0 + $0x90] sm:$0xff]
  %v36 = vld [vmem:[%s0 + $0x98] sm:$0xff]
  %v37 = vld [vmem:[%s0 + $0xa0] sm:$0xff]
  %v38 = vld [vmem:[%s0 + $0xa8] sm:$0xff]
  %v39 = vld [vmem:[%s0 + $0xb0] sm:$0xff]
  %v40 = vld [vmem:[%s0 + $0xb8] sm:$0xff]
  %v41 = vld [vmem:[%s0 + $0xc0] sm:$0xff]
  %v42 = vld [vmem:[%s0 + $0xc8] sm:$0xff]
  %v43 = vld [vmem:[%s0 + $0xd0] sm:$0xff]
  %v44 = vld [vmem:[%s0 + $0xd8] sm:$0xff]
  %v45 = vld [vmem:[%s0 + $0xe0] sm:$0xff]
  %v46 = vld [vmem:[%s0 + $0xe8] sm:$0xff]
  %v47 = vld [vmem:[%s0 + $0xf0] sm:$0xff]
  %v48 = vld [vmem:[%s0 + $0xf8] sm:$0xff]
  %v49 = vld [vmem:[%s0 + $0x100] sm:$0xff]
  %v50 = vld [vmem:[%s0 + $0x108] sm:$0xff]
  %v51 = vld [vmem:[%s0 + $0x110] sm:$0xff]
  %v52 = vld [vmem:[%s0 + $0x118] sm:$0xff]
  %v53 = vld [vmem:[%s0 + $0x120] sm:$0xff]
  %v54 = vld [vmem:[%s0 + $0x128] sm:$0xff]
  %v55 = vld [vmem:[%s0 + $0x130] sm:$0xff]
  %v56 = vld [vmem:[%s0 + $0x138] sm:$0xff]
  %v57 = vld [vmem:[%s0 + $0x140] sm:$0xff]
  %v58 = vld [vmem:[%s0 + $0x148] sm:$0xff]
  %v59 = vld [vmem:[%s0 + $0x150] sm:$0xff]
  %v60 = vld [vmem:[%s0 + $0x158] sm:$0xff]
  %v61 = vld [vmem:[%s0 + $0x160] sm:$0xff]
  %v62 = vld [vmem:[%s0 + $0x168] sm:$0xff]
  %v63 = vld [vmem:[%s0 + $0x170] sm:$0xff]
  %v64 = vld [vmem:[%s0 + $0x178] sm:$0xff]
  %v65 = vld [vmem:[%s1] sm:$0xff]
  %v66 = vld [vmem:[%s1 + $0x8] sm:$0xff]
  %v67 = vld [vmem:[%s1 + $0x10] sm:$0xff]
  %v68 = vld [vmem:[%s1 + $0x18] sm:$0xff]
  %v69 = vld [vmem:[%s1 + $0x20] sm:$0xff]
  %v70 = vld [vmem:[%s1 + $0x28] sm:$0xff]
  %v71 = vld [vmem:[%s1 + $0x30] sm:$0xff]
  %v72 = vld [vmem:[%s1 + $0x38] sm:$0xff]
  %v73 = vld [vmem:[%s1 + $0x40] sm:$0xff]
  %v74 = vld [vmem:[%s1 + $0x48] sm:$0xff]
  %v75 = vld [vmem:[%s1 + $0x50] sm:$0xff]
  %v76 = vld [vmem:[%s1 + $0x58] sm:$0xff]
  %v77 = vld [vmem:[%s1 + $0x60] sm:$0xff]
  %v78 = vld [vmem:[%s1 + $0x68] sm:$0xff]
  %v79 = vld [vmem:[%s1 + $0x70] sm:$0xff]
  %v80 = vld [vmem:[%s1 + $0x78] sm:$0xff]
  %v81 = vld [vmem:[%s1 + $0x80] sm:$0xff]
  %v82 = vld [vmem:[%s1 + $0x88] sm:$0xff]
  %v83 = vld [vmem:[%s1 + $0x90] sm:$0xff]
  %v84 = vld [vmem:[%s1 + $0x98] sm:$0xff]
  %v85 = vld [vmem:[%s1 + $0xa0] sm:$0xff]
  %v86 = vld [vmem:[%s1 + $0xa8] sm:$0xff]
  %v87 = vld [vmem:[%s1 + $0xb0] sm:$0xff]
  %v88 = vld [vmem:[%s1 + $0xb8] sm:$0xff]
  %v89 = vld [vmem:[%s1 + $0xc0] sm:$0xff]
  %v90 = vld [vmem:[%s1 + $0xc8] sm:$0xff]
  %v91 = vld [vmem:[%s1 + $0xd0] sm:$0xff]
  %v92 = vld [vmem:[%s1 + $0xd8] sm:$0xff]
  %v93 = vld [vmem:[%s1 + $0xe0] sm:$0xff]
  %v94 = vld [vmem:[%s1 + $0xe8] sm:$0xff]
  %v95 = vld [vmem:[%s1 + $0xf0] sm:$0xff]
  %v96 = vld [vmem:[%s1 + $0xf8] sm:$0xff]
  %v97 = vld [vmem:[%s1 + $0x100] sm:$0xff]
  %v98 = vld [vmem:[%s1 + $0x108] sm:$0xff]
  %v99 = vld [vmem:[%s1 + $0x110] sm:$0xff]
  %v100 = vld [vmem:[%s1 + $0x118] sm:$0xff]
  %v101 = vld [vmem:[%s1 + $0x120] sm:$0xff]
  %v102 = vld [vmem:[%s1 + $0x128] sm:$0xff]
  %v103 = vld [vmem:[%s1 + $0x130] sm:$0xff]
  %v104 = vld [vmem:[%s1 + $0x138] sm:$0xff]
  %v105 = vld [vmem:[%s1 + $0x140] sm:$0xff]
  %v106 = vld [vmem:[%s1 + $0x148] sm:$0xff]
  %v107 = vld [vmem:[%s1 + $0x150] sm:$0xff]
  %v108 = vld [vmem:[%s1 + $0x158] sm:$0xff]
  %v109 = vld [vmem:[%s1 + $0x160] sm:$0xff]
  %v110 = vld [vmem:[%s1 + $0x168] sm:$0xff]
  %v111 = vld [vmem:[%s1 + $0x170] sm:$0xff]
  %v112 = vld [vmem:[%s1 + $0x178] sm:$0xff]
  %113 = vmatprep.subr.mxu0 0.0
  %114 = vmatpush1.msra.mxu0 %v80
  %115 = vmatprep.subr.mxu0 0.0
  %116 = vmatpush1.msra.mxu0 %v79
  %117 = vmatprep.subr.mxu0 0.0
  %118 = vmatpush1.msra.mxu0 %v78
  %119 = vmatprep.subr.mxu0 0.0
  %120 = vmatpush1.msra.mxu0 %v77
  %121 = vmatprep.subr.mxu0 0.0
  %122 = vmatpush1.msra.mxu0 %v76
  %123 = vmatprep.subr.mxu0 0.0
  %124 = vmatpush1.msra.mxu0 %v75
  %125 = vmatprep.subr.mxu0 0.0
  %126 = vmatpush1.msra.mxu0 %v74
  %127 = vmatprep.subr.mxu0 0.0
  %128 = vmatpush1.msra.mxu0 %v73
  %129 = vmatprep.subr.mxu0 0.0
  %130 = vmatpush1.msra.mxu0 %v72
  %131 = vmatprep.subr.mxu0 0.0
  %132 = vmatpush1.msra.mxu0 %v71
  %133 = vmatprep.subr.mxu0 0.0
  %134 = vmatpush1.msra.mxu0 %v70
  %135 = vmatprep.subr.mxu0 0.0
  %136 = vmatpush1.msra.mxu0 %v69
  %137 = vmatprep.subr.mxu0 0.0
  %138 = vmatpush1.msra.mxu0 %v68
  %139 = vmatprep.subr.mxu0 0.0
  %140 = vmatpush1.msra.mxu0 %v67
  %141 = vmatprep.subr.mxu0 0.0
  %142 = vmatpush1.msra.mxu0 %v66
  %143 = vmatprep.subr.mxu0 0.0
  %144 = vmatpush1.msra.mxu0 %v65
  %145 = vmatprep.subr.mxu0 0.0
  %146 = vmatpush2.msra.mxu0 %v96
  %147 = vmatprep.subr.mxu0 0.0
  %148 = vmatpush2.msra.mxu0 %v95
  %149 = vmatprep.subr.mxu0 0.0
  %150 = vmatpush2.msra.mxu0 %v94
  %151 = vmatprep.subr.mxu0 0.0
  %152 = vmatpush2.msra.mxu0 %v93
  %153 = vmatprep.subr.mxu0 0.0
  %154 = vmatpush2.msra.mxu0 %v92
  %155 = vmatprep.subr.mxu0 0.0
  %156 = vmatpush2.msra.mxu0 %v91
  %157 = vmatprep.subr.mxu0 0.0
  %158 = vmatpush2.msra.mxu0 %v90
  %159 = vmatprep.subr.mxu0 0.0
  %160 = vmatpush2.msra.mxu0 %v89
  %161 = vmatprep.subr.mxu0 0.0
  %162 = vmatpush2.msra.mxu0 %v88
  %163 = vmatprep.subr.mxu0 0.0
  %164 = vmatpush2.msra.mxu0 %v87
  %165 = vmatprep.subr.mxu0 0.0
  %166 = vmatpush2.msra.mxu0 %v86
  %167 = vmatprep.subr.mxu0 0.0
  %168 = vmatpush2.msra.mxu0 %v85
  %169 = vmatprep.subr.mxu0 0.0
  %170 = vmatpush2.msra.mxu0 %v84
  %171 = vmatprep.subr.mxu0 0.0
  %172 = vmatpush2.msra.mxu0 %v83
  %173 = vmatprep.subr.mxu0 0.0
  %174 = vmatpush2.msra.mxu0 %v82
  %175 = vmatprep.subr.mxu0 0.0
  %176 = vmatpush2.msra.mxu0 %v81
  %177 = vmatprep.mubr.f32.mxu0 %v18
  %178 = vmatmul.mubr.f32.gmra.mxu0 %v17
  %v179 = vpop.f32.mrf.mxu0
  %v180 = vadd.f32 0.0, %v179
  %v181 = vpop.f32.mrf.mxu0
  %182 = vmatprep.mubr.f32.mxu0 %v21
  %183 = vmatmul.mubr.f32.gmra.mxu0 %v20
  %v184 = vpop.f32.mrf.mxu0
  %v185 = vadd.f32 0.0, %v184
  %v186 = vpop.f32.mrf.mxu0
  %187 = vmatprep.mubr.f32.mxu0 %v24
  %188 = vmatmul.mubr.f32.gmra.mxu0 %v23
  %v189 = vpop.f32.mrf.mxu0
  %v190 = vadd.f32 0.0, %v189
  %v191 = vpop.f32.mrf.mxu0
  %192 = vmatprep.mubr.f32.mxu0 %v27
  %193 = vmatmul.mubr.f32.gmra.mxu0 %v26
  %v194 = vpop.f32.mrf.mxu0
  %v195 = vadd.f32 0.0, %v194
  %v196 = vpop.f32.mrf.mxu0
  %197 = vmatprep.mubr.f32.mxu0 %v30
  %198 = vmatmul.mubr.f32.gmra.mxu0 %v29
  %v199 = vpop.f32.mrf.mxu0
  %v200 = vadd.f32 0.0, %v199
  %v201 = vpop.f32.mrf.mxu0
  %202 = vmatprep.mubr.f32.mxu0 %v33
  %203 = vmatmul.mubr.f32.gmra.mxu0 %v32
  %v204 = vpop.f32.mrf.mxu0
  %v205 = vadd.f32 0.0, %v204
  %v206 = vpop.f32.mrf.mxu0
  %207 = vmatprep.mubr.f32.mxu0 %v36
  %208 = vmatmul.mubr.f32.gmra.mxu0 %v35
  %v209 = vpop.f32.mrf.mxu0
  %v210 = vadd.f32 0.0, %v209
  %v211 = vpop.f32.mrf.mxu0
  %212 = vmatprep.mubr.f32.mxu0 %v39
  %213 = vmatmul.mubr.f32.gmra.mxu0 %v38
  %v214 = vpop.f32.mrf.mxu0
  %v215 = vadd.f32 0.0, %v214
  %v216 = vpop.f32.mrf.mxu0
  %217 = vmatprep.mubr.f32.mxu0 %v42
  %218 = vmatmul.mubr.f32.gmra.mxu0 %v41
  %v219 = vpop.f32.mrf.mxu0
  %v220 = vadd.f32 0.0, %v219
  %v221 = vpop.f32.mrf.mxu0
  %222 = vmatprep.mubr.f32.mxu0 %v45
  %223 = vmatmul.mubr.f32.gmra.mxu0 %v44
  %v224 = vpop.f32.mrf.mxu0
  %v225 = vadd.f32 0.0, %v224
  %v226 = vpop.f32.mrf.mxu0
  %227 = vmatprep.mubr.f32.mxu0 %v48
  %228 = vmatmul.mubr.f32.gmra.mxu0 %v47
  %v229 = vpop.f32.mrf.mxu0
  %v230 = vadd.f32 0.0, %v229
  %v231 = vpop.f32.mrf.mxu0
  %232 = vmatprep.mubr.f32.mxu0 %v51
  %233 = vmatmul.mubr.f32.gmra.mxu0 %v50
  %v234 = vpop.f32.mrf.mxu0
  %v235 = vadd.f32 0.0, %v234
  %v236 = vpop.f32.mrf.mxu0
  %237 = vmatprep.mubr.f32.mxu0 %v54
  %238 = vmatmul.mubr.f32.gmra.mxu0 %v53
  %v239 = vpop.f32.mrf.mxu0
  %v240 = vadd.f32 0.0, %v239
  %v241 = vpop.f32.mrf.mxu0
  %242 = vmatprep.mubr.f32.mxu0 %v57
  %243 = vmatmul.mubr.f32.gmra.mxu0 %v56
  %v244 = vpop.f32.mrf.mxu0
  %v245 = vadd.f32 0.0, %v244
  %v246 = vpop.f32.mrf.mxu0
  %247 = vmatprep.mubr.f32.mxu0 %v60
  %248 = vmatmul.mubr.f32.gmra.mxu0 %v59
  %v249 = vpop.f32.mrf.mxu0
  %v250 = vadd.f32 0.0, %v249
  %v251 = vpop.f32.mrf.mxu0
  %252 = vmatprep.mubr.f32.mxu0 %v63
  %253 = vmatmul.mubr.f32.gmra.mxu0 %v62
  %v254 = vpop.f32.mrf.mxu0
  %v255 = vadd.f32 0.0, %v254
  %v256 = vpop.f32.mrf.mxu0
  %257 = vdwg.mxu0
  %258 = vmatprep.subr.mxu0 0.0
  %259 = vmatpush1.msra.mxu0 %v112
  %260 = vmatprep.subr.mxu0 0.0
  %261 = vmatpush1.msra.mxu0 %v111
  %262 = vmatprep.subr.mxu0 0.0
  %263 = vmatpush1.msra.mxu0 %v110
  %264 = vmatprep.subr.mxu0 0.0
  %265 = vmatpush1.msra.mxu0 %v109
  %266 = vmatprep.subr.mxu0 0.0
  %267 = vmatpush1.msra.mxu0 %v108
  %268 = vmatprep.subr.mxu0 0.0
  %269 = vmatpush1.msra.mxu0 %v107
  %270 = vmatprep.subr.mxu0 0.0
  %271 = vmatpush1.msra.mxu0 %v106
  %272 = vmatprep.subr.mxu0 0.0
  %273 = vmatpush1.msra.mxu0 %v105
  %274 = vmatprep.subr.mxu0 0.0
  %275 = vmatpush1.msra.mxu0 %v104
  %276 = vmatprep.subr.mxu0 0.0
  %277 = vmatpush1.msra.mxu0 %v103
  %278 = vmatprep.subr.mxu0 0.0
  %279 = vmatpush1.msra.mxu0 %v102
  %280 = vmatprep.subr.mxu0 0.0
  %281 = vmatpush1.msra.mxu0 %v101
  %282 = vmatprep.subr.mxu0 0.0
  %283 = vmatpush1.msra.mxu0 %v100
  %284 = vmatprep.subr.mxu0 0.0
  %285 = vmatpush1.msra.mxu0 %v99
  %286 = vmatprep.subr.mxu0 0.0
  %287 = vmatpush1.msra.mxu0 %v98
  %288 = vmatprep.subr.mxu0 0.0
  %289 = vmatpush1.msra.mxu0 %v97
  %290 = vmatprep.subr.mxu0 0.0
  %291 = vmatpush2.msra.mxu0 0.0
  %292 = vmatprep.subr.mxu0 0.0
  %293 = vmatpush2.msra.mxu0 0.0
  %294 = vmatprep.subr.mxu0 0.0
  %295 = vmatpush2.msra.mxu0 0.0
  %296 = vmatprep.subr.mxu0 0.0
  %297 = vmatpush2.msra.mxu0 0.0
  %298 = vmatprep.subr.mxu0 0.0
  %299 = vmatpush2.msra.mxu0 0.0
  %300 = vmatprep.subr.mxu0 0.0
  %301 = vmatpush2.msra.mxu0 0.0
  %302 = vmatprep.subr.mxu0 0.0
  %303 = vmatpush2.msra.mxu0 0.0
  %304 = vmatprep.subr.mxu0 0.0
  %305 = vmatpush2.msra.mxu0 0.0
  %306 = vmatprep.subr.mxu0 0.0
  %307 = vmatpush2.msra.mxu0 0.0
  %308 = vmatprep.subr.mxu0 0.0
  %309 = vmatpush2.msra.mxu0 0.0
  %310 = vmatprep.subr.mxu0 0.0
  %311 = vmatpush2.msra.mxu0 0.0
  %312 = vmatprep.subr.mxu0 0.0
  %313 = vmatpush2.msra.mxu0 0.0
  %314 = vmatprep.subr.mxu0 0.0
  %315 = vmatpush2.msra.mxu0 0.0
  %316 = vmatprep.subr.mxu0 0.0
  %317 = vmatpush2.msra.mxu0 0.0
  %318 = vmatprep.subr.mxu0 0.0
  %319 = vmatpush2.msra.mxu0 0.0
  %320 = vmatprep.subr.mxu0 0.0
  %321 = vmatpush2.msra.mxu0 0.0
  %322 = vmatprep.mubr.f32.mxu0 0.0
  %323 = vmatmul.mubr.f32.gmra.mxu0 %v19
  %v324 = vpop.f32.mrf.mxu0
  %v325 = vadd.f32 %v180, %v324
  %v326 = vpop.f32.mrf.mxu0
  %327 = vmatprep.mubr.f32.mxu0 0.0
  %328 = vmatmul.mubr.f32.gmra.mxu0 %v22
  %v329 = vpop.f32.mrf.mxu0
  %v330 = vadd.f32 %v185, %v329
  %v331 = vpop.f32.mrf.mxu0
  %332 = vmatprep.mubr.f32.mxu0 0.0
  %333 = vmatmul.mubr.f32.gmra.mxu0 %v25
  %v334 = vpop.f32.mrf.mxu0
  %v335 = vadd.f32 %v190, %v334
  %v336 = vpop.f32.mrf.mxu0
  %337 = vmatprep.mubr.f32.mxu0 0.0
  %338 = vmatmul.mubr.f32.gmra.mxu0 %v28
  %v339 = vpop.f32.mrf.mxu0
  %v340 = vadd.f32 %v195, %v339
  %v341 = vpop.f32.mrf.mxu0
  %342 = vmatprep.mubr.f32.mxu0 0.0
  %343 = vmatmul.mubr.f32.gmra.mxu0 %v31
  %v344 = vpop.f32.mrf.mxu0
  %v345 = vadd.f32 %v200, %v344
  %v346 = vpop.f32.mrf.mxu0
  %347 = vmatprep.mubr.f32.mxu0 0.0
  %348 = vmatmul.mubr.f32.gmra.mxu0 %v34
  %v349 = vpop.f32.mrf.mxu0
  %v350 = vadd.f32 %v205, %v349
  %v351 = vpop.f32.mrf.mxu0
  %352 = vmatprep.mubr.f32.mxu0 0.0
  %353 = vmatmul.mubr.f32.gmra.mxu0 %v37
  %v354 = vpop.f32.mrf.mxu0
  %v355 = vadd.f32 %v210, %v354
  %v356 = vpop.f32.mrf.mxu0
  %357 = vmatprep.mubr.f32.mxu0 0.0
  %358 = vmatmul.mubr.f32.gmra.mxu0 %v40
  %v359 = vpop.f32.mrf.mxu0
  %v360 = vadd.f32 %v215, %v359
  %v361 = vpop.f32.mrf.mxu0
  %362 = vmatprep.mubr.f32.mxu0 0.0
  %363 = vmatmul.mubr.f32.gmra.mxu0 %v43
  %v364 = vpop.f32.mrf.mxu0
  %v365 = vadd.f32 %v220, %v364
  %v366 = vpop.f32.mrf.mxu0
  %367 = vmatprep.mubr.f32.mxu0 0.0
  %368 = vmatmul.mubr.f32.gmra.mxu0 %v46
  %v369 = vpop.f32.mrf.mxu0
  %v370 = vadd.f32 %v225, %v369
  %v371 = vpop.f32.mrf.mxu0
  %372 = vmatprep.mubr.f32.mxu0 0.0
  %373 = vmatmul.mubr.f32.gmra.mxu0 %v49
  %v374 = vpop.f32.mrf.mxu0
  %v375 = vadd.f32 %v230, %v374
  %v376 = vpop.f32.mrf.mxu0
  %377 = vmatprep.mubr.f32.mxu0 0.0
  %378 = vmatmul.mubr.f32.gmra.mxu0 %v52
  %v379 = vpop.f32.mrf.mxu0
  %v380 = vadd.f32 %v235, %v379
  %v381 = vpop.f32.mrf.mxu0
  %382 = vmatprep.mubr.f32.mxu0 0.0
  %383 = vmatmul.mubr.f32.gmra.mxu0 %v55
  %v384 = vpop.f32.mrf.mxu0
  %v385 = vadd.f32 %v240, %v384
  %v386 = vpop.f32.mrf.mxu0
  %387 = vmatprep.mubr.f32.mxu0 0.0
  %388 = vmatmul.mubr.f32.gmra.mxu0 %v58
  %v389 = vpop.f32.mrf.mxu0
  %v390 = vadd.f32 %v245, %v389
  %v391 = vpop.f32.mrf.mxu0
  %392 = vmatprep.mubr.f32.mxu0 0.0
  %393 = vmatmul.mubr.f32.gmra.mxu0 %v61
  %v394 = vpop.f32.mrf.mxu0
  %v395 = vadd.f32 %v250, %v394
  %v396 = vpop.f32.mrf.mxu0
  %397 = vmatprep.mubr.f32.mxu0 0.0
  %398 = vmatmul.mubr.f32.gmra.mxu0 %v64
  %v399 = vpop.f32.mrf.mxu0
  %v400 = vadd.f32 %v255, %v399
  %v401 = vpop.f32.mrf.mxu0
  %402 = vdwg.mxu0
  %vm403 = vcmask 523264
  %v404 = vsel %vm403, %v325, 0.0
  %v405 = vsel %vm403, %v330, 0.0
  %v406 = vadd.f32 %v404, %v405
  %v407 = vsel %vm403, %v335, 0.0
  %v408 = vadd.f32 %v406, %v407
  %v409 = vsel %vm403, %v340, 0.0
  %v410 = vadd.f32 %v408, %v409
  %v411 = vsel %vm403, %v345, 0.0
  %v412 = vadd.f32 %v410, %v411
  %v413 = vsel %vm403, %v350, 0.0
  %v414 = vadd.f32 %v412, %v413
  %v415 = vsel %vm403, %v355, 0.0
  %v416 = vadd.f32 %v414, %v415
  %v417 = vsel %vm403, %v360, 0.0
  %v418 = vadd.f32 %v416, %v417
  %v419 = vsel %vm403, %v365, 0.0
  %v420 = vadd.f32 %v418, %v419
  %v421 = vsel %vm403, %v370, 0.0
  %v422 = vadd.f32 %v420, %v421
  %v423 = vsel %vm403, %v375, 0.0
  %v424 = vadd.f32 %v422, %v423
  %v425 = vsel %vm403, %v380, 0.0
  %v426 = vadd.f32 %v424, %v425
  %v427 = vsel %vm403, %v385, 0.0
  %v428 = vadd.f32 %v426, %v427
  %v429 = vsel %vm403, %v390, 0.0
  %v430 = vadd.f32 %v428, %v429
  %v431 = vsel %vm403, %v395, 0.0
  %v432 = vadd.f32 %v430, %v431
  %v433 = vsel %vm403, %v400, 0.0
  %v434 = vadd.f32 %v432, %v433
  %v435 = vrot.slane %v434, 4
  %v436 = vadd.f32 %v434, %v435
  %v437 = vrot.slane %v436, 2
  %v438 = vadd.f32 %v436, %v437
  %v439 = vrot.slane %v438, 1
  %v440 = vadd.f32 %v438, %v439
  %442 = vrot.lane.b32.xlu0 %v440, 112
  %v443 = vpop.permute.xlu0 %442
  %v445 = vadd.f32 %v440, %v443
  %446 = vrot.lane.b32.xlu0 %v440, 96
  %v447 = vpop.permute.xlu0 %446
  %v449 = vadd.f32 %v445, %v447
  %450 = vrot.lane.b32.xlu0 %v440, 80
  %v451 = vpop.permute.xlu0 %450
  %v453 = vadd.f32 %v449, %v451
  %v454 = vmul.f32 %v453, 0.001953125
  %456 = vrot.lane.b32.xlu0 %v454, 16
  %v457 = vpop.permute.xlu0 %456
  %459 = vrot.lane.b32.xlu0 %v454, 32
  %v460 = vpop.permute.xlu0 %459
  %462 = vrot.lane.b32.xlu0 %v454, 48
  %v463 = vpop.permute.xlu0 %462
  %vm465 = vcmask 130048
  %v466 = vsel %vm465, %v454, %v457
  %vm467 = vcmask 261120
  %v468 = vsel %vm467, %v466, %v460
  %vm469 = vcmask 392192
  %v470 = vsel %vm469, %v468, %v463
  %v471 = vlaneseq
  %v472 = vshrl.u32 %v471, 7
  %v473 = vadd.s32 %v472, 8
  %v474 = vadd.s32 %v472, 16
  %v475 = vadd.s32 %v472, 24
  %v476 = vadd.s32 %v472, 32
  %v477 = vadd.s32 %v472, 40
  %v478 = vadd.s32 %v472, 48
  %v479 = vadd.s32 %v472, 56
  %v480 = vadd.s32 %v472, 64
  %v481 = vadd.s32 %v472, 72
  %v482 = vadd.s32 %v472, 80
  %v483 = vadd.s32 %v472, 88
  %v484 = vadd.s32 %v472, 96
  %v485 = vadd.s32 %v472, 104
  %v486 = vadd.s32 %v472, 112
  %v487 = vadd.s32 %v472, 120
  %vm488 = vcmp.lt.s32.totalorder %v472, 128
  %vm489 = vcmp.lt.s32.totalorder %v473, 128
  %vm490 = vcmp.lt.s32.totalorder %v474, 128
  %vm491 = vcmp.lt.s32.totalorder %v475, 128
  %vm492 = vcmp.lt.s32.totalorder %v476, 128
  %vm493 = vcmp.lt.s32.totalorder %v477, 128
  %vm494 = vcmp.lt.s32.totalorder %v478, 128
  %vm495 = vcmp.lt.s32.totalorder %v479, 128
  %vm496 = vcmp.lt.s32.totalorder %v480, 128
  %vm497 = vcmp.lt.s32.totalorder %v481, 128
  %vm498 = vcmp.lt.s32.totalorder %v482, 128
  %vm499 = vcmp.lt.s32.totalorder %v483, 128
  %vm500 = vcmp.lt.s32.totalorder %v484, 128
  %vm501 = vcmp.lt.s32.totalorder %v485, 128
  %vm502 = vcmp.lt.s32.totalorder %v486, 128
  %vm503 = vcmp.lt.s32.totalorder %v487, 128
  %v504 = vlaneseq
  %v505 = vshrl.u32 %v504, 7
  %v506 = vsub.s32 0, %v505
  %v507 = vrot.slane %v470, %v506
  %v508 = vsub.f32 %v325, %v507
  %v509 = vsub.f32 %v330, %v507
  %v510 = vsub.f32 %v335, %v507
  %v511 = vsub.f32 %v340, %v507
  %v512 = vsub.f32 %v345, %v507
  %v513 = vsub.f32 %v350, %v507
  %v514 = vsub.f32 %v355, %v507
  %v515 = vsub.f32 %v360, %v507
  %v516 = vsub.f32 %v365, %v507
  %v517 = vsub.f32 %v370, %v507
  %v518 = vsub.f32 %v375, %v507
  %v519 = vsub.f32 %v380, %v507
  %v520 = vsub.f32 %v385, %v507
  %v521 = vsub.f32 %v390, %v507
  %v522 = vsub.f32 %v395, %v507
  %v523 = vsub.f32 %v400, %v507
  %v524 = vsel %vm488, 1, 0
  %v525 = vsel %vm489, 1, 0
  %v526 = vsel %vm490, 1, 0
  %v527 = vsel %vm491, 1, 0
  %v528 = vsel %vm492, 1, 0
  %v529 = vsel %vm493, 1, 0
  %v530 = vsel %vm494, 1, 0
  %v531 = vsel %vm495, 1, 0
  %v532 = vsel %vm496, 1, 0
  %v533 = vsel %vm497, 1, 0
  %v534 = vsel %vm498, 1, 0
  %v535 = vsel %vm499, 1, 0
  %v536 = vsel %vm500, 1, 0
  %v537 = vsel %vm501, 1, 0
  %v538 = vsel %vm502, 1, 0
  %v539 = vsel %vm503, 1, 0
  %vm540 = vcmp.eq.s32.totalorder %v524, 1
  %vm541 = vcmp.eq.s32.totalorder %v525, 1
  %vm542 = vcmp.eq.s32.totalorder %v526, 1
  %vm543 = vcmp.eq.s32.totalorder %v527, 1
  %vm544 = vcmp.eq.s32.totalorder %v528, 1
  %vm545 = vcmp.eq.s32.totalorder %v529, 1
  %vm546 = vcmp.eq.s32.totalorder %v530, 1
  %vm547 = vcmp.eq.s32.totalorder %v531, 1
  %vm548 = vcmp.eq.s32.totalorder %v532, 1
  %vm549 = vcmp.eq.s32.totalorder %v533, 1
  %vm550 = vcmp.eq.s32.totalorder %v534, 1
  %vm551 = vcmp.eq.s32.totalorder %v535, 1
  %vm552 = vcmp.eq.s32.totalorder %v536, 1
  %vm553 = vcmp.eq.s32.totalorder %v537, 1
  %vm554 = vcmp.eq.s32.totalorder %v538, 1
  %vm555 = vcmp.eq.s32.totalorder %v539, 1
  %v556 = vsel %vm540, %v508, 0.0
  %v557 = vsel %vm541, %v509, 0.0
  %v558 = vsel %vm542, %v510, 0.0
  %v559 = vsel %vm543, %v511, 0.0
  %v560 = vsel %vm544, %v512, 0.0
  %v561 = vsel %vm545, %v513, 0.0
  %v562 = vsel %vm546, %v514, 0.0
  %v563 = vsel %vm547, %v515, 0.0
  %v564 = vsel %vm548, %v516, 0.0
  %v565 = vsel %vm549, %v517, 0.0
  %v566 = vsel %vm550, %v518, 0.0
  %v567 = vsel %vm551, %v519, 0.0
  %v568 = vsel %vm552, %v520, 0.0
  %v569 = vsel %vm553, %v521, 0.0
  %v570 = vsel %vm554, %v522, 0.0
  %v571 = vsel %vm555, %v523, 0.0
  %v572 = vmul.f32 %v556, %v556
  %v573 = vmul.f32 %v557, %v557
  %v574 = vmul.f32 %v558, %v558
  %v575 = vmul.f32 %v559, %v559
  %v576 = vmul.f32 %v560, %v560
  %v577 = vmul.f32 %v561, %v561
  %v578 = vmul.f32 %v562, %v562
  %v579 = vmul.f32 %v563, %v563
  %v580 = vmul.f32 %v564, %v564
  %v581 = vmul.f32 %v565, %v565
  %v582 = vmul.f32 %v566, %v566
  %v583 = vmul.f32 %v567, %v567
  %v584 = vmul.f32 %v568, %v568
  %v585 = vmul.f32 %v569, %v569
  %v586 = vmul.f32 %v570, %v570
  %v587 = vmul.f32 %v571, %v571
  %v588 = vsel %vm403, %v572, 0.0
  %v589 = vsel %vm403, %v573, 0.0
  %v590 = vadd.f32 %v588, %v589
  %v591 = vsel %vm403, %v574, 0.0
  %v592 = vadd.f32 %v590, %v591
  %v593 = vsel %vm403, %v575, 0.0
  %v594 = vadd.f32 %v592, %v593
  %v595 = vsel %vm403, %v576, 0.0
  %v596 = vadd.f32 %v594, %v595
  %v597 = vsel %vm403, %v577, 0.0
  %v598 = vadd.f32 %v596, %v597
  %v599 = vsel %vm403, %v578, 0.0
  %v600 = vadd.f32 %v598, %v599
  %v601 = vsel %vm403, %v579, 0.0
  %v602 = vadd.f32 %v600, %v601
  %v603 = vsel %vm403, %v580, 0.0
  %v604 = vadd.f32 %v602, %v603
  %v605 = vsel %vm403, %v581, 0.0
  %v606 = vadd.f32 %v604, %v605
  %v607 = vsel %vm403, %v582, 0.0
  %v608 = vadd.f32 %v606, %v607
  %v609 = vsel %vm403, %v583, 0.0
  %v610 = vadd.f32 %v608, %v609
  %v611 = vsel %vm403, %v584, 0.0
  %v612 = vadd.f32 %v610, %v611
  %v613 = vsel %vm403, %v585, 0.0
  %v614 = vadd.f32 %v612, %v613
  %v615 = vsel %vm403, %v586, 0.0
  %v616 = vadd.f32 %v614, %v615
  %v617 = vsel %vm403, %v587, 0.0
  %v618 = vadd.f32 %v616, %v617
  %v619 = vrot.slane %v618, 4
  %v620 = vadd.f32 %v618, %v619
  %v621 = vrot.slane %v620, 2
  %v622 = vadd.f32 %v620, %v621
  %v623 = vrot.slane %v622, 1
  %v624 = vadd.f32 %v622, %v623
  %626 = vrot.lane.b32.xlu0 %v624, 112
  %v627 = vpop.permute.xlu0 %626
  %v629 = vadd.f32 %v624, %v627
  %630 = vrot.lane.b32.xlu0 %v624, 96
  %v631 = vpop.permute.xlu0 %630
  %v633 = vadd.f32 %v629, %v631
  %634 = vrot.lane.b32.xlu0 %v624, 80
  %v635 = vpop.permute.xlu0 %634
  %v637 = vadd.f32 %v633, %v635
  %v638 = vmul.f32 %v637, 0.001953125
  %v639 = vld [vmem:[%s2] sm:$0x1]
  %v640 = vadd.f32 %v638, 1e-05
  %v641 = vrsqrt.pop %v640
  %v642 = vmul.f32 %v639, %v641
  %v643 = vld [vmem:[%s3] sm:$0x1]
  %v644 = vmul.f32 %v454, %v642
  %v645 = vsub.f32 %v643, %v644
  %v647 = vlaneseq
  %v648 = vshrl.u32 %v647, 7
  %v649 = vsub.s32 0, %v648
  %v650 = vrot.slane %v642, %v649
  %651 = vrot.lane.b32.xlu0 %v650, 16
  %v652 = vpop.permute.xlu0 %651
  %654 = vrot.lane.b32.xlu0 %v650, 32
  %v655 = vpop.permute.xlu0 %654
  %657 = vrot.lane.b32.xlu0 %v650, 48
  %v658 = vpop.permute.xlu0 %657
  %v660 = vsel %vm465, %v642, %v652
  %v661 = vsel %vm467, %v660, %v655
  %v662 = vsel %vm469, %v661, %v658
  %v664 = vlaneseq
  %v665 = vshrl.u32 %v664, 7
  %v666 = vsub.s32 0, %v665
  %v667 = vrot.slane %v645, %v666
  %668 = vrot.lane.b32.xlu0 %v667, 16
  %v669 = vpop.permute.xlu0 %668
  %671 = vrot.lane.b32.xlu0 %v667, 32
  %v672 = vpop.permute.xlu0 %671
  %674 = vrot.lane.b32.xlu0 %v667, 48
  %v675 = vpop.permute.xlu0 %674
  %v677 = vsel %vm465, %v645, %v669
  %v678 = vsel %vm467, %v677, %v672
  %v679 = vsel %vm469, %v678, %v675
  %v680 = vlaneseq
  %v681 = vshrl.u32 %v680, 7
  %v682 = vsub.s32 0, %v681
  %v683 = vrot.slane %v662, %v682
  %v684 = vmul.f32 %v325, %v683
  %v685 = vmul.f32 %v330, %v683
  %v686 = vmul.f32 %v335, %v683
  %v687 = vmul.f32 %v340, %v683
  %v688 = vmul.f32 %v345, %v683
  %v689 = vmul.f32 %v350, %v683
  %v690 = vmul.f32 %v355, %v683
  %v691 = vmul.f32 %v360, %v683
  %v692 = vmul.f32 %v365, %v683
  %v693 = vmul.f32 %v370, %v683
  %v694 = vmul.f32 %v375, %v683
  %v695 = vmul.f32 %v380, %v683
  %v696 = vmul.f32 %v385, %v683
  %v697 = vmul.f32 %v390, %v683
  %v698 = vmul.f32 %v395, %v683
  %v699 = vmul.f32 %v400, %v683
  %v700 = vlaneseq
  %v701 = vshrl.u32 %v700, 7
  %v702 = vsub.s32 0, %v701
  %v703 = vrot.slane %v679, %v702
  %v704 = vadd.f32 %v684, %v703
  %v705 = vadd.f32 %v685, %v703
  %v706 = vadd.f32 %v686, %v703
  %v707 = vadd.f32 %v687, %v703
  %v708 = vadd.f32 %v688, %v703
  %v709 = vadd.f32 %v689, %v703
  %v710 = vadd.f32 %v690, %v703
  %v711 = vadd.f32 %v691, %v703
  %v712 = vadd.f32 %v692, %v703
  %v713 = vadd.f32 %v693, %v703
  %v714 = vadd.f32 %v694, %v703
  %v715 = vadd.f32 %v695, %v703
  %v716 = vadd.f32 %v696, %v703
  %v717 = vadd.f32 %v697, %v703
  %v718 = vadd.f32 %v698, %v703
  %v719 = vadd.f32 %v699, %v703
  %v720 = vmax.f32 %v704, 0.0
  %v721 = vmax.f32 %v705, 0.0
  %v722 = vmax.f32 %v706, 0.0
  %v723 = vmax.f32 %v707, 0.0
  %v724 = vmax.f32 %v708, 0.0
  %v725 = vmax.f32 %v709, 0.0
  %v726 = vmax.f32 %v710, 0.0
  %v727 = vmax.f32 %v711, 0.0
  %v728 = vmax.f32 %v712, 0.0
  %v729 = vmax.f32 %v713, 0.0
  %v730 = vmax.f32 %v714, 0.0
  %v731 = vmax.f32 %v715, 0.0
  %v732 = vmax.f32 %v716, 0.0
  %v733 = vmax.f32 %v717, 0.0
  %v734 = vmax.f32 %v718, 0.0
  %v735 = vmax.f32 %v719, 0.0
  %736 = vst.msk [vmem:[%s4] sm:$0xff] %vm403, %v720
  %737 = vst.msk [vmem:[%s4 + $0x8] sm:$0xff] %vm403, %v721
  %738 = vst.msk [vmem:[%s4 + $0x10] sm:$0xff] %vm403, %v722
  %739 = vst.msk [vmem:[%s4 + $0x18] sm:$0xff] %vm403, %v723
  %740 = vst.msk [vmem:[%s4 + $0x20] sm:$0xff] %vm403, %v724
  %741 = vst.msk [vmem:[%s4 + $0x28] sm:$0xff] %vm403, %v725
  %742 = vst.msk [vmem:[%s4 + $0x30] sm:$0xff] %vm403, %v726
  %743 = vst.msk [vmem:[%s4 + $0x38] sm:$0xff] %vm403, %v727
  %744 = vst.msk [vmem:[%s4 + $0x40] sm:$0xff] %vm403, %v728
  %745 = vst.msk [vmem:[%s4 + $0x48] sm:$0xff] %vm403, %v729
  %746 = vst.msk [vmem:[%s4 + $0x50] sm:$0xff] %vm403, %v730
  %747 = vst.msk [vmem:[%s4 + $0x58] sm:$0xff] %vm403, %v731
  %748 = vst.msk [vmem:[%s4 + $0x60] sm:$0xff] %vm403, %v732
  %749 = vst.msk [vmem:[%s4 + $0x68] sm:$0xff] %vm403, %v733
  %750 = vst.msk [vmem:[%s4 + $0x70] sm:$0xff] %vm403, %v734
  %751 = vst.msk [vmem:[%s4 + $0x78] sm:$0xff] %vm403, %v735
  // Predicated region
  $region18: #{generator_forward.7} parent=0 // pred_check
    _
  $region19: #{generator_forward.7} parent=0 // pred_check_branch
    %753 = sbr.rel (0) target = $region21
  $region20: #{generator_forward.7} parent=0 // pred_region
    _
  $region21: #{generator_forward.7} parent=0 // pred_fallthru
    _
  // Predicated region
  $region22: #{generator_forward.7} parent=0 // pred_check
    _
  $region23: #{generator_forward.7} parent=0 // pred_check_branch
    %755 = sbr.rel (0) target = $region25
  $region24: #{generator_forward.7} parent=0 // pred_region
    _
  $region25: #{generator_forward.7} parent=0 // pred_fallthru
    _

// kernel: generator_forward.8
$region0: #{generator_forward.8}
  #allocation0 [shape = 'u32[]', space=smem, size = 0x4, offset = 0x4, fixed_abs, tag = 'smem constant byte address 0x4 - core index']
  #allocation1 [shape = 'u32[144,128]{1,0:T(1,128)}', space=vmem, size = 0x12000, scoped, tag = 'internal scratch']
  %s0 = inlined_call_operand.vmem [shape: f32[512,256], index: 0, kind: input, shape index: {}]
  %s1 = inlined_call_operand.vmem [shape: f32[256,32], index: 1, kind: input, shape index: {}]
  %s2 = inlined_call_operand.vmem [shape: f32[1,8], index: 2, kind: input, shape index: {}]
  %s3 = inlined_call_operand.vmem [shape: f32[1,8], index: 3, kind: input, shape index: {}]
  %s4 = inlined_call_operand.vmem [shape: f32[512,32], index: 4, kind: output, shape index: {}]
  %s5 = sld [smem:[#allocation0]]
  $region26: #{generator_forward.8} parent=0
    _
  %s7 = ssub.s32 1, %s5
  %s8 = scalar_select 0, %s7, %s5
  // Predicated region
  $region2: #{generator_forward.8} parent=0 // pred_check
    _
  $region3: #{generator_forward.8} parent=0 // pred_check_branch
    %10 = sbr.rel (0) target = $region5
  $region4: #{generator_forward.8} parent=0 // pred_region
    _
  $region5: #{generator_forward.8} parent=0 // pred_fallthru
    _
  // Predicated region
  $region6: #{generator_forward.8} parent=0 // pred_check
    _
  $region7: #{generator_forward.8} parent=0 // pred_check_branch
    %12 = sbr.rel (0) target = $region9
  $region8: #{generator_forward.8} parent=0 // pred_region
    _
  $region9: #{generator_forward.8} parent=0 // pred_fallthru
    _
  // Predicated region
  $region10: #{generator_forward.8} parent=0 // pred_check
    _
  $region11: #{generator_forward.8} parent=0 // pred_check_branch
    %14 = sbr.rel (0) target = $region13
  $region12: #{generator_forward.8} parent=0 // pred_region
    _
  $region13: #{generator_forward.8} parent=0 // pred_fallthru
    _
  // Predicated region
  $region14: #{generator_forward.8} parent=0 // pred_check
    _
  $region15: #{generator_forward.8} parent=0 // pred_check_branch
    %16 = sbr.rel (0) target = $region17
  $region16: #{generator_forward.8} parent=0 // pred_region
    _
  $region17: #{generator_forward.8} parent=0 // pred_fallthru
    _
  %v17 = vld [vmem:[%s0] sm:$0xff]
  %v18 = vld [vmem:[%s0 + $0x8] sm:$0xff]
  %v19 = vld [vmem:[%s0 + $0x10] sm:$0xff]
  %v20 = vld [vmem:[%s0 + $0x18] sm:$0xff]
  %v21 = vld [vmem:[%s0 + $0x20] sm:$0xff]
  %v22 = vld [vmem:[%s0 + $0x28] sm:$0xff]
  %v23 = vld [vmem:[%s0 + $0x30] sm:$0xff]
  %v24 = vld [vmem:[%s0 + $0x38] sm:$0xff]
  %v25 = vld [vmem:[%s0 + $0x40] sm:$0xff]
  %v26 = vld [vmem:[%s0 + $0x48] sm:$0xff]
  %v27 = vld [vmem:[%s0 + $0x50] sm:$0xff]
  %v28 = vld [vmem:[%s0 + $0x58] sm:$0xff]
  %v29 = vld [vmem:[%s0 + $0x60] sm:$0xff]
  %v30 = vld [vmem:[%s0 + $0x68] sm:$0xff]
  %v31 = vld [vmem:[%s0 + $0x70] sm:$0xff]
  %v32 = vld [vmem:[%s0 + $0x78] sm:$0xff]
  %v33 = vld [vmem:[%s0 + $0x80] sm:$0xff]
  %v34 = vld [vmem:[%s0 + $0x88] sm:$0xff]
  %v35 = vld [vmem:[%s0 + $0x90] sm:$0xff]
  %v36 = vld [vmem:[%s0 + $0x98] sm:$0xff]
  %v37 = vld [vmem:[%s0 + $0xa0] sm:$0xff]
  %v38 = vld [vmem:[%s0 + $0xa8] sm:$0xff]
  %v39 = vld [vmem:[%s0 + $0xb0] sm:$0xff]
  %v40 = vld [vmem:[%s0 + $0xb8] sm:$0xff]
  %v41 = vld [vmem:[%s0 + $0xc0] sm:$0xff]
  %v42 = vld [vmem:[%s0 + $0xc8] sm:$0xff]
  %v43 = vld [vmem:[%s0 + $0xd0] sm:$0xff]
  %v44 = vld [vmem:[%s0 + $0xd8] sm:$0xff]
  %v45 = vld [vmem:[%s0 + $0xe0] sm:$0xff]
  %v46 = vld [vmem:[%s0 + $0xe8] sm:$0xff]
  %v47 = vld [vmem:[%s0 + $0xf0] sm:$0xff]
  %v48 = vld [vmem:[%s0 + $0xf8] sm:$0xff]
  %v49 = vld [vmem:[%s0 + $0x100] sm:$0xff]
  %v50 = vld [vmem:[%s0 + $0x108] sm:$0xff]
  %v51 = vld [vmem:[%s0 + $0x110] sm:$0xff]
  %v52 = vld [vmem:[%s0 + $0x118] sm:$0xff]
  %v53 = vld [vmem:[%s0 + $0x120] sm:$0xff]
  %v54 = vld [vmem:[%s0 + $0x128] sm:$0xff]
  %v55 = vld [vmem:[%s0 + $0x130] sm:$0xff]
  %v56 = vld [vmem:[%s0 + $0x138] sm:$0xff]
  %v57 = vld [vmem:[%s0 + $0x140] sm:$0xff]
  %v58 = vld [vmem:[%s0 + $0x148] sm:$0xff]
  %v59 = vld [vmem:[%s0 + $0x150] sm:$0xff]
  %v60 = vld [vmem:[%s0 + $0x158] sm:$0xff]
  %v61 = vld [vmem:[%s0 + $0x160] sm:$0xff]
  %v62 = vld [vmem:[%s0 + $0x168] sm:$0xff]
  %v63 = vld [vmem:[%s0 + $0x170] sm:$0xff]
  %v64 = vld [vmem:[%s0 + $0x178] sm:$0xff]
  %v65 = vld [vmem:[%s0 + $0x180] sm:$0xff]
  %v66 = vld [vmem:[%s0 + $0x188] sm:$0xff]
  %v67 = vld [vmem:[%s0 + $0x190] sm:$0xff]
  %v68 = vld [vmem:[%s0 + $0x198] sm:$0xff]
  %v69 = vld [vmem:[%s0 + $0x1a0] sm:$0xff]
  %v70 = vld [vmem:[%s0 + $0x1a8] sm:$0xff]
  %v71 = vld [vmem:[%s0 + $0x1b0] sm:$0xff]
  %v72 = vld [vmem:[%s0 + $0x1b8] sm:$0xff]
  %v73 = vld [vmem:[%s0 + $0x1c0] sm:$0xff]
  %v74 = vld [vmem:[%s0 + $0x1c8] sm:$0xff]
  %v75 = vld [vmem:[%s0 + $0x1d0] sm:$0xff]
  %v76 = vld [vmem:[%s0 + $0x1d8] sm:$0xff]
  %v77 = vld [vmem:[%s0 + $0x1e0] sm:$0xff]
  %v78 = vld [vmem:[%s0 + $0x1e8] sm:$0xff]
  %v79 = vld [vmem:[%s0 + $0x1f0] sm:$0xff]
  %v80 = vld [vmem:[%s0 + $0x1f8] sm:$0xff]
  %v81 = vld [vmem:[%s0 + $0x200] sm:$0xff]
  %v82 = vld [vmem:[%s0 + $0x208] sm:$0xff]
  %v83 = vld [vmem:[%s0 + $0x210] sm:$0xff]
  %v84 = vld [vmem:[%s0 + $0x218] sm:$0xff]
  %v85 = vld [vmem:[%s0 + $0x220] sm:$0xff]
  %v86 = vld [vmem:[%s0 + $0x228] sm:$0xff]
  %v87 = vld [vmem:[%s0 + $0x230] sm:$0xff]
  %v88 = vld [vmem:[%s0 + $0x238] sm:$0xff]
  %v89 = vld [vmem:[%s0 + $0x240] sm:$0xff]
  %v90 = vld [vmem:[%s0 + $0x248] sm:$0xff]
  %v91 = vld [vmem:[%s0 + $0x250] sm:$0xff]
  %v92 = vld [vmem:[%s0 + $0x258] sm:$0xff]
  %v93 = vld [vmem:[%s0 + $0x260] sm:$0xff]
  %v94 = vld [vmem:[%s0 + $0x268] sm:$0xff]
  %v95 = vld [vmem:[%s0 + $0x270] sm:$0xff]
  %v96 = vld [vmem:[%s0 + $0x278] sm:$0xff]
  %v97 = vld [vmem:[%s0 + $0x280] sm:$0xff]
  %v98 = vld [vmem:[%s0 + $0x288] sm:$0xff]
  %v99 = vld [vmem:[%s0 + $0x290] sm:$0xff]
  %v100 = vld [vmem:[%s0 + $0x298] sm:$0xff]
  %v101 = vld [vmem:[%s0 + $0x2a0] sm:$0xff]
  %v102 = vld [vmem:[%s0 + $0x2a8] sm:$0xff]
  %v103 = vld [vmem:[%s0 + $0x2b0] sm:$0xff]
  %v104 = vld [vmem:[%s0 + $0x2b8] sm:$0xff]
  %v105 = vld [vmem:[%s0 + $0x2c0] sm:$0xff]
  %v106 = vld [vmem:[%s0 + $0x2c8] sm:$0xff]
  %v107 = vld [vmem:[%s0 + $0x2d0] sm:$0xff]
  %v108 = vld [vmem:[%s0 + $0x2d8] sm:$0xff]
  %v109 = vld [vmem:[%s0 + $0x2e0] sm:$0xff]
  %v110 = vld [vmem:[%s0 + $0x2e8] sm:$0xff]
  %v111 = vld [vmem:[%s0 + $0x2f0] sm:$0xff]
  %v112 = vld [vmem:[%s0 + $0x2f8] sm:$0xff]
  %v113 = vld [vmem:[%s0 + $0x300] sm:$0xff]
  %v114 = vld [vmem:[%s0 + $0x308] sm:$0xff]
  %v115 = vld [vmem:[%s0 + $0x310] sm:$0xff]
  %v116 = vld [vmem:[%s0 + $0x318] sm:$0xff]
  %v117 = vld [vmem:[%s0 + $0x320] sm:$0xff]
  %v118 = vld [vmem:[%s0 + $0x328] sm:$0xff]
  %v119 = vld [vmem:[%s0 + $0x330] sm:$0xff]
  %v120 = vld [vmem:[%s0 + $0x338] sm:$0xff]
  %v121 = vld [vmem:[%s0 + $0x340] sm:$0xff]
  %v122 = vld [vmem:[%s0 + $0x348] sm:$0xff]
  %v123 = vld [vmem:[%s0 + $0x350] sm:$0xff]
  %v124 = vld [vmem:[%s0 + $0x358] sm:$0xff]
  %v125 = vld [vmem:[%s0 + $0x360] sm:$0xff]
  %v126 = vld [vmem:[%s0 + $0x368] sm:$0xff]
  %v127 = vld [vmem:[%s0 + $0x370] sm:$0xff]
  %v128 = vld [vmem:[%s0 + $0x378] sm:$0xff]
  %v129 = vld [vmem:[%s0 + $0x380] sm:$0xff]
  %v130 = vld [vmem:[%s0 + $0x388] sm:$0xff]
  %v131 = vld [vmem:[%s0 + $0x390] sm:$0xff]
  %v132 = vld [vmem:[%s0 + $0x398] sm:$0xff]
  %v133 = vld [vmem:[%s0 + $0x3a0] sm:$0xff]
  %v134 = vld [vmem:[%s0 + $0x3a8] sm:$0xff]
  %v135 = vld [vmem:[%s0 + $0x3b0] sm:$0xff]
  %v136 = vld [vmem:[%s0 + $0x3b8] sm:$0xff]
  %v137 = vld [vmem:[%s0 + $0x3c0] sm:$0xff]
  %v138 = vld [vmem:[%s0 + $0x3c8] sm:$0xff]
  %v139 = vld [vmem:[%s0 + $0x3d0] sm:$0xff]
  %v140 = vld [vmem:[%s0 + $0x3d8] sm:$0xff]
  %v141 = vld [vmem:[%s0 + $0x3e0] sm:$0xff]
  %v142 = vld [vmem:[%s0 + $0x3e8] sm:$0xff]
  %v143 = vld [vmem:[%s0 + $0x3f0] sm:$0xff]
  %v144 = vld [vmem:[%s0 + $0x3f8] sm:$0xff]
  %v145 = vld [vmem:[%s1] sm:$0xff]
  %v146 = vld [vmem:[%s1 + $0x8] sm:$0xff]
  %v147 = vld [vmem:[%s1 + $0x10] sm:$0xff]
  %v148 = vld [vmem:[%s1 + $0x18] sm:$0xff]
  %v149 = vld [vmem:[%s1 + $0x20] sm:$0xff]
  %v150 = vld [vmem:[%s1 + $0x28] sm:$0xff]
  %v151 = vld [vmem:[%s1 + $0x30] sm:$0xff]
  %v152 = vld [vmem:[%s1 + $0x38] sm:$0xff]
  %v153 = vld [vmem:[%s1 + $0x40] sm:$0xff]
  %v154 = vld [vmem:[%s1 + $0x48] sm:$0xff]
  %v155 = vld [vmem:[%s1 + $0x50] sm:$0xff]
  %v156 = vld [vmem:[%s1 + $0x58] sm:$0xff]
  %v157 = vld [vmem:[%s1 + $0x60] sm:$0xff]
  %v158 = vld [vmem:[%s1 + $0x68] sm:$0xff]
  %v159 = vld [vmem:[%s1 + $0x70] sm:$0xff]
  %v160 = vld [vmem:[%s1 + $0x78] sm:$0xff]
  %v161 = vld [vmem:[%s1 + $0x80] sm:$0xff]
  %v162 = vld [vmem:[%s1 + $0x88] sm:$0xff]
  %v163 = vld [vmem:[%s1 + $0x90] sm:$0xff]
  %v164 = vld [vmem:[%s1 + $0x98] sm:$0xff]
  %v165 = vld [vmem:[%s1 + $0xa0] sm:$0xff]
  %v166 = vld [vmem:[%s1 + $0xa8] sm:$0xff]
  %v167 = vld [vmem:[%s1 + $0xb0] sm:$0xff]
  %v168 = vld [vmem:[%s1 + $0xb8] sm:$0xff]
  %v169 = vld [vmem:[%s1 + $0xc0] sm:$0xff]
  %v170 = vld [vmem:[%s1 + $0xc8] sm:$0xff]
  %v171 = vld [vmem:[%s1 + $0xd0] sm:$0xff]
  %v172 = vld [vmem:[%s1 + $0xd8] sm:$0xff]
  %v173 = vld [vmem:[%s1 + $0xe0] sm:$0xff]
  %v174 = vld [vmem:[%s1 + $0xe8] sm:$0xff]
  %v175 = vld [vmem:[%s1 + $0xf0] sm:$0xff]
  %v176 = vld [vmem:[%s1 + $0xf8] sm:$0xff]
  %177 = vmatprep.subr.mxu0 0.0
  %178 = vmatpush1.msra.mxu0 %v160
  %179 = vmatprep.subr.mxu0 0.0
  %180 = vmatpush1.msra.mxu0 %v159
  %181 = vmatprep.subr.mxu0 0.0
  %182 = vmatpush1.msra.mxu0 %v158
  %183 = vmatprep.subr.mxu0 0.0
  %184 = vmatpush1.msra.mxu0 %v157
  %185 = vmatprep.subr.mxu0 0.0
  %186 = vmatpush1.msra.mxu0 %v156
  %187 = vmatprep.subr.mxu0 0.0
  %188 = vmatpush1.msra.mxu0 %v155
  %189 = vmatprep.subr.mxu0 0.0
  %190 = vmatpush1.msra.mxu0 %v154
  %191 = vmatprep.subr.mxu0 0.0
  %192 = vmatpush1.msra.mxu0 %v153
  %193 = vmatprep.subr.mxu0 0.0
  %194 = vmatpush1.msra.mxu0 %v152
  %195 = vmatprep.subr.mxu0 0.0
  %196 = vmatpush1.msra.mxu0 %v151
  %197 = vmatprep.subr.mxu0 0.0
  %198 = vmatpush1.msra.mxu0 %v150
  %199 = vmatprep.subr.mxu0 0.0
  %200 = vmatpush1.msra.mxu0 %v149
  %201 = vmatprep.subr.mxu0 0.0
  %202 = vmatpush1.msra.mxu0 %v148
  %203 = vmatprep.subr.mxu0 0.0
  %204 = vmatpush1.msra.mxu0 %v147
  %205 = vmatprep.subr.mxu0 0.0
  %206 = vmatpush1.msra.mxu0 %v146
  %207 = vmatprep.subr.mxu0 0.0
  %208 = vmatpush1.msra.mxu0 %v145
  %209 = vmatprep.subr.mxu0 0.0
  %210 = vmatpush2.msra.mxu0 %v176
  %211 = vmatprep.subr.mxu0 0.0
  %212 = vmatpush2.msra.mxu0 %v175
  %213 = vmatprep.subr.mxu0 0.0
  %214 = vmatpush2.msra.mxu0 %v174
  %215 = vmatprep.subr.mxu0 0.0
  %216 = vmatpush2.msra.mxu0 %v173
  %217 = vmatprep.subr.mxu0 0.0
  %218 = vmatpush2.msra.mxu0 %v172
  %219 = vmatprep.subr.mxu0 0.0
  %220 = vmatpush2.msra.mxu0 %v171
  %221 = vmatprep.subr.mxu0 0.0
  %222 = vmatpush2.msra.mxu0 %v170
  %223 = vmatprep.subr.mxu0 0.0
  %224 = vmatpush2.msra.mxu0 %v169
  %225 = vmatprep.subr.mxu0 0.0
  %226 = vmatpush2.msra.mxu0 %v168
  %227 = vmatprep.subr.mxu0 0.0
  %228 = vmatpush2.msra.mxu0 %v167
  %229 = vmatprep.subr.mxu0 0.0
  %230 = vmatpush2.msra.mxu0 %v166
  %231 = vmatprep.subr.mxu0 0.0
  %232 = vmatpush2.msra.mxu0 %v165
  %233 = vmatprep.subr.mxu0 0.0
  %234 = vmatpush2.msra.mxu0 %v164
  %235 = vmatprep.subr.mxu0 0.0
  %236 = vmatpush2.msra.mxu0 %v163
  %237 = vmatprep.subr.mxu0 0.0
  %238 = vmatpush2.msra.mxu0 %v162
  %239 = vmatprep.subr.mxu0 0.0
  %240 = vmatpush2.msra.mxu0 %v161
  %241 = vmatprep.mubr.f32.mxu0 %v18
  %242 = vmatmul.mubr.f32.gmra.mxu0 %v17
  %v243 = vpop.f32.mrf.mxu0
  %v244 = vadd.f32 0.0, %v243
  %v245 = vpop.f32.mrf.mxu0
  %246 = vmatprep.mubr.f32.mxu0 %v20
  %247 = vmatmul.mubr.f32.gmra.mxu0 %v19
  %v248 = vpop.f32.mrf.mxu0
  %v249 = vadd.f32 0.0, %v248
  %v250 = vpop.f32.mrf.mxu0
  %251 = vmatprep.mubr.f32.mxu0 %v22
  %252 = vmatmul.mubr.f32.gmra.mxu0 %v21
  %v253 = vpop.f32.mrf.mxu0
  %v254 = vadd.f32 0.0, %v253
  %v255 = vpop.f32.mrf.mxu0
  %256 = vmatprep.mubr.f32.mxu0 %v24
  %257 = vmatmul.mubr.f32.gmra.mxu0 %v23
  %v258 = vpop.f32.mrf.mxu0
  %v259 = vadd.f32 0.0, %v258
  %v260 = vpop.f32.mrf.mxu0
  %261 = vmatprep.mubr.f32.mxu0 %v26
  %262 = vmatmul.mubr.f32.gmra.mxu0 %v25
  %v263 = vpop.f32.mrf.mxu0
  %v264 = vadd.f32 0.0, %v263
  %v265 = vpop.f32.mrf.mxu0
  %266 = vmatprep.mubr.f32.mxu0 %v28
  %267 = vmatmul.mubr.f32.gmra.mxu0 %v27
  %v268 = vpop.f32.mrf.mxu0
  %v269 = vadd.f32 0.0, %v268
  %v270 = vpop.f32.mrf.mxu0
  %271 = vmatprep.mubr.f32.mxu0 %v30
  %272 = vmatmul.mubr.f32.gmra.mxu0 %v29
  %v273 = vpop.f32.mrf.mxu0
  %v274 = vadd.f32 0.0, %v273
  %v275 = vpop.f32.mrf.mxu0
  %276 = vmatprep.mubr.f32.mxu0 %v32
  %277 = vmatmul.mubr.f32.gmra.mxu0 %v31
  %v278 = vpop.f32.mrf.mxu0
  %v279 = vadd.f32 0.0, %v278
  %v280 = vpop.f32.mrf.mxu0
  %281 = vmatprep.mubr.f32.mxu0 %v34
  %282 = vmatmul.mubr.f32.gmra.mxu0 %v33
  %v283 = vpop.f32.mrf.mxu0
  %v284 = vadd.f32 0.0, %v283
  %v285 = vpop.f32.mrf.mxu0
  %286 = vmatprep.mubr.f32.mxu0 %v36
  %287 = vmatmul.mubr.f32.gmra.mxu0 %v35
  %v288 = vpop.f32.mrf.mxu0
  %v289 = vadd.f32 0.0, %v288
  %v290 = vpop.f32.mrf.mxu0
  %291 = vmatprep.mubr.f32.mxu0 %v38
  %292 = vmatmul.mubr.f32.gmra.mxu0 %v37
  %v293 = vpop.f32.mrf.mxu0
  %v294 = vadd.f32 0.0, %v293
  %v295 = vpop.f32.mrf.mxu0
  %296 = vmatprep.mubr.f32.mxu0 %v40
  %297 = vmatmul.mubr.f32.gmra.mxu0 %v39
  %v298 = vpop.f32.mrf.mxu0
  %v299 = vadd.f32 0.0, %v298
  %v300 = vpop.f32.mrf.mxu0
  %301 = vmatprep.mubr.f32.mxu0 %v42
  %302 = vmatmul.mubr.f32.gmra.mxu0 %v41
  %v303 = vpop.f32.mrf.mxu0
  %v304 = vadd.f32 0.0, %v303
  %v305 = vpop.f32.mrf.mxu0
  %306 = vmatprep.mubr.f32.mxu0 %v44
  %307 = vmatmul.mubr.f32.gmra.mxu0 %v43
  %v308 = vpop.f32.mrf.mxu0
  %v309 = vadd.f32 0.0, %v308
  %v310 = vpop.f32.mrf.mxu0
  %311 = vmatprep.mubr.f32.mxu0 %v46
  %312 = vmatmul.mubr.f32.gmra.mxu0 %v45
  %v313 = vpop.f32.mrf.mxu0
  %v314 = vadd.f32 0.0, %v313
  %v315 = vpop.f32.mrf.mxu0
  %316 = vmatprep.mubr.f32.mxu0 %v48
  %317 = vmatmul.mubr.f32.gmra.mxu0 %v47
  %v318 = vpop.f32.mrf.mxu0
  %v319 = vadd.f32 0.0, %v318
  %v320 = vpop.f32.mrf.mxu0
  %321 = vmatprep.mubr.f32.mxu0 %v50
  %322 = vmatmul.mubr.f32.gmra.mxu0 %v49
  %v323 = vpop.f32.mrf.mxu0
  %v324 = vadd.f32 0.0, %v323
  %v325 = vpop.f32.mrf.mxu0
  %326 = vmatprep.mubr.f32.mxu0 %v52
  %327 = vmatmul.mubr.f32.gmra.mxu0 %v51
  %v328 = vpop.f32.mrf.mxu0
  %v329 = vadd.f32 0.0, %v328
  %v330 = vpop.f32.mrf.mxu0
  %331 = vmatprep.mubr.f32.mxu0 %v54
  %332 = vmatmul.mubr.f32.gmra.mxu0 %v53
  %v333 = vpop.f32.mrf.mxu0
  %v334 = vadd.f32 0.0, %v333
  %v335 = vpop.f32.mrf.mxu0
  %336 = vmatprep.mubr.f32.mxu0 %v56
  %337 = vmatmul.mubr.f32.gmra.mxu0 %v55
  %v338 = vpop.f32.mrf.mxu0
  %v339 = vadd.f32 0.0, %v338
  %v340 = vpop.f32.mrf.mxu0
  %341 = vmatprep.mubr.f32.mxu0 %v58
  %342 = vmatmul.mubr.f32.gmra.mxu0 %v57
  %v343 = vpop.f32.mrf.mxu0
  %v344 = vadd.f32 0.0, %v343
  %v345 = vpop.f32.mrf.mxu0
  %346 = vmatprep.mubr.f32.mxu0 %v60
  %347 = vmatmul.mubr.f32.gmra.mxu0 %v59
  %v348 = vpop.f32.mrf.mxu0
  %v349 = vadd.f32 0.0, %v348
  %v350 = vpop.f32.mrf.mxu0
  %351 = vmatprep.mubr.f32.mxu0 %v62
  %352 = vmatmul.mubr.f32.gmra.mxu0 %v61
  %v353 = vpop.f32.mrf.mxu0
  %v354 = vadd.f32 0.0, %v353
  %v355 = vpop.f32.mrf.mxu0
  %356 = vmatprep.mubr.f32.mxu0 %v64
  %357 = vmatmul.mubr.f32.gmra.mxu0 %v63
  %v358 = vpop.f32.mrf.mxu0
  %v359 = vadd.f32 0.0, %v358
  %v360 = vpop.f32.mrf.mxu0
  %361 = vmatprep.mubr.f32.mxu0 %v66
  %362 = vmatmul.mubr.f32.gmra.mxu0 %v65
  %v363 = vpop.f32.mrf.mxu0
  %v364 = vadd.f32 0.0, %v363
  %v365 = vpop.f32.mrf.mxu0
  %366 = vmatprep.mubr.f32.mxu0 %v68
  %367 = vmatmul.mubr.f32.gmra.mxu0 %v67
  %v368 = vpop.f32.mrf.mxu0
  %v369 = vadd.f32 0.0, %v368
  %v370 = vpop.f32.mrf.mxu0
  %371 = vmatprep.mubr.f32.mxu0 %v70
  %372 = vmatmul.mubr.f32.gmra.mxu0 %v69
  %v373 = vpop.f32.mrf.mxu0
  %v374 = vadd.f32 0.0, %v373
  %v375 = vpop.f32.mrf.mxu0
  %376 = vmatprep.mubr.f32.mxu0 %v72
  %377 = vmatmul.mubr.f32.gmra.mxu0 %v71
  %v378 = vpop.f32.mrf.mxu0
  %v379 = vadd.f32 0.0, %v378
  %v380 = vpop.f32.mrf.mxu0
  %381 = vmatprep.mubr.f32.mxu0 %v74
  %382 = vmatmul.mubr.f32.gmra.mxu0 %v73
  %v383 = vpop.f32.mrf.mxu0
  %v384 = vadd.f32 0.0, %v383
  %v385 = vpop.f32.mrf.mxu0
  %386 = vmatprep.mubr.f32.mxu0 %v76
  %387 = vmatmul.mubr.f32.gmra.mxu0 %v75
  %v388 = vpop.f32.mrf.mxu0
  %v389 = vadd.f32 0.0, %v388
  %v390 = vpop.f32.mrf.mxu0
  %391 = vmatprep.mubr.f32.mxu0 %v78
  %392 = vmatmul.mubr.f32.gmra.mxu0 %v77
  %v393 = vpop.f32.mrf.mxu0
  %v394 = vadd.f32 0.0, %v393
  %v395 = vpop.f32.mrf.mxu0
  %396 = vmatprep.mubr.f32.mxu0 %v80
  %397 = vmatmul.mubr.f32.gmra.mxu0 %v79
  %v398 = vpop.f32.mrf.mxu0
  %v399 = vadd.f32 0.0, %v398
  %v400 = vpop.f32.mrf.mxu0
  %401 = vmatprep.mubr.f32.mxu0 %v82
  %402 = vmatmul.mubr.f32.gmra.mxu0 %v81
  %v403 = vpop.f32.mrf.mxu0
  %v404 = vadd.f32 0.0, %v403
  %v405 = vpop.f32.mrf.mxu0
  %406 = vmatprep.mubr.f32.mxu0 %v84
  %407 = vmatmul.mubr.f32.gmra.mxu0 %v83
  %v408 = vpop.f32.mrf.mxu0
  %v409 = vadd.f32 0.0, %v408
  %v410 = vpop.f32.mrf.mxu0
  %411 = vmatprep.mubr.f32.mxu0 %v86
  %412 = vmatmul.mubr.f32.gmra.mxu0 %v85
  %v413 = vpop.f32.mrf.mxu0
  %v414 = vadd.f32 0.0, %v413
  %v415 = vpop.f32.mrf.mxu0
  %416 = vmatprep.mubr.f32.mxu0 %v88
  %417 = vmatmul.mubr.f32.gmra.mxu0 %v87
  %v418 = vpop.f32.mrf.mxu0
  %v419 = vadd.f32 0.0, %v418
  %v420 = vpop.f32.mrf.mxu0
  %421 = vmatprep.mubr.f32.mxu0 %v90
  %422 = vmatmul.mubr.f32.gmra.mxu0 %v89
  %v423 = vpop.f32.mrf.mxu0
  %v424 = vadd.f32 0.0, %v423
  %v425 = vpop.f32.mrf.mxu0
  %426 = vmatprep.mubr.f32.mxu0 %v92
  %427 = vmatmul.mubr.f32.gmra.mxu0 %v91
  %v428 = vpop.f32.mrf.mxu0
  %v429 = vadd.f32 0.0, %v428
  %v430 = vpop.f32.mrf.mxu0
  %431 = vmatprep.mubr.f32.mxu0 %v94
  %432 = vmatmul.mubr.f32.gmra.mxu0 %v93
  %v433 = vpop.f32.mrf.mxu0
  %v434 = vadd.f32 0.0, %v433
  %v435 = vpop.f32.mrf.mxu0
  %436 = vmatprep.mubr.f32.mxu0 %v96
  %437 = vmatmul.mubr.f32.gmra.mxu0 %v95
  %v438 = vpop.f32.mrf.mxu0
  %v439 = vadd.f32 0.0, %v438
  %v440 = vpop.f32.mrf.mxu0
  %441 = vmatprep.mubr.f32.mxu0 %v98
  %442 = vmatmul.mubr.f32.gmra.mxu0 %v97
  %v443 = vpop.f32.mrf.mxu0
  %v444 = vadd.f32 0.0, %v443
  %v445 = vpop.f32.mrf.mxu0
  %446 = vmatprep.mubr.f32.mxu0 %v100
  %447 = vmatmul.mubr.f32.gmra.mxu0 %v99
  %v448 = vpop.f32.mrf.mxu0
  %v449 = vadd.f32 0.0, %v448
  %v450 = vpop.f32.mrf.mxu0
  %451 = vmatprep.mubr.f32.mxu0 %v102
  %452 = vmatmul.mubr.f32.gmra.mxu0 %v101
  %v453 = vpop.f32.mrf.mxu0
  %v454 = vadd.f32 0.0, %v453
  %v455 = vpop.f32.mrf.mxu0
  %456 = vmatprep.mubr.f32.mxu0 %v104
  %457 = vmatmul.mubr.f32.gmra.mxu0 %v103
  %v458 = vpop.f32.mrf.mxu0
  %v459 = vadd.f32 0.0, %v458
  %v460 = vpop.f32.mrf.mxu0
  %461 = vmatprep.mubr.f32.mxu0 %v106
  %462 = vmatmul.mubr.f32.gmra.mxu0 %v105
  %v463 = vpop.f32.mrf.mxu0
  %v464 = vadd.f32 0.0, %v463
  %v465 = vpop.f32.mrf.mxu0
  %466 = vmatprep.mubr.f32.mxu0 %v108
  %467 = vmatmul.mubr.f32.gmra.mxu0 %v107
  %v468 = vpop.f32.mrf.mxu0
  %v469 = vadd.f32 0.0, %v468
  %v470 = vpop.f32.mrf.mxu0
  %471 = vmatprep.mubr.f32.mxu0 %v110
  %472 = vmatmul.mubr.f32.gmra.mxu0 %v109
  %v473 = vpop.f32.mrf.mxu0
  %v474 = vadd.f32 0.0, %v473
  %v475 = vpop.f32.mrf.mxu0
  %476 = vmatprep.mubr.f32.mxu0 %v112
  %477 = vmatmul.mubr.f32.gmra.mxu0 %v111
  %v478 = vpop.f32.mrf.mxu0
  %v479 = vadd.f32 0.0, %v478
  %v480 = vpop.f32.mrf.mxu0
  %481 = vmatprep.mubr.f32.mxu0 %v114
  %482 = vmatmul.mubr.f32.gmra.mxu0 %v113
  %v483 = vpop.f32.mrf.mxu0
  %v484 = vadd.f32 0.0, %v483
  %v485 = vpop.f32.mrf.mxu0
  %486 = vmatprep.mubr.f32.mxu0 %v116
  %487 = vmatmul.mubr.f32.gmra.mxu0 %v115
  %v488 = vpop.f32.mrf.mxu0
  %v489 = vadd.f32 0.0, %v488
  %v490 = vpop.f32.mrf.mxu0
  %491 = vmatprep.mubr.f32.mxu0 %v118
  %492 = vmatmul.mubr.f32.gmra.mxu0 %v117
  %v493 = vpop.f32.mrf.mxu0
  %v494 = vadd.f32 0.0, %v493
  %v495 = vpop.f32.mrf.mxu0
  %496 = vmatprep.mubr.f32.mxu0 %v120
  %497 = vmatmul.mubr.f32.gmra.mxu0 %v119
  %v498 = vpop.f32.mrf.mxu0
  %v499 = vadd.f32 0.0, %v498
  %v500 = vpop.f32.mrf.mxu0
  %501 = vmatprep.mubr.f32.mxu0 %v122
  %502 = vmatmul.mubr.f32.gmra.mxu0 %v121
  %v503 = vpop.f32.mrf.mxu0
  %v504 = vadd.f32 0.0, %v503
  %v505 = vpop.f32.mrf.mxu0
  %506 = vmatprep.mubr.f32.mxu0 %v124
  %507 = vmatmul.mubr.f32.gmra.mxu0 %v123
  %v508 = vpop.f32.mrf.mxu0
  %v509 = vadd.f32 0.0, %v508
  %v510 = vpop.f32.mrf.mxu0
  %511 = vmatprep.mubr.f32.mxu0 %v126
  %512 = vmatmul.mubr.f32.gmra.mxu0 %v125
  %v513 = vpop.f32.mrf.mxu0
  %v514 = vadd.f32 0.0, %v513
  %v515 = vpop.f32.mrf.mxu0
  %516 = vmatprep.mubr.f32.mxu0 %v128
  %517 = vmatmul.mubr.f32.gmra.mxu0 %v127
  %v518 = vpop.f32.mrf.mxu0
  %v519 = vadd.f32 0.0, %v518
  %v520 = vpop.f32.mrf.mxu0
  %521 = vmatprep.mubr.f32.mxu0 %v130
  %522 = vmatmul.mubr.f32.gmra.mxu0 %v129
  %v523 = vpop.f32.mrf.mxu0
  %v524 = vadd.f32 0.0, %v523
  %v525 = vpop.f32.mrf.mxu0
  %526 = vmatprep.mubr.f32.mxu0 %v132
  %527 = vmatmul.mubr.f32.gmra.mxu0 %v131
  %v528 = vpop.f32.mrf.mxu0
  %v529 = vadd.f32 0.0, %v528
  %v530 = vpop.f32.mrf.mxu0
  %531 = vmatprep.mubr.f32.mxu0 %v134
  %532 = vmatmul.mubr.f32.gmra.mxu0 %v133
  %v533 = vpop.f32.mrf.mxu0
  %v534 = vadd.f32 0.0, %v533
  %v535 = vpop.f32.mrf.mxu0
  %536 = vmatprep.mubr.f32.mxu0 %v136
  %537 = vmatmul.mubr.f32.gmra.mxu0 %v135
  %v538 = vpop.f32.mrf.mxu0
  %v539 = vadd.f32 0.0, %v538
  %v540 = vpop.f32.mrf.mxu0
  %541 = vmatprep.mubr.f32.mxu0 %v138
  %542 = vmatmul.mubr.f32.gmra.mxu0 %v137
  %v543 = vpop.f32.mrf.mxu0
  %v544 = vadd.f32 0.0, %v543
  %v545 = vpop.f32.mrf.mxu0
  %546 = vmatprep.mubr.f32.mxu0 %v140
  %547 = vmatmul.mubr.f32.gmra.mxu0 %v139
  %v548 = vpop.f32.mrf.mxu0
  %v549 = vadd.f32 0.0, %v548
  %v550 = vpop.f32.mrf.mxu0
  %551 = vmatprep.mubr.f32.mxu0 %v142
  %552 = vmatmul.mubr.f32.gmra.mxu0 %v141
  %v553 = vpop.f32.mrf.mxu0
  %v554 = vadd.f32 0.0, %v553
  %v555 = vpop.f32.mrf.mxu0
  %556 = vmatprep.mubr.f32.mxu0 %v144
  %557 = vmatmul.mubr.f32.gmra.mxu0 %v143
  %v558 = vpop.f32.mrf.mxu0
  %v559 = vadd.f32 0.0, %v558
  %v560 = vpop.f32.mrf.mxu0
  %561 = vdwg.mxu0
  %vm562 = vcmask 261120
  %v563 = vsel %vm562, %v244, 0.0
  %v564 = vsel %vm562, %v249, 0.0
  %v565 = vadd.f32 %v563, %v564
  %v566 = vsel %vm562, %v254, 0.0
  %v567 = vadd.f32 %v565, %v566
  %v568 = vsel %vm562, %v259, 0.0
  %v569 = vadd.f32 %v567, %v568
  %v570 = vsel %vm562, %v264, 0.0
  %v571 = vadd.f32 %v569, %v570
  %v572 = vsel %vm562, %v269, 0.0
  %v573 = vadd.f32 %v571, %v572
  %v574 = vsel %vm562, %v274, 0.0
  %v575 = vadd.f32 %v573, %v574
  %v576 = vsel %vm562, %v279, 0.0
  %v577 = vadd.f32 %v575, %v576
  %v578 = vsel %vm562, %v284, 0.0
  %v579 = vadd.f32 %v577, %v578
  %v580 = vsel %vm562, %v289, 0.0
  %v581 = vadd.f32 %v579, %v580
  %v582 = vsel %vm562, %v294, 0.0
  %v583 = vadd.f32 %v581, %v582
  %v584 = vsel %vm562, %v299, 0.0
  %v585 = vadd.f32 %v583, %v584
  %v586 = vsel %vm562, %v304, 0.0
  %v587 = vadd.f32 %v585, %v586
  %v588 = vsel %vm562, %v309, 0.0
  %v589 = vadd.f32 %v587, %v588
  %v590 = vsel %vm562, %v314, 0.0
  %v591 = vadd.f32 %v589, %v590
  %v592 = vsel %vm562, %v319, 0.0
  %v593 = vadd.f32 %v591, %v592
  %v594 = vsel %vm562, %v324, 0.0
  %v595 = vadd.f32 %v593, %v594
  %v596 = vsel %vm562, %v329, 0.0
  %v597 = vadd.f32 %v595, %v596
  %v598 = vsel %vm562, %v334, 0.0
  %v599 = vadd.f32 %v597, %v598
  %v600 = vsel %vm562, %v339, 0.0
  %v601 = vadd.f32 %v599, %v600
  %v602 = vsel %vm562, %v344, 0.0
  %v603 = vadd.f32 %v601, %v602
  %v604 = vsel %vm562, %v349, 0.0
  %v605 = vadd.f32 %v603, %v604
  %v606 = vsel %vm562, %v354, 0.0
  %v607 = vadd.f32 %v605, %v606
  %v608 = vsel %vm562, %v359, 0.0
  %v609 = vadd.f32 %v607, %v608
  %v610 = vsel %vm562, %v364, 0.0
  %v611 = vadd.f32 %v609, %v610
  %v612 = vsel %vm562, %v369, 0.0
  %v613 = vadd.f32 %v611, %v612
  %v614 = vsel %vm562, %v374, 0.0
  %v615 = vadd.f32 %v613, %v614
  %v616 = vsel %vm562, %v379, 0.0
  %v617 = vadd.f32 %v615, %v616
  %v618 = vsel %vm562, %v384, 0.0
  %v619 = vadd.f32 %v617, %v618
  %v620 = vsel %vm562, %v389, 0.0
  %v621 = vadd.f32 %v619, %v620
  %v622 = vsel %vm562, %v394, 0.0
  %v623 = vadd.f32 %v621, %v622
  %v624 = vsel %vm562, %v399, 0.0
  %v625 = vadd.f32 %v623, %v624
  %v626 = vsel %vm562, %v404, 0.0
  %v627 = vadd.f32 %v625, %v626
  %v628 = vsel %vm562, %v409, 0.0
  %v629 = vadd.f32 %v627, %v628
  %v630 = vsel %vm562, %v414, 0.0
  %v631 = vadd.f32 %v629, %v630
  %v632 = vsel %vm562, %v419, 0.0
  %v633 = vadd.f32 %v631, %v632
  %v634 = vsel %vm562, %v424, 0.0
  %v635 = vadd.f32 %v633, %v634
  %v636 = vsel %vm562, %v429, 0.0
  %v637 = vadd.f32 %v635, %v636
  %v638 = vsel %vm562, %v434, 0.0
  %v639 = vadd.f32 %v637, %v638
  %v640 = vsel %vm562, %v439, 0.0
  %v641 = vadd.f32 %v639, %v640
  %v642 = vsel %vm562, %v444, 0.0
  %v643 = vadd.f32 %v641, %v642
  %v644 = vsel %vm562, %v449, 0.0
  %v645 = vadd.f32 %v643, %v644
  %v646 = vsel %vm562, %v454, 0.0
  %v647 = vadd.f32 %v645, %v646
  %v648 = vsel %vm562, %v459, 0.0
  %v649 = vadd.f32 %v647, %v648
  %v650 = vsel %vm562, %v464, 0.0
  %v651 = vadd.f32 %v649, %v650
  %v652 = vsel %vm562, %v469, 0.0
  %v653 = vadd.f32 %v651, %v652
  %v654 = vsel %vm562, %v474, 0.0
  %v655 = vadd.f32 %v653, %v654
  %v656 = vsel %vm562, %v479, 0.0
  %v657 = vadd.f32 %v655, %v656
  %v658 = vsel %vm562, %v484, 0.0
  %v659 = vadd.f32 %v657, %v658
  %v660 = vsel %vm562, %v489, 0.0
  %v661 = vadd.f32 %v659, %v660
  %v662 = vsel %vm562, %v494, 0.0
  %v663 = vadd.f32 %v661, %v662
  %v664 = vsel %vm562, %v499, 0.0
  %v665 = vadd.f32 %v663, %v664
  %v666 = vsel %vm562, %v504, 0.0
  %v667 = vadd.f32 %v665, %v666
  %v668 = vsel %vm562, %v509, 0.0
  %v669 = vadd.f32 %v667, %v668
  %v670 = vsel %vm562, %v514, 0.0
  %v671 = vadd.f32 %v669, %v670
  %v672 = vsel %vm562, %v519, 0.0
  %v673 = vadd.f32 %v671, %v672
  %v674 = vsel %vm562, %v524, 0.0
  %v675 = vadd.f32 %v673, %v674
  %v676 = vsel %vm562, %v529, 0.0
  %v677 = vadd.f32 %v675, %v676
  %v678 = vsel %vm562, %v534, 0.0
  %v679 = vadd.f32 %v677, %v678
  %v680 = vsel %vm562, %v539, 0.0
  %v681 = vadd.f32 %v679, %v680
  %v682 = vsel %vm562, %v544, 0.0
  %v683 = vadd.f32 %v681, %v682
  %v684 = vsel %vm562, %v549, 0.0
  %v685 = vadd.f32 %v683, %v684
  %v686 = vsel %vm562, %v554, 0.0
  %v687 = vadd.f32 %v685, %v686
  %v688 = vsel %vm562, %v559, 0.0
  %v689 = vadd.f32 %v687, %v688
  %v690 = vrot.slane %v689, 4
  %v691 = vadd.f32 %v689, %v690
  %v692 = vrot.slane %v691, 2
  %v693 = vadd.f32 %v691, %v692
  %v694 = vrot.slane %v693, 1
  %v695 = vadd.f32 %v693, %v694
  %697 = vrot.lane.b32.xlu0 %v695, 120
  %v698 = vpop.permute.xlu0 %697
  %v700 = vadd.f32 %v695, %v698
  %701 = vrot.lane.b32.xlu0 %v695, 112
  %v702 = vpop.permute.xlu0 %701
  %v704 = vadd.f32 %v700, %v702
  %705 = vrot.lane.b32.xlu0 %v695, 104
  %v706 = vpop.permute.xlu0 %705
  %v708 = vadd.f32 %v704, %v706
  %v709 = vmul.f32 %v708, 0.00048828125
  %711 = vrot.lane.b32.xlu0 %v709, 8
  %v712 = vpop.permute.xlu0 %711
  %714 = vrot.lane.b32.xlu0 %v709, 16
  %v715 = vpop.permute.xlu0 %714
  %717 = vrot.lane.b32.xlu0 %v709, 24
  %v718 = vpop.permute.xlu0 %717
  %vm720 = vcmask 64512
  %v721 = vsel %vm720, %v709, %v712
  %vm722 = vcmask 130048
  %v723 = vsel %vm722, %v721, %v715
  %vm724 = vcmask 195584
  %v725 = vsel %vm724, %v723, %v718
  %v726 = vlaneseq
  %v727 = vshrl.u32 %v726, 7
  %v728 = vadd.s32 %v727, 8
  %v729 = vadd.s32 %v727, 16
  %v730 = vadd.s32 %v727, 24
  %v731 = vadd.s32 %v727, 32
  %v732 = vadd.s32 %v727, 40
  %v733 = vadd.s32 %v727, 48
  %v734 = vadd.s32 %v727, 56
  %v735 = vadd.s32 %v727, 64
  %v736 = vadd.s32 %v727, 72
  %v737 = vadd.s32 %v727, 80
  %v738 = vadd.s32 %v727, 88
  %v739 = vadd.s32 %v727, 96
  %v740 = vadd.s32 %v727, 104
  %v741 = vadd.s32 %v727, 112
  %v742 = vadd.s32 %v727, 120
  %v743 = vadd.s32 %v727, 128
  %v744 = vadd.s32 %v727, 136
  %v745 = vadd.s32 %v727, 144
  %v746 = vadd.s32 %v727, 152
  %v747 = vadd.s32 %v727, 160
  %v748 = vadd.s32 %v727, 168
  %v749 = vadd.s32 %v727, 176
  %v750 = vadd.s32 %v727, 184
  %v751 = vadd.s32 %v727, 192
  %v752 = vadd.s32 %v727, 200
  %v753 = vadd.s32 %v727, 208
  %v754 = vadd.s32 %v727, 216
  %v755 = vadd.s32 %v727, 224
  %v756 = vadd.s32 %v727, 232
  %v757 = vadd.s32 %v727, 240
  %v758 = vadd.s32 %v727, 248
  %v759 = vadd.s32 %v727, 256
  %v760 = vadd.s32 %v727, 264
  %v761 = vadd.s32 %v727, 272
  %v762 = vadd.s32 %v727, 280
  %v763 = vadd.s32 %v727, 288
  %v764 = vadd.s32 %v727, 296
  %v765 = vadd.s32 %v727, 304
  %v766 = vadd.s32 %v727, 312
  %v767 = vadd.s32 %v727, 320
  %v768 = vadd.s32 %v727, 328
  %v769 = vadd.s32 %v727, 336
  %v770 = vadd.s32 %v727, 344
  %v771 = vadd.s32 %v727, 352
  %v772 = vadd.s32 %v727, 360
  %v773 = vadd.s32 %v727, 368
  %v774 = vadd.s32 %v727, 376
  %v775 = vadd.s32 %v727, 384
  %v776 = vadd.s32 %v727, 392
  %v777 = vadd.s32 %v727, 400
  %v778 = vadd.s32 %v727, 408
  %v779 = vadd.s32 %v727, 416
  %v780 = vadd.s32 %v727, 424
  %v781 = vadd.s32 %v727, 432
  %v782 = vadd.s32 %v727, 440
  %v783 = vadd.s32 %v727, 448
  %v784 = vadd.s32 %v727, 456
  %v785 = vadd.s32 %v727, 464
  %v786 = vadd.s32 %v727, 472
  %v787 = vadd.s32 %v727, 480
  %v788 = vadd.s32 %v727, 488
  %v789 = vadd.s32 %v727, 496
  %v790 = vadd.s32 %v727, 504
  %vm791 = vcmp.lt.s32.totalorder %v727, 512
  %vm792 = vcmp.lt.s32.totalorder %v728, 512
  %vm793 = vcmp.lt.s32.totalorder %v729, 512
  %vm794 = vcmp.lt.s32.totalorder %v730, 512
  %vm795 = vcmp.lt.s32.totalorder %v731, 512
  %vm796 = vcmp.lt.s32.totalorder %v732, 512
  %vm797 = vcmp.lt.s32.totalorder %v733, 512
  %vm798 = vcmp.lt.s32.totalorder %v734, 512
  %vm799 = vcmp.lt.s32.totalorder %v735, 512
  %vm800 = vcmp.lt.s32.totalorder %v736, 512
  %vm801 = vcmp.lt.s32.totalorder %v737, 512
  %vm802 = vcmp.lt.s32.totalorder %v738, 512
  %vm803 = vcmp.lt.s32.totalorder %v739, 512
  %vm804 = vcmp.lt.s32.totalorder %v740, 512
  %vm805 = vcmp.lt.s32.totalorder %v741, 512
  %vm806 = vcmp.lt.s32.totalorder %v742, 512
  %vm807 = vcmp.lt.s32.totalorder %v743, 512
  %vm808 = vcmp.lt.s32.totalorder %v744, 512
  %vm809 = vcmp.lt.s32.totalorder %v745, 512
  %vm810 = vcmp.lt.s32.totalorder %v746, 512
  %vm811 = vcmp.lt.s32.totalorder %v747, 512
  %vm812 = vcmp.lt.s32.totalorder %v748, 512
  %vm813 = vcmp.lt.s32.totalorder %v749, 512
  %vm814 = vcmp.lt.s32.totalorder %v750, 512
  %vm815 = vcmp.lt.s32.totalorder %v751, 512
  %vm816 = vcmp.lt.s32.totalorder %v752, 512
  %vm817 = vcmp.lt.s32.totalorder %v753, 512
  %vm818 = vcmp.lt.s32.totalorder %v754, 512
  %vm819 = vcmp.lt.s32.totalorder %v755, 512
  %vm820 = vcmp.lt.s32.totalorder %v756, 512
  %vm821 = vcmp.lt.s32.totalorder %v757, 512
  %vm822 = vcmp.lt.s32.totalorder %v758, 512
  %vm823 = vcmp.lt.s32.totalorder %v759, 512
  %vm824 = vcmp.lt.s32.totalorder %v760, 512
  %vm825 = vcmp.lt.s32.totalorder %v761, 512
  %vm826 = vcmp.lt.s32.totalorder %v762, 512
  %vm827 = vcmp.lt.s32.totalorder %v763, 512
  %vm828 = vcmp.lt.s32.totalorder %v764, 512
  %vm829 = vcmp.lt.s32.totalorder %v765, 512
  %vm830 = vcmp.lt.s32.totalorder %v766, 512
  %vm831 = vcmp.lt.s32.totalorder %v767, 512
  %vm832 = vcmp.lt.s32.totalorder %v768, 512
  %vm833 = vcmp.lt.s32.totalorder %v769, 512
  %vm834 = vcmp.lt.s32.totalorder %v770, 512
  %vm835 = vcmp.lt.s32.totalorder %v771, 512
  %vm836 = vcmp.lt.s32.totalorder %v772, 512
  %vm837 = vcmp.lt.s32.totalorder %v773, 512
  %vm838 = vcmp.lt.s32.totalorder %v774, 512
  %vm839 = vcmp.lt.s32.totalorder %v775, 512
  %vm840 = vcmp.lt.s32.totalorder %v776, 512
  %vm841 = vcmp.lt.s32.totalorder %v777, 512
  %vm842 = vcmp.lt.s32.totalorder %v778, 512
  %vm843 = vcmp.lt.s32.totalorder %v779, 512
  %vm844 = vcmp.lt.s32.totalorder %v780, 512
  %vm845 = vcmp.lt.s32.totalorder %v781, 512
  %vm846 = vcmp.lt.s32.totalorder %v782, 512
  %vm847 = vcmp.lt.s32.totalorder %v783, 512
  %vm848 = vcmp.lt.s32.totalorder %v784, 512
  %vm849 = vcmp.lt.s32.totalorder %v785, 512
  %vm850 = vcmp.lt.s32.totalorder %v786, 512
  %vm851 = vcmp.lt.s32.totalorder %v787, 512
  %vm852 = vcmp.lt.s32.totalorder %v788, 512
  %vm853 = vcmp.lt.s32.totalorder %v789, 512
  %vm854 = vcmp.lt.s32.totalorder %v790, 512
  %v855 = vlaneseq
  %v856 = vshrl.u32 %v855, 7
  %v857 = vsub.s32 0, %v856
  %v858 = vrot.slane %v725, %v857
  %v859 = vsub.f32 %v244, %v858
  %v860 = vsub.f32 %v249, %v858
  %v861 = vsub.f32 %v254, %v858
  %v862 = vsub.f32 %v259, %v858
  %v863 = vsub.f32 %v264, %v858
  %v864 = vsub.f32 %v269, %v858
  %v865 = vsub.f32 %v274, %v858
  %v866 = vsub.f32 %v279, %v858
  %v867 = vsub.f32 %v284, %v858
  %v868 = vsub.f32 %v289, %v858
  %v869 = vsub.f32 %v294, %v858
  %v870 = vsub.f32 %v299, %v858
  %v871 = vsub.f32 %v304, %v858
  %v872 = vsub.f32 %v309, %v858
  %v873 = vsub.f32 %v314, %v858
  %v874 = vsub.f32 %v319, %v858
  %v875 = vsub.f32 %v324, %v858
  %v876 = vsub.f32 %v329, %v858
  %v877 = vsub.f32 %v334, %v858
  %v878 = vsub.f32 %v339, %v858
  %v879 = vsub.f32 %v344, %v858
  %v880 = vsub.f32 %v349, %v858
  %v881 = vsub.f32 %v354, %v858
  %v882 = vsub.f32 %v359, %v858
  %v883 = vsub.f32 %v364, %v858
  %v884 = vsub.f32 %v369, %v858
  %v885 = vsub.f32 %v374, %v858
  %v886 = vsub.f32 %v379, %v858
  %v887 = vsub.f32 %v384, %v858
  %v888 = vsub.f32 %v389, %v858
  %v889 = vsub.f32 %v394, %v858
  %v890 = vsub.f32 %v399, %v858
  %v891 = vsub.f32 %v404, %v858
  %v892 = vsub.f32 %v409, %v858
  %v893 = vsub.f32 %v414, %v858
  %v894 = vsub.f32 %v419, %v858
  %v895 = vsub.f32 %v424, %v858
  %v896 = vsub.f32 %v429, %v858
  %v897 = vsub.f32 %v434, %v858
  %v898 = vsub.f32 %v439, %v858
  %v899 = vsub.f32 %v444, %v858
  %v900 = vsub.f32 %v449, %v858
  %v901 = vsub.f32 %v454, %v858
  %v902 = vsub.f32 %v459, %v858
  %v903 = vsub.f32 %v464, %v858
  %v904 = vsub.f32 %v469, %v858
  %v905 = vsub.f32 %v474, %v858
  %v906 = vsub.f32 %v479, %v858
  %v907 = vsub.f32 %v484, %v858
  %v908 = vsub.f32 %v489, %v858
  %v909 = vsub.f32 %v494, %v858
  %v910 = vsub.f32 %v499, %v858
  %v911 = vsub.f32 %v504, %v858
  %v912 = vsub.f32 %v509, %v858
  %v913 = vsub.f32 %v514, %v858
  %v914 = vsub.f32 %v519, %v858
  %v915 = vsub.f32 %v524, %v858
  %v916 = vsub.f32 %v529, %v858
  %v917 = vsub.f32 %v534, %v858
  %v918 = vsub.f32 %v539, %v858
  %v919 = vsub.f32 %v544, %v858
  %v920 = vsub.f32 %v549, %v858
  %v921 = vsub.f32 %v554, %v858
  %v922 = vsub.f32 %v559, %v858
  %v923 = vsel %vm791, 1, 0
  %v924 = vsel %vm792, 1, 0
  %v925 = vsel %vm793, 1, 0
  %v926 = vsel %vm794, 1, 0
  %v927 = vsel %vm795, 1, 0
  %v928 = vsel %vm796, 1, 0
  %v929 = vsel %vm797, 1, 0
  %v930 = vsel %vm798, 1, 0
  %v931 = vsel %vm799, 1, 0
  %v932 = vsel %vm800, 1, 0
  %v933 = vsel %vm801, 1, 0
  %v934 = vsel %vm802, 1, 0
  %v935 = vsel %vm803, 1, 0
  %v936 = vsel %vm804, 1, 0
  %v937 = vsel %vm805, 1, 0
  %v938 = vsel %vm806, 1, 0
  %v939 = vsel %vm807, 1, 0
  %v940 = vsel %vm808, 1, 0
  %v941 = vsel %vm809, 1, 0
  %v942 = vsel %vm810, 1, 0
  %v943 = vsel %vm811, 1, 0
  %v944 = vsel %vm812, 1, 0
  %v945 = vsel %vm813, 1, 0
  %v946 = vsel %vm814, 1, 0
  %v947 = vsel %vm815, 1, 0
  %v948 = vsel %vm816, 1, 0
  %v949 = vsel %vm817, 1, 0
  %v950 = vsel %vm818, 1, 0
  %v951 = vsel %vm819, 1, 0
  %v952 = vsel %vm820, 1, 0
  %v953 = vsel %vm821, 1, 0
  %v954 = vsel %vm822, 1, 0
  %v955 = vsel %vm823, 1, 0
  %v956 = vsel %vm824, 1, 0
  %v957 = vsel %vm825, 1, 0
  %v958 = vsel %vm826, 1, 0
  %v959 = vsel %vm827, 1, 0
  %v960 = vsel %vm828, 1, 0
  %v961 = vsel %vm829, 1, 0
  %v962 = vsel %vm830, 1, 0
  %v963 = vsel %vm831, 1, 0
  %v964 = vsel %vm832, 1, 0
  %v965 = vsel %vm833, 1, 0
  %v966 = vsel %vm834, 1, 0
  %v967 = vsel %vm835, 1, 0
  %v968 = vsel %vm836, 1, 0
  %v969 = vsel %vm837, 1, 0
  %v970 = vsel %vm838, 1, 0
  %v971 = vsel %vm839, 1, 0
  %v972 = vsel %vm840, 1, 0
  %v973 = vsel %vm841, 1, 0
  %v974 = vsel %vm842, 1, 0
  %v975 = vsel %vm843, 1, 0
  %v976 = vsel %vm844, 1, 0
  %v977 = vsel %vm845, 1, 0
  %v978 = vsel %vm846, 1, 0
  %v979 = vsel %vm847, 1, 0
  %v980 = vsel %vm848, 1, 0
  %v981 = vsel %vm849, 1, 0
  %v982 = vsel %vm850, 1, 0
  %v983 = vsel %vm851, 1, 0
  %v984 = vsel %vm852, 1, 0
  %v985 = vsel %vm853, 1, 0
  %v986 = vsel %vm854, 1, 0
  %vm987 = vcmp.eq.s32.totalorder %v923, 1
  %vm988 = vcmp.eq.s32.totalorder %v924, 1
  %vm989 = vcmp.eq.s32.totalorder %v925, 1
  %vm990 = vcmp.eq.s32.totalorder %v926, 1
  %vm991 = vcmp.eq.s32.totalorder %v927, 1
  %vm992 = vcmp.eq.s32.totalorder %v928, 1
  %vm993 = vcmp.eq.s32.totalorder %v929, 1
  %vm994 = vcmp.eq.s32.totalorder %v930, 1
  %vm995 = vcmp.eq.s32.totalorder %v931, 1
  %vm996 = vcmp.eq.s32.totalorder %v932, 1
  %vm997 = vcmp.eq.s32.totalorder %v933, 1
  %vm998 = vcmp.eq.s32.totalorder %v934, 1
  %vm999 = vcmp.eq.s32.totalorder %v935, 1
  %vm1000 = vcmp.eq.s32.totalorder %v936, 1
  %vm1001 = vcmp.eq.s32.totalorder %v937, 1
  %vm1002 = vcmp.eq.s32.totalorder %v938, 1
  %vm1003 = vcmp.eq.s32.totalorder %v939, 1
  %vm1004 = vcmp.eq.s32.totalorder %v940, 1
  %vm1005 = vcmp.eq.s32.totalorder %v941, 1
  %vm1006 = vcmp.eq.s32.totalorder %v942, 1
  %vm1007 = vcmp.eq.s32.totalorder %v943, 1
  %vm1008 = vcmp.eq.s32.totalorder %v944, 1
  %vm1009 = vcmp.eq.s32.totalorder %v945, 1
  %vm1010 = vcmp.eq.s32.totalorder %v946, 1
  %vm1011 = vcmp.eq.s32.totalorder %v947, 1
  %vm1012 = vcmp.eq.s32.totalorder %v948, 1
  %vm1013 = vcmp.eq.s32.totalorder %v949, 1
  %vm1014 = vcmp.eq.s32.totalorder %v950, 1
  %vm1015 = vcmp.eq.s32.totalorder %v951, 1
  %vm1016 = vcmp.eq.s32.totalorder %v952, 1
  %vm1017 = vcmp.eq.s32.totalorder %v953, 1
  %vm1018 = vcmp.eq.s32.totalorder %v954, 1
  %vm1019 = vcmp.eq.s32.totalorder %v955, 1
  %vm1020 = vcmp.eq.s32.totalorder %v956, 1
  %vm1021 = vcmp.eq.s32.totalorder %v957, 1
  %vm1022 = vcmp.eq.s32.totalorder %v958, 1
  %vm1023 = vcmp.eq.s32.totalorder %v959, 1
  %vm1024 = vcmp.eq.s32.totalorder %v960, 1
  %vm1025 = vcmp.eq.s32.totalorder %v961, 1
  %vm1026 = vcmp.eq.s32.totalorder %v962, 1
  %vm1027 = vcmp.eq.s32.totalorder %v963, 1
  %vm1028 = vcmp.eq.s32.totalorder %v964, 1
  %vm1029 = vcmp.eq.s32.totalorder %v965, 1
  %vm1030 = vcmp.eq.s32.totalorder %v966, 1
  %vm1031 = vcmp.eq.s32.totalorder %v967, 1
  %vm1032 = vcmp.eq.s32.totalorder %v968, 1
  %vm1033 = vcmp.eq.s32.totalorder %v969, 1
  %vm1034 = vcmp.eq.s32.totalorder %v970, 1
  %vm1035 = vcmp.eq.s32.totalorder %v971, 1
  %vm1036 = vcmp.eq.s32.totalorder %v972, 1
  %vm1037 = vcmp.eq.s32.totalorder %v973, 1
  %vm1038 = vcmp.eq.s32.totalorder %v974, 1
  %vm1039 = vcmp.eq.s32.totalorder %v975, 1
  %vm1040 = vcmp.eq.s32.totalorder %v976, 1
  %vm1041 = vcmp.eq.s32.totalorder %v977, 1
  %vm1042 = vcmp.eq.s32.totalorder %v978, 1
  %vm1043 = vcmp.eq.s32.totalorder %v979, 1
  %vm1044 = vcmp.eq.s32.totalorder %v980, 1
  %vm1045 = vcmp.eq.s32.totalorder %v981, 1
  %vm1046 = vcmp.eq.s32.totalorder %v982, 1
  %vm1047 = vcmp.eq.s32.totalorder %v983, 1
  %vm1048 = vcmp.eq.s32.totalorder %v984, 1
  %vm1049 = vcmp.eq.s32.totalorder %v985, 1
  %vm1050 = vcmp.eq.s32.totalorder %v986, 1
  %v1051 = vsel %vm987, %v859, 0.0
  %v1052 = vsel %vm988, %v860, 0.0
  %v1053 = vsel %vm989, %v861, 0.0
  %v1054 = vsel %vm990, %v862, 0.0
  %v1055 = vsel %vm991, %v863, 0.0
  %v1056 = vsel %vm992, %v864, 0.0
  %v1057 = vsel %vm993, %v865, 0.0
  %v1058 = vsel %vm994, %v866, 0.0
  %v1059 = vsel %vm995, %v867, 0.0
  %v1060 = vsel %vm996, %v868, 0.0
  %v1061 = vsel %vm997, %v869, 0.0
  %v1062 = vsel %vm998, %v870, 0.0
  %v1063 = vsel %vm999, %v871, 0.0
  %v1064 = vsel %vm1000, %v872, 0.0
  %v1065 = vsel %vm1001, %v873, 0.0
  %v1066 = vsel %vm1002, %v874, 0.0
  %v1067 = vsel %vm1003, %v875, 0.0
  %v1068 = vsel %vm1004, %v876, 0.0
  %v1069 = vsel %vm1005, %v877, 0.0
  %v1070 = vsel %vm1006, %v878, 0.0
  %v1071 = vsel %vm1007, %v879, 0.0
  %v1072 = vsel %vm1008, %v880, 0.0
  %v1073 = vsel %vm1009, %v881, 0.0
  %v1074 = vsel %vm1010, %v882, 0.0
  %v1075 = vsel %vm1011, %v883, 0.0
  %v1076 = vsel %vm1012, %v884, 0.0
  %v1077 = vsel %vm1013, %v885, 0.0
  %v1078 = vsel %vm1014, %v886, 0.0
  %v1079 = vsel %vm1015, %v887, 0.0
  %v1080 = vsel %vm1016, %v888, 0.0
  %v1081 = vsel %vm1017, %v889, 0.0
  %v1082 = vsel %vm1018, %v890, 0.0
  %v1083 = vsel %vm1019, %v891, 0.0
  %v1084 = vsel %vm1020, %v892, 0.0
  %v1085 = vsel %vm1021, %v893, 0.0
  %v1086 = vsel %vm1022, %v894, 0.0
  %v1087 = vsel %vm1023, %v895, 0.0
  %v1088 = vsel %vm1024, %v896, 0.0
  %v1089 = vsel %vm1025, %v897, 0.0
  %v1090 = vsel %vm1026, %v898, 0.0
  %v1091 = vsel %vm1027, %v899, 0.0
  %v1092 = vsel %vm1028, %v900, 0.0
  %v1093 = vsel %vm1029, %v901, 0.0
  %v1094 = vsel %vm1030, %v902, 0.0
  %v1095 = vsel %vm1031, %v903, 0.0
  %v1096 = vsel %vm1032, %v904, 0.0
  %v1097 = vsel %vm1033, %v905, 0.0
  %v1098 = vsel %vm1034, %v906, 0.0
  %v1099 = vsel %vm1035, %v907, 0.0
  %v1100 = vsel %vm1036, %v908, 0.0
  %v1101 = vsel %vm1037, %v909, 0.0
  %v1102 = vsel %vm1038, %v910, 0.0
  %v1103 = vsel %vm1039, %v911, 0.0
  %v1104 = vsel %vm1040, %v912, 0.0
  %v1105 = vsel %vm1041, %v913, 0.0
  %v1106 = vsel %vm1042, %v914, 0.0
  %v1107 = vsel %vm1043, %v915, 0.0
  %v1108 = vsel %vm1044, %v916, 0.0
  %v1109 = vsel %vm1045, %v917, 0.0
  %v1110 = vsel %vm1046, %v918, 0.0
  %v1111 = vsel %vm1047, %v919, 0.0
  %v1112 = vsel %vm1048, %v920, 0.0
  %v1113 = vsel %vm1049, %v921, 0.0
  %v1114 = vsel %vm1050, %v922, 0.0
  %v1115 = vmul.f32 %v1051, %v1051
  %v1116 = vmul.f32 %v1052, %v1052
  %v1117 = vmul.f32 %v1053, %v1053
  %v1118 = vmul.f32 %v1054, %v1054
  %v1119 = vmul.f32 %v1055, %v1055
  %v1120 = vmul.f32 %v1056, %v1056
  %v1121 = vmul.f32 %v1057, %v1057
  %v1122 = vmul.f32 %v1058, %v1058
  %v1123 = vmul.f32 %v1059, %v1059
  %v1124 = vmul.f32 %v1060, %v1060
  %v1125 = vmul.f32 %v1061, %v1061
  %v1126 = vmul.f32 %v1062, %v1062
  %v1127 = vmul.f32 %v1063, %v1063
  %v1128 = vmul.f32 %v1064, %v1064
  %v1129 = vmul.f32 %v1065, %v1065
  %v1130 = vmul.f32 %v1066, %v1066
  %v1131 = vmul.f32 %v1067, %v1067
  %v1132 = vmul.f32 %v1068, %v1068
  %v1133 = vmul.f32 %v1069, %v1069
  %v1134 = vmul.f32 %v1070, %v1070
  %v1135 = vmul.f32 %v1071, %v1071
  %v1136 = vmul.f32 %v1072, %v1072
  %v1137 = vmul.f32 %v1073, %v1073
  %v1138 = vmul.f32 %v1074, %v1074
  %v1139 = vmul.f32 %v1075, %v1075
  %v1140 = vmul.f32 %v1076, %v1076
  %v1141 = vmul.f32 %v1077, %v1077
  %v1142 = vmul.f32 %v1078, %v1078
  %v1143 = vmul.f32 %v1079, %v1079
  %v1144 = vmul.f32 %v1080, %v1080
  %v1145 = vmul.f32 %v1081, %v1081
  %v1146 = vmul.f32 %v1082, %v1082
  %v1147 = vmul.f32 %v1083, %v1083
  %v1148 = vmul.f32 %v1084, %v1084
  %v1149 = vmul.f32 %v1085, %v1085
  %v1150 = vmul.f32 %v1086, %v1086
  %v1151 = vmul.f32 %v1087, %v1087
  %v1152 = vmul.f32 %v1088, %v1088
  %v1153 = vmul.f32 %v1089, %v1089
  %v1154 = vmul.f32 %v1090, %v1090
  %v1155 = vmul.f32 %v1091, %v1091
  %v1156 = vmul.f32 %v1092, %v1092
  %v1157 = vmul.f32 %v1093, %v1093
  %v1158 = vmul.f32 %v1094, %v1094
  %v1159 = vmul.f32 %v1095, %v1095
  %v1160 = vmul.f32 %v1096, %v1096
  %v1161 = vmul.f32 %v1097, %v1097
  %v1162 = vmul.f32 %v1098, %v1098
  %v1163 = vmul.f32 %v1099, %v1099
  %v1164 = vmul.f32 %v1100, %v1100
  %v1165 = vmul.f32 %v1101, %v1101
  %v1166 = vmul.f32 %v1102, %v1102
  %v1167 = vmul.f32 %v1103, %v1103
  %v1168 = vmul.f32 %v1104, %v1104
  %v1169 = vmul.f32 %v1105, %v1105
  %v1170 = vmul.f32 %v1106, %v1106
  %v1171 = vmul.f32 %v1107, %v1107
  %v1172 = vmul.f32 %v1108, %v1108
  %v1173 = vmul.f32 %v1109, %v1109
  %v1174 = vmul.f32 %v1110, %v1110
  %v1175 = vmul.f32 %v1111, %v1111
  %v1176 = vmul.f32 %v1112, %v1112
  %v1177 = vmul.f32 %v1113, %v1113
  %v1178 = vmul.f32 %v1114, %v1114
  %v1179 = vsel %vm562, %v1115, 0.0
  %v1180 = vsel %vm562, %v1116, 0.0
  %v1181 = vadd.f32 %v1179, %v1180
  %v1182 = vsel %vm562, %v1117, 0.0
  %v1183 = vadd.f32 %v1181, %v1182
  %v1184 = vsel %vm562, %v1118, 0.0
  %v1185 = vadd.f32 %v1183, %v1184
  %v1186 = vsel %vm562, %v1119, 0.0
  %v1187 = vadd.f32 %v1185, %v1186
  %v1188 = vsel %vm562, %v1120, 0.0
  %v1189 = vadd.f32 %v1187, %v1188
  %v1190 = vsel %vm562, %v1121, 0.0
  %v1191 = vadd.f32 %v1189, %v1190
  %v1192 = vsel %vm562, %v1122, 0.0
  %v1193 = vadd.f32 %v1191, %v1192
  %v1194 = vsel %vm562, %v1123, 0.0
  %v1195 = vadd.f32 %v1193, %v1194
  %v1196 = vsel %vm562, %v1124, 0.0
  %v1197 = vadd.f32 %v1195, %v1196
  %v1198 = vsel %vm562, %v1125, 0.0
  %v1199 = vadd.f32 %v1197, %v1198
  %v1200 = vsel %vm562, %v1126, 0.0
  %v1201 = vadd.f32 %v1199, %v1200
  %v1202 = vsel %vm562, %v1127, 0.0
  %v1203 = vadd.f32 %v1201, %v1202
  %v1204 = vsel %vm562, %v1128, 0.0
  %v1205 = vadd.f32 %v1203, %v1204
  %v1206 = vsel %vm562, %v1129, 0.0
  %v1207 = vadd.f32 %v1205, %v1206
  %v1208 = vsel %vm562, %v1130, 0.0
  %v1209 = vadd.f32 %v1207, %v1208
  %v1210 = vsel %vm562, %v1131, 0.0
  %v1211 = vadd.f32 %v1209, %v1210
  %v1212 = vsel %vm562, %v1132, 0.0
  %v1213 = vadd.f32 %v1211, %v1212
  %v1214 = vsel %vm562, %v1133, 0.0
  %v1215 = vadd.f32 %v1213, %v1214
  %v1216 = vsel %vm562, %v1134, 0.0
  %v1217 = vadd.f32 %v1215, %v1216
  %v1218 = vsel %vm562, %v1135, 0.0
  %v1219 = vadd.f32 %v1217, %v1218
  %v1220 = vsel %vm562, %v1136, 0.0
  %v1221 = vadd.f32 %v1219, %v1220
  %v1222 = vsel %vm562, %v1137, 0.0
  %v1223 = vadd.f32 %v1221, %v1222
  %v1224 = vsel %vm562, %v1138, 0.0
  %v1225 = vadd.f32 %v1223, %v1224
  %v1226 = vsel %vm562, %v1139, 0.0
  %v1227 = vadd.f32 %v1225, %v1226
  %v1228 = vsel %vm562, %v1140, 0.0
  %v1229 = vadd.f32 %v1227, %v1228
  %v1230 = vsel %vm562, %v1141, 0.0
  %v1231 = vadd.f32 %v1229, %v1230
  %v1232 = vsel %vm562, %v1142, 0.0
  %v1233 = vadd.f32 %v1231, %v1232
  %v1234 = vsel %vm562, %v1143, 0.0
  %v1235 = vadd.f32 %v1233, %v1234
  %v1236 = vsel %vm562, %v1144, 0.0
  %v1237 = vadd.f32 %v1235, %v1236
  %v1238 = vsel %vm562, %v1145, 0.0
  %v1239 = vadd.f32 %v1237, %v1238
  %v1240 = vsel %vm562, %v1146, 0.0
  %v1241 = vadd.f32 %v1239, %v1240
  %v1242 = vsel %vm562, %v1147, 0.0
  %v1243 = vadd.f32 %v1241, %v1242
  %v1244 = vsel %vm562, %v1148, 0.0
  %v1245 = vadd.f32 %v1243, %v1244
  %v1246 = vsel %vm562, %v1149, 0.0
  %v1247 = vadd.f32 %v1245, %v1246
  %v1248 = vsel %vm562, %v1150, 0.0
  %v1249 = vadd.f32 %v1247, %v1248
  %v1250 = vsel %vm562, %v1151, 0.0
  %v1251 = vadd.f32 %v1249, %v1250
  %v1252 = vsel %vm562, %v1152, 0.0
  %v1253 = vadd.f32 %v1251, %v1252
  %v1254 = vsel %vm562, %v1153, 0.0
  %v1255 = vadd.f32 %v1253, %v1254
  %v1256 = vsel %vm562, %v1154, 0.0
  %v1257 = vadd.f32 %v1255, %v1256
  %v1258 = vsel %vm562, %v1155, 0.0
  %v1259 = vadd.f32 %v1257, %v1258
  %v1260 = vsel %vm562, %v1156, 0.0
  %v1261 = vadd.f32 %v1259, %v1260
  %v1262 = vsel %vm562, %v1157, 0.0
  %v1263 = vadd.f32 %v1261, %v1262
  %v1264 = vsel %vm562, %v1158, 0.0
  %v1265 = vadd.f32 %v1263, %v1264
  %v1266 = vsel %vm562, %v1159, 0.0
  %v1267 = vadd.f32 %v1265, %v1266
  %v1268 = vsel %vm562, %v1160, 0.0
  %v1269 = vadd.f32 %v1267, %v1268
  %v1270 = vsel %vm562, %v1161, 0.0
  %v1271 = vadd.f32 %v1269, %v1270
  %v1272 = vsel %vm562, %v1162, 0.0
  %v1273 = vadd.f32 %v1271, %v1272
  %v1274 = vsel %vm562, %v1163, 0.0
  %v1275 = vadd.f32 %v1273, %v1274
  %v1276 = vsel %vm562, %v1164, 0.0
  %v1277 = vadd.f32 %v1275, %v1276
  %v1278 = vsel %vm562, %v1165, 0.0
  %v1279 = vadd.f32 %v1277, %v1278
  %v1280 = vsel %vm562, %v1166, 0.0
  %v1281 = vadd.f32 %v1279, %v1280
  %v1282 = vsel %vm562, %v1167, 0.0
  %v1283 = vadd.f32 %v1281, %v1282
  %v1284 = vsel %vm562, %v1168, 0.0
  %v1285 = vadd.f32 %v1283, %v1284
  %v1286 = vsel %vm562, %v1169, 0.0
  %v1287 = vadd.f32 %v1285, %v1286
  %v1288 = vsel %vm562, %v1170, 0.0
  %v1289 = vadd.f32 %v1287, %v1288
  %v1290 = vsel %vm562, %v1171, 0.0
  %v1291 = vadd.f32 %v1289, %v1290
  %v1292 = vsel %vm562, %v1172, 0.0
  %v1293 = vadd.f32 %v1291, %v1292
  %v1294 = vsel %vm562, %v1173, 0.0
  %v1295 = vadd.f32 %v1293, %v1294
  %v1296 = vsel %vm562, %v1174, 0.0
  %v1297 = vadd.f32 %v1295, %v1296
  %v1298 = vsel %vm562, %v1175, 0.0
  %v1299 = vadd.f32 %v1297, %v1298
  %v1300 = vsel %vm562, %v1176, 0.0
  %v1301 = vadd.f32 %v1299, %v1300
  %v1302 = vsel %vm562, %v1177, 0.0
  %v1303 = vadd.f32 %v1301, %v1302
  %v1304 = vsel %vm562, %v1178, 0.0
  %v1305 = vadd.f32 %v1303, %v1304
  %v1306 = vrot.slane %v1305, 4
  %v1307 = vadd.f32 %v1305, %v1306
  %v1308 = vrot.slane %v1307, 2
  %v1309 = vadd.f32 %v1307, %v1308
  %v1310 = vrot.slane %v1309, 1
  %v1311 = vadd.f32 %v1309, %v1310
  %1313 = vrot.lane.b32.xlu0 %v1311, 120
  %v1314 = vpop.permute.xlu0 %1313
  %v1316 = vadd.f32 %v1311, %v1314
  %1317 = vrot.lane.b32.xlu0 %v1311, 112
  %v1318 = vpop.permute.xlu0 %1317
  %v1320 = vadd.f32 %v1316, %v1318
  %1321 = vrot.lane.b32.xlu0 %v1311, 104
  %v1322 = vpop.permute.xlu0 %1321
  %v1324 = vadd.f32 %v1320, %v1322
  %v1325 = vmul.f32 %v1324, 0.00048828125
  %v1326 = vld [vmem:[%s2] sm:$0x1]
  %v1327 = vadd.f32 %v1325, 1e-05
  %v1328 = vrsqrt.pop %v1327
  %v1329 = vmul.f32 %v1326, %v1328
  %v1330 = vld [vmem:[%s3] sm:$0x1]
  %v1331 = vmul.f32 %v709, %v1329
  %v1332 = vsub.f32 %v1330, %v1331
  %v1334 = vlaneseq
  %v1335 = vshrl.u32 %v1334, 7
  %v1336 = vsub.s32 0, %v1335
  %v1337 = vrot.slane %v1329, %v1336
  %1338 = vrot.lane.b32.xlu0 %v1337, 8
  %v1339 = vpop.permute.xlu0 %1338
  %1341 = vrot.lane.b32.xlu0 %v1337, 16
  %v1342 = vpop.permute.xlu0 %1341
  %1344 = vrot.lane.b32.xlu0 %v1337, 24
  %v1345 = vpop.permute.xlu0 %1344
  %v1347 = vsel %vm720, %v1329, %v1339
  %v1348 = vsel %vm722, %v1347, %v1342
  %v1349 = vsel %vm724, %v1348, %v1345
  %v1351 = vlaneseq
  %v1352 = vshrl.u32 %v1351, 7
  %v1353 = vsub.s32 0, %v1352
  %v1354 = vrot.slane %v1332, %v1353
  %1355 = vrot.lane.b32.xlu0 %v1354, 8
  %v1356 = vpop.permute.xlu0 %1355
  %1358 = vrot.lane.b32.xlu0 %v1354, 16
  %v1359 = vpop.permute.xlu0 %1358
  %1361 = vrot.lane.b32.xlu0 %v1354, 24
  %v1362 = vpop.permute.xlu0 %1361
  %v1364 = vsel %vm720, %v1332, %v1356
  %v1365 = vsel %vm722, %v1364, %v1359
  %v1366 = vsel %vm724, %v1365, %v1362
  %v1367 = vlaneseq
  %v1368 = vshrl.u32 %v1367, 7
  %v1369 = vsub.s32 0, %v1368
  %v1370 = vrot.slane %v1349, %v1369
  %v1371 = vmul.f32 %v244, %v1370
  %v1372 = vmul.f32 %v249, %v1370
  %v1373 = vmul.f32 %v254, %v1370
  %v1374 = vmul.f32 %v259, %v1370
  %v1375 = vmul.f32 %v264, %v1370
  %v1376 = vmul.f32 %v269, %v1370
  %v1377 = vmul.f32 %v274, %v1370
  %v1378 = vmul.f32 %v279, %v1370
  %v1379 = vmul.f32 %v284, %v1370
  %v1380 = vmul.f32 %v289, %v1370
  %v1381 = vmul.f32 %v294, %v1370
  %v1382 = vmul.f32 %v299, %v1370
  %v1383 = vmul.f32 %v304, %v1370
  %v1384 = vmul.f32 %v309, %v1370
  %v1385 = vmul.f32 %v314, %v1370
  %v1386 = vmul.f32 %v319, %v1370
  %v1387 = vmul.f32 %v324, %v1370
  %v1388 = vmul.f32 %v329, %v1370
  %v1389 = vmul.f32 %v334, %v1370
  %v1390 = vmul.f32 %v339, %v1370
  %v1391 = vmul.f32 %v344, %v1370
  %v1392 = vmul.f32 %v349, %v1370
  %v1393 = vmul.f32 %v354, %v1370
  %v1394 = vmul.f32 %v359, %v1370
  %v1395 = vmul.f32 %v364, %v1370
  %v1396 = vmul.f32 %v369, %v1370
  %v1397 = vmul.f32 %v374, %v1370
  %v1398 = vmul.f32 %v379, %v1370
  %v1399 = vmul.f32 %v384, %v1370
  %v1400 = vmul.f32 %v389, %v1370
  %v1401 = vmul.f32 %v394, %v1370
  %v1402 = vmul.f32 %v399, %v1370
  %v1403 = vmul.f32 %v404, %v1370
  %v1404 = vmul.f32 %v409, %v1370
  %v1405 = vmul.f32 %v414, %v1370
  %v1406 = vmul.f32 %v419, %v1370
  %v1407 = vmul.f32 %v424, %v1370
  %v1408 = vmul.f32 %v429, %v1370
  %v1409 = vmul.f32 %v434, %v1370
  %v1410 = vmul.f32 %v439, %v1370
  %v1411 = vmul.f32 %v444, %v1370
  %v1412 = vmul.f32 %v449, %v1370
  %v1413 = vmul.f32 %v454, %v1370
  %v1414 = vmul.f32 %v459, %v1370
  %v1415 = vmul.f32 %v464, %v1370
  %v1416 = vmul.f32 %v469, %v1370
  %v1417 = vmul.f32 %v474, %v1370
  %v1418 = vmul.f32 %v479, %v1370
  %v1419 = vmul.f32 %v484, %v1370
  %v1420 = vmul.f32 %v489, %v1370
  %v1421 = vmul.f32 %v494, %v1370
  %v1422 = vmul.f32 %v499, %v1370
  %v1423 = vmul.f32 %v504, %v1370
  %v1424 = vmul.f32 %v509, %v1370
  %v1425 = vmul.f32 %v514, %v1370
  %v1426 = vmul.f32 %v519, %v1370
  %v1427 = vmul.f32 %v524, %v1370
  %v1428 = vmul.f32 %v529, %v1370
  %v1429 = vmul.f32 %v534, %v1370
  %v1430 = vmul.f32 %v539, %v1370
  %v1431 = vmul.f32 %v544, %v1370
  %v1432 = vmul.f32 %v549, %v1370
  %v1433 = vmul.f32 %v554, %v1370
  %v1434 = vmul.f32 %v559, %v1370
  %v1435 = vlaneseq
  %v1436 = vshrl.u32 %v1435, 7
  %v1437 = vsub.s32 0, %v1436
  %v1438 = vrot.slane %v1366, %v1437
  %v1439 = vadd.f32 %v1371, %v1438
  %v1440 = vadd.f32 %v1372, %v1438
  %v1441 = vadd.f32 %v1373, %v1438
  %v1442 = vadd.f32 %v1374, %v1438
  %v1443 = vadd.f32 %v1375, %v1438
  %v1444 = vadd.f32 %v1376, %v1438
  %v1445 = vadd.f32 %v1377, %v1438
  %v1446 = vadd.f32 %v1378, %v1438
  %v1447 = vadd.f32 %v1379, %v1438
  %v1448 = vadd.f32 %v1380, %v1438
  %v1449 = vadd.f32 %v1381, %v1438
  %v1450 = vadd.f32 %v1382, %v1438
  %v1451 = vadd.f32 %v1383, %v1438
  %v1452 = vadd.f32 %v1384, %v1438
  %v1453 = vadd.f32 %v1385, %v1438
  %v1454 = vadd.f32 %v1386, %v1438
  %v1455 = vadd.f32 %v1387, %v1438
  %v1456 = vadd.f32 %v1388, %v1438
  %v1457 = vadd.f32 %v1389, %v1438
  %v1458 = vadd.f32 %v1390, %v1438
  %v1459 = vadd.f32 %v1391, %v1438
  %v1460 = vadd.f32 %v1392, %v1438
  %v1461 = vadd.f32 %v1393, %v1438
  %v1462 = vadd.f32 %v1394, %v1438
  %v1463 = vadd.f32 %v1395, %v1438
  %v1464 = vadd.f32 %v1396, %v1438
  %v1465 = vadd.f32 %v1397, %v1438
  %v1466 = vadd.f32 %v1398, %v1438
  %v1467 = vadd.f32 %v1399, %v1438
  %v1468 = vadd.f32 %v1400, %v1438
  %v1469 = vadd.f32 %v1401, %v1438
  %v1470 = vadd.f32 %v1402, %v1438
  %v1471 = vadd.f32 %v1403, %v1438
  %v1472 = vadd.f32 %v1404, %v1438
  %v1473 = vadd.f32 %v1405, %v1438
  %v1474 = vadd.f32 %v1406, %v1438
  %v1475 = vadd.f32 %v1407, %v1438
  %v1476 = vadd.f32 %v1408, %v1438
  %v1477 = vadd.f32 %v1409, %v1438
  %v1478 = vadd.f32 %v1410, %v1438
  %v1479 = vadd.f32 %v1411, %v1438
  %v1480 = vadd.f32 %v1412, %v1438
  %v1481 = vadd.f32 %v1413, %v1438
  %v1482 = vadd.f32 %v1414, %v1438
  %v1483 = vadd.f32 %v1415, %v1438
  %v1484 = vadd.f32 %v1416, %v1438
  %v1485 = vadd.f32 %v1417, %v1438
  %v1486 = vadd.f32 %v1418, %v1438
  %v1487 = vadd.f32 %v1419, %v1438
  %v1488 = vadd.f32 %v1420, %v1438
  %v1489 = vadd.f32 %v1421, %v1438
  %v1490 = vadd.f32 %v1422, %v1438
  %v1491 = vadd.f32 %v1423, %v1438
  %v1492 = vadd.f32 %v1424, %v1438
  %v1493 = vadd.f32 %v1425, %v1438
  %v1494 = vadd.f32 %v1426, %v1438
  %v1495 = vadd.f32 %v1427, %v1438
  %v1496 = vadd.f32 %v1428, %v1438
  %v1497 = vadd.f32 %v1429, %v1438
  %v1498 = vadd.f32 %v1430, %v1438
  %v1499 = vadd.f32 %v1431, %v1438
  %v1500 = vadd.f32 %v1432, %v1438
  %v1501 = vadd.f32 %v1433, %v1438
  %v1502 = vadd.f32 %v1434, %v1438
  %v1503 = vmax.f32 %v1439, 0.0
  %v1504 = vmax.f32 %v1440, 0.0
  %v1505 = vmax.f32 %v1441, 0.0
  %v1506 = vmax.f32 %v1442, 0.0
  %v1507 = vmax.f32 %v1443, 0.0
  %v1508 = vmax.f32 %v1444, 0.0
  %v1509 = vmax.f32 %v1445, 0.0
  %v1510 = vmax.f32 %v1446, 0.0
  %v1511 = vmax.f32 %v1447, 0.0
  %v1512 = vmax.f32 %v1448, 0.0
  %v1513 = vmax.f32 %v1449, 0.0
  %v1514 = vmax.f32 %v1450, 0.0
  %v1515 = vmax.f32 %v1451, 0.0
  %v1516 = vmax.f32 %v1452, 0.0
  %v1517 = vmax.f32 %v1453, 0.0
  %v1518 = vmax.f32 %v1454, 0.0
  %v1519 = vmax.f32 %v1455, 0.0
  %v1520 = vmax.f32 %v1456, 0.0
  %v1521 = vmax.f32 %v1457, 0.0
  %v1522 = vmax.f32 %v1458, 0.0
  %v1523 = vmax.f32 %v1459, 0.0
  %v1524 = vmax.f32 %v1460, 0.0
  %v1525 = vmax.f32 %v1461, 0.0
  %v1526 = vmax.f32 %v1462, 0.0
  %v1527 = vmax.f32 %v1463, 0.0
  %v1528 = vmax.f32 %v1464, 0.0
  %v1529 = vmax.f32 %v1465, 0.0
  %v1530 = vmax.f32 %v1466, 0.0
  %v1531 = vmax.f32 %v1467, 0.0
  %v1532 = vmax.f32 %v1468, 0.0
  %v1533 = vmax.f32 %v1469, 0.0
  %v1534 = vmax.f32 %v1470, 0.0
  %v1535 = vmax.f32 %v1471, 0.0
  %v1536 = vmax.f32 %v1472, 0.0
  %v1537 = vmax.f32 %v1473, 0.0
  %v1538 = vmax.f32 %v1474, 0.0
  %v1539 = vmax.f32 %v1475, 0.0
  %v1540 = vmax.f32 %v1476, 0.0
  %v1541 = vmax.f32 %v1477, 0.0
  %v1542 = vmax.f32 %v1478, 0.0
  %v1543 = vmax.f32 %v1479, 0.0
  %v1544 = vmax.f32 %v1480, 0.0
  %v1545 = vmax.f32 %v1481, 0.0
  %v1546 = vmax.f32 %v1482, 0.0
  %v1547 = vmax.f32 %v1483, 0.0
  %v1548 = vmax.f32 %v1484, 0.0
  %v1549 = vmax.f32 %v1485, 0.0
  %v1550 = vmax.f32 %v1486, 0.0
  %v1551 = vmax.f32 %v1487, 0.0
  %v1552 = vmax.f32 %v1488, 0.0
  %v1553 = vmax.f32 %v1489, 0.0
  %v1554 = vmax.f32 %v1490, 0.0
  %v1555 = vmax.f32 %v1491, 0.0
  %v1556 = vmax.f32 %v1492, 0.0
  %v1557 = vmax.f32 %v1493, 0.0
  %v1558 = vmax.f32 %v1494, 0.0
  %v1559 = vmax.f32 %v1495, 0.0
  %v1560 = vmax.f32 %v1496, 0.0
  %v1561 = vmax.f32 %v1497, 0.0
  %v1562 = vmax.f32 %v1498, 0.0
  %v1563 = vmax.f32 %v1499, 0.0
  %v1564 = vmax.f32 %v1500, 0.0
  %v1565 = vmax.f32 %v1501, 0.0
  %v1566 = vmax.f32 %v1502, 0.0
  %1567 = vst.msk [vmem:[%s4] sm:$0xff] %vm562, %v1503
  %1568 = vst.msk [vmem:[%s4 + $0x8] sm:$0xff] %vm562, %v1504
  %1569 = vst.msk [vmem:[%s4 + $0x10] sm:$0xff] %vm562, %v1505
  %1570 = vst.msk [vmem:[%s4 + $0x18] sm:$0xff] %vm562, %v1506
  %1571 = vst.msk [vmem:[%s4 + $0x20] sm:$0xff] %vm562, %v1507
  %1572 = vst.msk [vmem:[%s4 + $0x28] sm:$0xff] %vm562, %v1508
  %1573 = vst.msk [vmem:[%s4 + $0x30] sm:$0xff] %vm562, %v1509
  %1574 = vst.msk [vmem:[%s4 + $0x38] sm:$0xff] %vm562, %v1510
  %1575 = vst.msk [vmem:[%s4 + $0x40] sm:$0xff] %vm562, %v1511
  %1576 = vst.msk [vmem:[%s4 + $0x48] sm:$0xff] %vm562, %v1512
  %1577 = vst.msk [vmem:[%s4 + $0x50] sm:$0xff] %vm562, %v1513
  %1578 = vst.msk [vmem:[%s4 + $0x58] sm:$0xff] %vm562, %v1514
  %1579 = vst.msk [vmem:[%s4 + $0x60] sm:$0xff] %vm562, %v1515
  %1580 = vst.msk [vmem:[%s4 + $0x68] sm:$0xff] %vm562, %v1516
  %1581 = vst.msk [vmem:[%s4 + $0x70] sm:$0xff] %vm562, %v1517
  %1582 = vst.msk [vmem:[%s4 + $0x78] sm:$0xff] %vm562, %v1518
  %1583 = vst.msk [vmem:[%s4 + $0x80] sm:$0xff] %vm562, %v1519
  %1584 = vst.msk [vmem:[%s4 + $0x88] sm:$0xff] %vm562, %v1520
  %1585 = vst.msk [vmem:[%s4 + $0x90] sm:$0xff] %vm562, %v1521
  %1586 = vst.msk [vmem:[%s4 + $0x98] sm:$0xff] %vm562, %v1522
  %1587 = vst.msk [vmem:[%s4 + $0xa0] sm:$0xff] %vm562, %v1523
  %1588 = vst.msk [vmem:[%s4 + $0xa8] sm:$0xff] %vm562, %v1524
  %1589 = vst.msk [vmem:[%s4 + $0xb0] sm:$0xff] %vm562, %v1525
  %1590 = vst.msk [vmem:[%s4 + $0xb8] sm:$0xff] %vm562, %v1526
  %1591 = vst.msk [vmem:[%s4 + $0xc0] sm:$0xff] %vm562, %v1527
  %1592 = vst.msk [vmem:[%s4 + $0xc8] sm:$0xff] %vm562, %v1528
  %1593 = vst.msk [vmem:[%s4 + $0xd0] sm:$0xff] %vm562, %v1529
  %1594 = vst.msk [vmem:[%s4 + $0xd8] sm:$0xff] %vm562, %v1530
  %1595 = vst.msk [vmem:[%s4 + $0xe0] sm:$0xff] %vm562, %v1531
  %1596 = vst.msk [vmem:[%s4 + $0xe8] sm:$0xff] %vm562, %v1532
  %1597 = vst.msk [vmem:[%s4 + $0xf0] sm:$0xff] %vm562, %v1533
  %1598 = vst.msk [vmem:[%s4 + $0xf8] sm:$0xff] %vm562, %v1534
  %1599 = vst.msk [vmem:[%s4 + $0x100] sm:$0xff] %vm562, %v1535
  %1600 = vst.msk [vmem:[%s4 + $0x108] sm:$0xff] %vm562, %v1536
  %1601 = vst.msk [vmem:[%s4 + $0x110] sm:$0xff] %vm562, %v1537
  %1602 = vst.msk [vmem:[%s4 + $0x118] sm:$0xff] %vm562, %v1538
  %1603 = vst.msk [vmem:[%s4 + $0x120] sm:$0xff] %vm562, %v1539
  %1604 = vst.msk [vmem:[%s4 + $0x128] sm:$0xff] %vm562, %v1540
  %1605 = vst.msk [vmem:[%s4 + $0x130] sm:$0xff] %vm562, %v1541
  %1606 = vst.msk [vmem:[%s4 + $0x138] sm:$0xff] %vm562, %v1542
  %1607 = vst.msk [vmem:[%s4 + $0x140] sm:$0xff] %vm562, %v1543
  %1608 = vst.msk [vmem:[%s4 + $0x148] sm:$0xff] %vm562, %v1544
  %1609 = vst.msk [vmem:[%s4 + $0x150] sm:$0xff] %vm562, %v1545
  %1610 = vst.msk [vmem:[%s4 + $0x158] sm:$0xff] %vm562, %v1546
  %1611 = vst.msk [vmem:[%s4 + $0x160] sm:$0xff] %vm562, %v1547
  %1612 = vst.msk [vmem:[%s4 + $0x168] sm:$0xff] %vm562, %v1548
  %1613 = vst.msk [vmem:[%s4 + $0x170] sm:$0xff] %vm562, %v1549
  %1614 = vst.msk [vmem:[%s4 + $0x178] sm:$0xff] %vm562, %v1550
  %1615 = vst.msk [vmem:[%s4 + $0x180] sm:$0xff] %vm562, %v1551
  %1616 = vst.msk [vmem:[%s4 + $0x188] sm:$0xff] %vm562, %v1552
  %1617 = vst.msk [vmem:[%s4 + $0x190] sm:$0xff] %vm562, %v1553
  %1618 = vst.msk [vmem:[%s4 + $0x198] sm:$0xff] %vm562, %v1554
  %1619 = vst.msk [vmem:[%s4 + $0x1a0] sm:$0xff] %vm562, %v1555
  %1620 = vst.msk [vmem:[%s4 + $0x1a8] sm:$0xff] %vm562, %v1556
  %1621 = vst.msk [vmem:[%s4 + $0x1b0] sm:$0xff] %vm562, %v1557
  %1622 = vst.msk [vmem:[%s4 + $0x1b8] sm:$0xff] %vm562, %v1558
  %1623 = vst.msk [vmem:[%s4 + $0x1c0] sm:$0xff] %vm562, %v1559
  %1624 = vst.msk [vmem:[%s4 + $0x1c8] sm:$0xff] %vm562, %v1560
  %1625 = vst.msk [vmem:[%s4 + $0x1d0] sm:$0xff] %vm562, %v1561
  %1626 = vst.msk [vmem:[%s4 + $0x1d8] sm:$0xff] %vm562, %v1562
  %1627 = vst.msk [vmem:[%s4 + $0x1e0] sm:$0xff] %vm562, %v1563
  %1628 = vst.msk [vmem:[%s4 + $0x1e8] sm:$0xff] %vm562, %v1564
  %1629 = vst.msk [vmem:[%s4 + $0x1f0] sm:$0xff] %vm562, %v1565
  %1630 = vst.msk [vmem:[%s4 + $0x1f8] sm:$0xff] %vm562, %v1566
  // Predicated region
  $region18: #{generator_forward.8} parent=0 // pred_check
    _
  $region19: #{generator_forward.8} parent=0 // pred_check_branch
    %1632 = sbr.rel (0) target = $region21
  $region20: #{generator_forward.8} parent=0 // pred_region
    _
  $region21: #{generator_forward.8} parent=0 // pred_fallthru
    _
  // Predicated region
  $region22: #{generator_forward.8} parent=0 // pred_check
    _
  $region23: #{generator_forward.8} parent=0 // pred_check_branch
    %1634 = sbr.rel (0) target = $region25
  $region24: #{generator_forward.8} parent=0 // pred_region
    _
  $region25: #{generator_forward.8} parent=0 // pred_fallthru
    _

// kernel: generator_forward.9
$region0: #{generator_forward.9}
  #allocation0 [shape = 'u32[]', space=smem, size = 0x4, offset = 0x4, fixed_abs, tag = 'smem constant byte address 0x4 - core index']
  #allocation1 [shape = 'u32[144,128]{1,0:T(1,128)}', space=vmem, size = 0x12000, scoped, tag = 'internal scratch']
  %s0 = inlined_call_operand.vmem [shape: f32[8,128], index: 0, kind: input, shape index: {}]
  %s1 = inlined_call_operand.vmem [shape: f32[128,2304], index: 1, kind: input, shape index: {}]
  %s2 = inlined_call_operand.vmem [shape: f32[8,2304], index: 2, kind: output, shape index: {}]
  %s3 = sld [smem:[#allocation0]]
  $region64: #{generator_forward.9} parent=0
    _
  %s5 = ssub.s32 1, %s3
  %s6 = scalar_select 0, %s5, %s3
  $region1: #{generator_forward.9} parent=0
    #allocation2 [shape = 'u8[1179648]{0}', space=vmem, size = 0x120000, scoped, tag = 'input window, operand 1']
    loop: start=0, step=1, limit=4
    $region2: #{generator_forward.9} parent=1 // loop_pre_header
      _
    $region3: #{generator_forward.9} parent=1 // loop_header
      %s8 = sphi 0, %s12
      %p9 = scmp.ge.s32.totalorder %s8, 4
      %s16 = sphi 0, %s16
      %s18 = sphi 0, %s16
      %s19 = sphi 0, %s18
      %s33 = sphi 0, %s19
      %s39 = sphi 0, %s41
      %s42 = sphi 0, %s39
      %s43 = sphi 0, %s42
      %s59 = sphi 0, %s43
      %s65 = sphi 0, %s67
      %s68 = sphi 0, %s65
      %s69 = sphi 0, %s68
      %s85 = sphi 0, %s69
    $region4: #{generator_forward.9} parent=1 // loop_header_branch
      %11 = sbr.rel (%p9) target = $region8
    $region5: #{generator_forward.9} parent=1 // loop_body
      %s13 = ssub.s32 %s8, 1
      %s14 = ssub.s32 %s8, 2
      %s15 = sadd.s32 %s8, 1
      %s17 = sadd.s32 %s16, 1
      %p20 = scmp.eq.s32.totalorder %s8, 1
      %p21 = scmp.ne.s32.totalorder %s16, %s18
      %p22 = scmp.eq.s32.totalorder %s8, 0
      %p23 = por %p21, %p22
      %p24 = scmp.ne.s32.totalorder %s16, %s18
      %p25 = scmp.eq.s32.totalorder %s13, 1
      %p26 = por %p24, %p25
      %p27 = scmp.ne.s32.totalorder %s18, %s19
      %p28 = scmp.eq.s32.totalorder %s13, 0
      %p29 = por %p27, %p28
      %p30 = scmp.ne.s32.totalorder %s18, %s19
      %p31 = scmp.eq.s32.totalorder %s14, 1
      %p32 = por %p30, %p31
      %p34 = scmp.ne.s32.totalorder %s19, %s33
      %p35 = scmp.eq.s32.totalorder %s14, 0
      %p36 = por %p34, %p35
      %s37 = ssub.s32 %s8, %s15
      %p38 = scmp.eq.s32.totalorder %s37, 0
      %s40 = sadd.s32 %s39, 1
      %s41 = scalar_select %p38, %s39, %s40
      %p44 = pneg %p38
      %p45 = scmp.eq.s32.totalorder %s8, 1
      %p46 = por %p44, %p45
      %p47 = scmp.ne.s32.totalorder %s39, %s42
      %p48 = scmp.eq.s32.totalorder %s8, 0
      %p49 = por %p47, %p48
      %p50 = scmp.ne.s32.totalorder %s39, %s42
      %p51 = scmp.eq.s32.totalorder %s13, 1
      %p52 = por %p50, %p51
      %p53 = scmp.ne.s32.totalorder %s42, %s43
      %p54 = scmp.eq.s32.totalorder %s13, 0
      %p55 = por %p53, %p54
      %p56 = scmp.ne.s32.totalorder %s42, %s43
      %p57 = scmp.eq.s32.totalorder %s14, 1
      %p58 = por %p56, %p57
      %p60 = scmp.ne.s32.totalorder %s43, %s59
      %p61 = scmp.eq.s32.totalorder %s14, 0
      %p62 = por %p60, %p61
      %s63 = ssub.s32 %s8, %s15
      %p64 = scmp.eq.s32.totalorder %s63, 0
      %s66 = sadd.s32 %s65, 1
      %s67 = scalar_select %p64, %s65, %s66
      %p70 = pneg %p64
      %p71 = scmp.eq.s32.totalorder %s8, 1
      %p72 = por %p70, %p71
      %p73 = scmp.ne.s32.totalorder %s65, %s68
      %p74 = scmp.eq.s32.totalorder %s8, 0
      %p75 = por %p73, %p74
      %p76 = scmp.ne.s32.totalorder %s65, %s68
      %p77 = scmp.eq.s32.totalorder %s13, 1
      %p78 = por %p76, %p77
      %p79 = scmp.ne.s32.totalorder %s68, %s69
      %p80 = scmp.eq.s32.totalorder %s13, 0
      %p81 = por %p79, %p80
      %p82 = scmp.ne.s32.totalorder %s68, %s69
      %p83 = scmp.eq.s32.totalorder %s14, 1
      %p84 = por %p82, %p83
      %p86 = scmp.ne.s32.totalorder %s69, %s85
      %p87 = scmp.eq.s32.totalorder %s14, 0
      %p88 = por %p86, %p87
      %p89 = scmp.le.s32.totalorder 1, %s8
      %p90 = scmp.lt.s32.totalorder %s8, 3
      %p91 = pnand %p89, %p90
      %p92 = pneg %p91
      // Predicated region
      $region9: #{generator_forward.9} parent=5 // pred_check
        _
      $region10: #{generator_forward.9} parent=5 // pred_check_branch
        %94 = sbr.rel (%p91) target = $region12
      $region11: #{generator_forward.9} parent=5 // pred_region
        %s95 = ssub.s32 %s8, 1
        // Predicated region
        $region13: #{generator_forward.9} parent=11 // pred_check
          %p96 = pneg %p29
        $region14: #{generator_forward.9} parent=11 // pred_check_branch
          %98 = sbr.rel (%p96) target = $region16
        $region15: #{generator_forward.9} parent=11 // pred_region
          _
        $region16: #{generator_forward.9} parent=11 // pred_fallthru
          _
      $region12: #{generator_forward.9} parent=5 // pred_fallthru
        _
      %p99 = scmp.lt.s32.totalorder %s8, 2
      // Predicated region
      $region17: #{generator_forward.9} parent=5 // pred_check
        %p100 = pneg %p99
      $region18: #{generator_forward.9} parent=5 // pred_check_branch
        %102 = sbr.rel (%p100) target = $region20
      $region19: #{generator_forward.9} parent=5 // pred_region
        // Predicated region
        $region21: #{generator_forward.9} parent=19 // pred_check
          %p103 = pneg %p49
        $region22: #{generator_forward.9} parent=19 // pred_check_branch
          %105 = sbr.rel (%p103) target = $region24
        $region23: #{generator_forward.9} parent=19 // pred_region
          %s106 = sand.u32 %s39, 1
          %s107 = sand.u32 %s39, 1
          %s108 = smul.addr %s107, 1152
          %s109 = scalar_lea.vmem [#allocation2], %s108
          %s110 = smul.u32 9, %s8
          %s111 = smul.addr %s110, 8
          %s112 = scalar_lea.vmem %s1, %s111
          // Predicated region
          $region25: #{generator_forward.9} parent=23 // pred_check
            _
          $region26: #{generator_forward.9} parent=23 // pred_check_branch
            %114 = sbr.rel (0) target = $region28
          $region27: #{generator_forward.9} parent=23 // pred_region
            // Predicated region
            $region29: #{generator_forward.9} parent=27 // pred_check
              _
            $region30: #{generator_forward.9} parent=27 // pred_check_branch
              %116 = sbr.rel (0) target = $region32
            $region31: #{generator_forward.9} parent=27 // pred_region
              loop: start=0, step=1, limit=1
              $region33: #{generator_forward.9} parent=31 // loop_pre_header
                _
              $region34: #{generator_forward.9} parent=31 // loop_header
                %s118 = sphi 0, %s122
                %p119 = scmp.ge.s32.totalorder %s118, 1
                %s123 = sphi %s112, %s112
                %s124 = sphi %s109, %s109
              $region35: #{generator_forward.9} parent=31 // loop_header_branch
                %121 = sbr.rel (%p119) target = $region39
              $region36: #{generator_forward.9} parent=31 // loop_body
                %v125 = vld [vmem:[%s123] sm:$0xff]
                %126 = vst [vmem:[%s124] sm:$0xff] %v125
                %v127 = vld [vmem:[%s123 + $0x8] sm:$0xff]
                %128 = vst [vmem:[%s124 + $0x8] sm:$0xff] %v127
                %v129 = vld [vmem:[%s123 + $0x10] sm:$0xff]
                %130 = vst [vmem:[%s124 + $0x10] sm:$0xff] %v129
                %v131 = vld [vmem:[%s123 + $0x18] sm:$0xff]
                %132 = vst [vmem:[%s124 + $0x18] sm:$0xff] %v131
                %v133 = vld [vmem:[%s123 + $0x20] sm:$0xff]
                %134 = vst [vmem:[%s124 + $0x20] sm:$0xff] %v133
                %v135 = vld [vmem:[%s123 + $0x28] sm:$0xff]
                %136 = vst [vmem:[%s124 + $0x28] sm:$0xff] %v135
                %v137 = vld [vmem:[%s123 + $0x30] sm:$0xff]
                %138 = vst [vmem:[%s124 + $0x30] sm:$0xff] %v137
                %v139 = vld [vmem:[%s123 + $0x38] sm:$0xff]
                %140 = vst [vmem:[%s124 + $0x38] sm:$0xff] %v139
                %v141 = vld [vmem:[%s123 + $0x40] sm:$0xff]
                %142 = vst [vmem:[%s124 + $0x40] sm:$0xff] %v141
                %v143 = vld [vmem:[%s123 + $0x90] sm:$0xff]
                %144 = vst [vmem:[%s124 + $0x48] sm:$0xff] %v143
                %v145 = vld [vmem:[%s123 + $0x98] sm:$0xff]
                %146 = vst [vmem:[%s124 + $0x50] sm:$0xff] %v145
                %v147 = vld [vmem:[%s123 + $0xa0] sm:$0xff]
                %148 = vst [vmem:[%s124 + $0x58] sm:$0xff] %v147
                %v149 = vld [vmem:[%s123 + $0xa8] sm:$0xff]
                %150 = vst [vmem:[%s124 + $0x60] sm:$0xff] %v149
                %v151 = vld [vmem:[%s123 + $0xb0] sm:$0xff]
                %152 = vst [vmem:[%s124 + $0x68] sm:$0xff] %v151
                %v153 = vld [vmem:[%s123 + $0xb8] sm:$0xff]
                %154 = vst [vmem:[%s124 + $0x70] sm:$0xff] %v153
                %v155 = vld [vmem:[%s123 + $0xc0] sm:$0xff]
                %156 = vst [vmem:[%s124 + $0x78] sm:$0xff] %v155
                %v157 = vld [vmem:[%s123 + $0xc8] sm:$0xff]
                %158 = vst [vmem:[%s124 + $0x80] sm:$0xff] %v157
                %v159 = vld [vmem:[%s123 + $0xd0] sm:$0xff]
                %160 = vst [vmem:[%s124 + $0x88] sm:$0xff] %v159
                %v161 = vld [vmem:[%s123 + $0x120] sm:$0xff]
                %162 = vst [vmem:[%s124 + $0x90] sm:$0xff] %v161
                %v163 = vld [vmem:[%s123 + $0x128] sm:$0xff]
                %164 = vst [vmem:[%s124 + $0x98] sm:$0xff] %v163
                %v165 = vld [vmem:[%s123 + $0x130] sm:$0xff]
                %166 = vst [vmem:[%s124 + $0xa0] sm:$0xff] %v165
                %v167 = vld [vmem:[%s123 + $0x138] sm:$0xff]
                %168 = vst [vmem:[%s124 + $0xa8] sm:$0xff] %v167
                %v169 = vld [vmem:[%s123 + $0x140] sm:$0xff]
                %170 = vst [vmem:[%s124 + $0xb0] sm:$0xff] %v169
                %v171 = vld [vmem:[%s123 + $0x148] sm:$0xff]
                %172 = vst [vmem:[%s124 + $0xb8] sm:$0xff] %v171
                %v173 = vld [vmem:[%s123 + $0x150] sm:$0xff]
                %174 = vst [vmem:[%s124 + $0xc0] sm:$0xff] %v173
                %v175 = vld [vmem:[%s123 + $0x158] sm:$0xff]
                %176 = vst [vmem:[%s124 + $0xc8] sm:$0xff] %v175
                %v177 = vld [vmem:[%s123 + $0x160] sm:$0xff]
                %178 = vst [vmem:[%s124 + $0xd0] sm:$0xff] %v177
                %v179 = vld [vmem:[%s123 + $0x1b0] sm:$0xff]
                %180 = vst [vmem:[%s124 + $0xd8] sm:$0xff] %v179
                %v181 = vld [vmem:[%s123 + $0x1b8] sm:$0xff]
                %182 = vst [vmem:[%s124 + $0xe0] sm:$0xff] %v181
                %v183 = vld [vmem:[%s123 + $0x1c0] sm:$0xff]
                %184 = vst [vmem:[%s124 + $0xe8] sm:$0xff] %v183
                %v185 = vld [vmem:[%s123 + $0x1c8] sm:$0xff]
                %186 = vst [vmem:[%s124 + $0xf0] sm:$0xff] %v185
                %v187 = vld [vmem:[%s123 + $0x1d0] sm:$0xff]
                %188 = vst [vmem:[%s124 + $0xf8] sm:$0xff] %v187
                %v189 = vld [vmem:[%s123 + $0x1d8] sm:$0xff]
                %190 = vst [vmem:[%s124 + $0x100] sm:$0xff] %v189
                %v191 = vld [vmem:[%s123 + $0x1e0] sm:$0xff]
                %192 = vst [vmem:[%s124 + $0x108] sm:$0xff] %v191
                %v193 = vld [vmem:[%s123 + $0x1e8] sm:$0xff]
                %194 = vst [vmem:[%s124 + $0x110] sm:$0xff] %v193
                %v195 = vld [vmem:[%s123 + $0x1f0] sm:$0xff]
                %196 = vst [vmem:[%s124 + $0x118] sm:$0xff] %v195
                %v197 = vld [vmem:[%s123 + $0x240] sm:$0xff]
                %198 = vst [vmem:[%s124 + $0x120] sm:$0xff] %v197
                %v199 = vld [vmem:[%s123 + $0x248] sm:$0xff]
                %200 = vst [vmem:[%s124 + $0x128] sm:$0xff] %v199
                %v201 = vld [vmem:[%s123 + $0x250] sm:$0xff]
                %202 = vst [vmem:[%s124 + $0x130] sm:$0xff] %v201
                %v203 = vld [vmem:[%s123 + $0x258] sm:$0xff]
                %204 = vst [vmem:[%s124 + $0x138] sm:$0xff] %v203
                %v205 = vld [vmem:[%s123 + $0x260] sm:$0xff]
                %206 = vst [vmem:[%s124 + $0x140] sm:$0xff] %v205
                %v207 = vld [vmem:[%s123 + $0x268] sm:$0xff]
                %208 = vst [vmem:[%s124 + $0x148] sm:$0xff] %v207
                %v209 = vld [vmem:[%s123 + $0x270] sm:$0xff]
                %210 = vst [vmem:[%s124 + $0x150] sm:$0xff] %v209
                %v211 = vld [vmem:[%s123 + $0x278] sm:$0xff]
                %212 = vst [vmem:[%s124 + $0x158] sm:$0xff] %v211
                %v213 = vld [vmem:[%s123 + $0x280] sm:$0xff]
                %214 = vst [vmem:[%s124 + $0x160] sm:$0xff] %v213
                %v215 = vld [vmem:[%s123 + $0x2d0] sm:$0xff]
                %216 = vst [vmem:[%s124 + $0x168] sm:$0xff] %v215
                %v217 = vld [vmem:[%s123 + $0x2d8] sm:$0xff]
                %218 = vst [vmem:[%s124 + $0x170] sm:$0xff] %v217
                %v219 = vld [vmem:[%s123 + $0x2e0] sm:$0xff]
                %220 = vst [vmem:[%s124 + $0x178] sm:$0xff] %v219
                %v221 = vld [vmem:[%s123 + $0x2e8] sm:$0xff]
                %222 = vst [vmem:[%s124 + $0x180] sm:$0xff] %v221
                %v223 = vld [vmem:[%s123 + $0x2f0] sm:$0xff]
                %224 = vst [vmem:[%s124 + $0x188] sm:$0xff] %v223
                %v225 = vld [vmem:[%s123 + $0x2f8] sm:$0xff]
                %226 = vst [vmem:[%s124 + $0x190] sm:$0xff] %v225
                %v227 = vld [vmem:[%s123 + $0x300] sm:$0xff]
                %228 = vst [vmem:[%s124 + $0x198] sm:$0xff] %v227
                %v229 = vld [vmem:[%s123 + $0x308] sm:$0xff]
                %230 = vst [vmem:[%s124 + $0x1a0] sm:$0xff] %v229
                %v231 = vld [vmem:[%s123 + $0x310] sm:$0xff]
                %232 = vst [vmem:[%s124 + $0x1a8] sm:$0xff] %v231
                %v233 = vld [vmem:[%s123 + $0x360] sm:$0xff]
                %234 = vst [vmem:[%s124 + $0x1b0] sm:$0xff] %v233
                %v235 = vld [vmem:[%s123 + $0x368] sm:$0xff]
                %236 = vst [vmem:[%s124 + $0x1b8] sm:$0xff] %v235
                %v237 = vld [vmem:[%s123 + $0x370] sm:$0xff]
                %238 = vst [vmem:[%s124 + $0x1c0] sm:$0xff] %v237
                %v239 = vld [vmem:[%s123 + $0x378] sm:$0xff]
                %240 = vst [vmem:[%s124 + $0x1c8] sm:$0xff] %v239
                %v241 = vld [vmem:[%s123 + $0x380] sm:$0xff]
                %242 = vst [vmem:[%s124 + $0x1d0] sm:$0xff] %v241
                %v243 = vld [vmem:[%s123 + $0x388] sm:$0xff]
                %244 = vst [vmem:[%s124 + $0x1d8] sm:$0xff] %v243
                %v245 = vld [vmem:[%s123 + $0x390] sm:$0xff]
                %246 = vst [vmem:[%s124 + $0x1e0] sm:$0xff] %v245
                %v247 = vld [vmem:[%s123 + $0x398] sm:$0xff]
                %248 = vst [vmem:[%s124 + $0x1e8] sm:$0xff] %v247
                %v249 = vld [vmem:[%s123 + $0x3a0] sm:$0xff]
                %250 = vst [vmem:[%s124 + $0x1f0] sm:$0xff] %v249
                %v251 = vld [vmem:[%s123 + $0x3f0] sm:$0xff]
                %252 = vst [vmem:[%s124 + $0x1f8] sm:$0xff] %v251
                %v253 = vld [vmem:[%s123 + $0x3f8] sm:$0xff]
                %254 = vst [vmem:[%s124 + $0x200] sm:$0xff] %v253
                %v255 = vld [vmem:[%s123 + $0x400] sm:$0xff]
                %256 = vst [vmem:[%s124 + $0x208] sm:$0xff] %v255
                %v257 = vld [vmem:[%s123 + $0x408] sm:$0xff]
                %258 = vst [vmem:[%s124 + $0x210] sm:$0xff] %v257
                %v259 = vld [vmem:[%s123 + $0x410] sm:$0xff]
                %260 = vst [vmem:[%s124 + $0x218] sm:$0xff] %v259
                %v261 = vld [vmem:[%s123 + $0x418] sm:$0xff]
                %262 = vst [vmem:[%s124 + $0x220] sm:$0xff] %v261
                %v263 = vld [vmem:[%s123 + $0x420] sm:$0xff]
                %264 = vst [vmem:[%s124 + $0x228] sm:$0xff] %v263
                %v265 = vld [vmem:[%s123 + $0x428] sm:$0xff]
                %266 = vst [vmem:[%s124 + $0x230] sm:$0xff] %v265
                %v267 = vld [vmem:[%s123 + $0x430] sm:$0xff]
                %268 = vst [vmem:[%s124 + $0x238] sm:$0xff] %v267
                %v269 = vld [vmem:[%s123 + $0x480] sm:$0xff]
                %270 = vst [vmem:[%s124 + $0x240] sm:$0xff] %v269
                %v271 = vld [vmem:[%s123 + $0x488] sm:$0xff]
                %272 = vst [vmem:[%s124 + $0x248] sm:$0xff] %v271
                %v273 = vld [vmem:[%s123 + $0x490] sm:$0xff]
                %274 = vst [vmem:[%s124 + $0x250] sm:$0xff] %v273
                %v275 = vld [vmem:[%s123 + $0x498] sm:$0xff]
                %276 = vst [vmem:[%s124 + $0x258] sm:$0xff] %v275
                %v277 = vld [vmem:[%s123 + $0x4a0] sm:$0xff]
                %278 = vst [vmem:[%s124 + $0x260] sm:$0xff] %v277
                %v279 = vld [vmem:[%s123 + $0x4a8] sm:$0xff]
                %280 = vst [vmem:[%s124 + $0x268] sm:$0xff] %v279
                %v281 = vld [vmem:[%s123 + $0x4b0] sm:$0xff]
                %282 = vst [vmem:[%s124 + $0x270] sm:$0xff] %v281
                %v283 = vld [vmem:[%s123 + $0x4b8] sm:$0xff]
                %284 = vst [vmem:[%s124 + $0x278] sm:$0xff] %v283
                %v285 = vld [vmem:[%s123 + $0x4c0] sm:$0xff]
                %286 = vst [vmem:[%s124 + $0x280] sm:$0xff] %v285
                %v287 = vld [vmem:[%s123 + $0x510] sm:$0xff]
                %288 = vst [vmem:[%s124 + $0x288] sm:$0xff] %v287
                %v289 = vld [vmem:[%s123 + $0x518] sm:$0xff]
                %290 = vst [vmem:[%s124 + $0x290] sm:$0xff] %v289
                %v291 = vld [vmem:[%s123 + $0x520] sm:$0xff]
                %292 = vst [vmem:[%s124 + $0x298] sm:$0xff] %v291
                %v293 = vld [vmem:[%s123 + $0x528] sm:$0xff]
                %294 = vst [vmem:[%s124 + $0x2a0] sm:$0xff] %v293
                %v295 = vld [vmem:[%s123 + $0x530] sm:$0xff]
                %296 = vst [vmem:[%s124 + $0x2a8] sm:$0xff] %v295
                %v297 = vld [vmem:[%s123 + $0x538] sm:$0xff]
                %298 = vst [vmem:[%s124 + $0x2b0] sm:$0xff] %v297
                %v299 = vld [vmem:[%s123 + $0x540] sm:$0xff]
                %300 = vst [vmem:[%s124 + $0x2b8] sm:$0xff] %v299
                %v301 = vld [vmem:[%s123 + $0x548] sm:$0xff]
                %302 = vst [vmem:[%s124 + $0x2c0] sm:$0xff] %v301
                %v303 = vld [vmem:[%s123 + $0x550] sm:$0xff]
                %304 = vst [vmem:[%s124 + $0x2c8] sm:$0xff] %v303
                %v305 = vld [vmem:[%s123 + $0x5a0] sm:$0xff]
                %306 = vst [vmem:[%s124 + $0x2d0] sm:$0xff] %v305
                %v307 = vld [vmem:[%s123 + $0x5a8] sm:$0xff]
                %308 = vst [vmem:[%s124 + $0x2d8] sm:$0xff] %v307
                %v309 = vld [vmem:[%s123 + $0x5b0] sm:$0xff]
                %310 = vst [vmem:[%s124 + $0x2e0] sm:$0xff] %v309
                %v311 = vld [vmem:[%s123 + $0x5b8] sm:$0xff]
                %312 = vst [vmem:[%s124 + $0x2e8] sm:$0xff] %v311
                %v313 = vld [vmem:[%s123 + $0x5c0] sm:$0xff]
                %314 = vst [vmem:[%s124 + $0x2f0] sm:$0xff] %v313
                %v315 = vld [vmem:[%s123 + $0x5c8] sm:$0xff]
                %316 = vst [vmem:[%s124 + $0x2f8] sm:$0xff] %v315
                %v317 = vld [vmem:[%s123 + $0x5d0] sm:$0xff]
                %318 = vst [vmem:[%s124 + $0x300] sm:$0xff] %v317
                %v319 = vld [vmem:[%s123 + $0x5d8] sm:$0xff]
                %320 = vst [vmem:[%s124 + $0x308] sm:$0xff] %v319
                %v321 = vld [vmem:[%s123 + $0x5e0] sm:$0xff]
                %322 = vst [vmem:[%s124 + $0x310] sm:$0xff] %v321
                %v323 = vld [vmem:[%s123 + $0x630] sm:$0xff]
                %324 = vst [vmem:[%s124 + $0x318] sm:$0xff] %v323
                %v325 = vld [vmem:[%s123 + $0x638] sm:$0xff]
                %326 = vst [vmem:[%s124 + $0x320] sm:$0xff] %v325
                %v327 = vld [vmem:[%s123 + $0x640] sm:$0xff]
                %328 = vst [vmem:[%s124 + $0x328] sm:$0xff] %v327
                %v329 = vld [vmem:[%s123 + $0x648] sm:$0xff]
                %330 = vst [vmem:[%s124 + $0x330] sm:$0xff] %v329
                %v331 = vld [vmem:[%s123 + $0x650] sm:$0xff]
                %332 = vst [vmem:[%s124 + $0x338] sm:$0xff] %v331
                %v333 = vld [vmem:[%s123 + $0x658] sm:$0xff]
                %334 = vst [vmem:[%s124 + $0x340] sm:$0xff] %v333
                %v335 = vld [vmem:[%s123 + $0x660] sm:$0xff]
                %336 = vst [vmem:[%s124 + $0x348] sm:$0xff] %v335
                %v337 = vld [vmem:[%s123 + $0x668] sm:$0xff]
                %338 = vst [vmem:[%s124 + $0x350] sm:$0xff] %v337
                %v339 = vld [vmem:[%s123 + $0x670] sm:$0xff]
                %340 = vst [vmem:[%s124 + $0x358] sm:$0xff] %v339
                %v341 = vld [vmem:[%s123 + $0x6c0] sm:$0xff]
                %342 = vst [vmem:[%s124 + $0x360] sm:$0xff] %v341
                %v343 = vld [vmem:[%s123 + $0x6c8] sm:$0xff]
                %344 = vst [vmem:[%s124 + $0x368] sm:$0xff] %v343
                %v345 = vld [vmem:[%s123 + $0x6d0] sm:$0xff]
                %346 = vst [vmem:[%s124 + $0x370] sm:$0xff] %v345
                %v347 = vld [vmem:[%s123 + $0x6d8] sm:$0xff]
                %348 = vst [vmem:[%s124 + $0x378] sm:$0xff] %v347
                %v349 = vld [vmem:[%s123 + $0x6e0] sm:$0xff]
                %350 = vst [vmem:[%s124 + $0x380] sm:$0xff] %v349
                %v351 = vld [vmem:[%s123 + $0x6e8] sm:$0xff]
                %352 = vst [vmem:[%s124 + $0x388] sm:$0xff] %v351
                %v353 = vld [vmem:[%s123 + $0x6f0] sm:$0xff]
                %354 = vst [vmem:[%s124 + $0x390] sm:$0xff] %v353
                %v355 = vld [vmem:[%s123 + $0x6f8] sm:$0xff]
                %356 = vst [vmem:[%s124 + $0x398] sm:$0xff] %v355
                %v357 = vld [vmem:[%s123 + $0x700] sm:$0xff]
                %358 = vst [vmem:[%s124 + $0x3a0] sm:$0xff] %v357
                %v359 = vld [vmem:[%s123 + $0x750] sm:$0xff]
                %360 = vst [vmem:[%s124 + $0x3a8] sm:$0xff] %v359
                %v361 = vld [vmem:[%s123 + $0x758] sm:$0xff]
                %362 = vst [vmem:[%s124 + $0x3b0] sm:$0xff] %v361
                %v363 = vld [vmem:[%s123 + $0x760] sm:$0xff]
                %364 = vst [vmem:[%s124 + $0x3b8] sm:$0xff] %v363
                %v365 = vld [vmem:[%s123 + $0x768] sm:$0xff]
                %366 = vst [vmem:[%s124 + $0x3c0] sm:$0xff] %v365
                %v367 = vld [vmem:[%s123 + $0x770] sm:$0xff]
                %368 = vst [vmem:[%s124 + $0x3c8] sm:$0xff] %v367
                %v369 = vld [vmem:[%s123 + $0x778] sm:$0xff]
                %370 = vst [vmem:[%s124 + $0x3d0] sm:$0xff] %v369
                %v371 = vld [vmem:[%s123 + $0x780] sm:$0xff]
                %372 = vst [vmem:[%s124 + $0x3d8] sm:$0xff] %v371
                %v373 = vld [vmem:[%s123 + $0x788] sm:$0xff]
                %374 = vst [vmem:[%s124 + $0x3e0] sm:$0xff] %v373
                %v375 = vld [vmem:[%s123 + $0x790] sm:$0xff]
                %376 = vst [vmem:[%s124 + $0x3e8] sm:$0xff] %v375
                %v377 = vld [vmem:[%s123 + $0x7e0] sm:$0xff]
                %378 = vst [vmem:[%s124 + $0x3f0] sm:$0xff] %v377
                %v379 = vld [vmem:[%s123 + $0x7e8] sm:$0xff]
                %380 = vst [vmem:[%s124 + $0x3f8] sm:$0xff] %v379
                %v381 = vld [vmem:[%s123 + $0x7f0] sm:$0xff]
                %382 = vst [vmem:[%s124 + $0x400] sm:$0xff] %v381
                %v383 = vld [vmem:[%s123 + $0x7f8] sm:$0xff]
                %384 = vst [vmem:[%s124 + $0x408] sm:$0xff] %v383
                %v385 = vld [vmem:[%s123 + $0x800] sm:$0xff]
                %386 = vst [vmem:[%s124 + $0x410] sm:$0xff] %v385
                %v387 = vld [vmem:[%s123 + $0x808] sm:$0xff]
                %388 = vst [vmem:[%s124 + $0x418] sm:$0xff] %v387
                %v389 = vld [vmem:[%s123 + $0x810] sm:$0xff]
                %390 = vst [vmem:[%s124 + $0x420] sm:$0xff] %v389
                %v391 = vld [vmem:[%s123 + $0x818] sm:$0xff]
                %392 = vst [vmem:[%s124 + $0x428] sm:$0xff] %v391
                %v393 = vld [vmem:[%s123 + $0x820] sm:$0xff]
                %394 = vst [vmem:[%s124 + $0x430] sm:$0xff] %v393
                %v395 = vld [vmem:[%s123 + $0x870] sm:$0xff]
                %396 = vst [vmem:[%s124 + $0x438] sm:$0xff] %v395
                %v397 = vld [vmem:[%s123 + $0x878] sm:$0xff]
                %398 = vst [vmem:[%s124 + $0x440] sm:$0xff] %v397
                %v399 = vld [vmem:[%s123 + $0x880] sm:$0xff]
                %400 = vst [vmem:[%s124 + $0x448] sm:$0xff] %v399
                %v401 = vld [vmem:[%s123 + $0x888] sm:$0xff]
                %402 = vst [vmem:[%s124 + $0x450] sm:$0xff] %v401
                %v403 = vld [vmem:[%s123 + $0x890] sm:$0xff]
                %404 = vst [vmem:[%s124 + $0x458] sm:$0xff] %v403
                %v405 = vld [vmem:[%s123 + $0x898] sm:$0xff]
                %406 = vst [vmem:[%s124 + $0x460] sm:$0xff] %v405
                %v407 = vld [vmem:[%s123 + $0x8a0] sm:$0xff]
                %408 = vst [vmem:[%s124 + $0x468] sm:$0xff] %v407
                %v409 = vld [vmem:[%s123 + $0x8a8] sm:$0xff]
                %410 = vst [vmem:[%s124 + $0x470] sm:$0xff] %v409
                %v411 = vld [vmem:[%s123 + $0x8b0] sm:$0xff]
                %412 = vst [vmem:[%s124 + $0x478] sm:$0xff] %v411
              $region37: #{generator_forward.9} parent=31 // loop_footer
                %s122 = sadd.s32 1, %s118
              $region38: #{generator_forward.9} parent=31 // loop_footer_branch
                %117 = sbr.rel target = $region34
              $region39: #{generator_forward.9} parent=31 // loop_exit
                _
            $region32: #{generator_forward.9} parent=27 // pred_fallthru
              _
            // Predicated region
            $region40: #{generator_forward.9} parent=27 // pred_check
              _
            $region41: #{generator_forward.9} parent=27 // pred_check_branch
              %414 = sbr.rel target = $region43
            $region42: #{generator_forward.9} parent=27 // pred_region
              _
            $region43: #{generator_forward.9} parent=27 // pred_fallthru
              _
          $region28: #{generator_forward.9} parent=23 // pred_fallthru
            _
          %415 = vnop
        $region24: #{generator_forward.9} parent=19 // pred_fallthru
          _
      $region20: #{generator_forward.9} parent=5 // pred_fallthru
        _
      %p416 = scmp.le.s32.totalorder 1, %s8
      %p417 = scmp.lt.s32.totalorder %s8, 3
      %p418 = pnand %p416, %p417
      %p419 = pneg %p418
      // Predicated region
      $region44: #{generator_forward.9} parent=5 // pred_check
        _
      $region45: #{generator_forward.9} parent=5 // pred_check_branch
        %421 = sbr.rel (%p418) target = $region47
      $region46: #{generator_forward.9} parent=5 // pred_region
        %s422 = ssub.s32 %s8, 1
        %s423 = sand.u32 %s42, 1
        %s424 = sand.u32 %s42, 1
        %s425 = smul.addr %s424, 1152
        %s426 = scalar_lea.vmem [#allocation2], %s425
        // Predicated region
        $region48: #{generator_forward.9} parent=46 // pred_check
          %p427 = pneg %p55
        $region49: #{generator_forward.9} parent=46 // pred_check_branch
          %429 = sbr.rel (%p427) target = $region51
        $region50: #{generator_forward.9} parent=46 // pred_region
          _
        $region51: #{generator_forward.9} parent=46 // pred_fallthru
          _
        %p430 = pneg %p29
        %p431 = pneg %p26
        %s432 = sand.u32 %s42, 1
        %s433 = sand.u32 %s42, 1
        %s434 = smul.addr %s433, 1152
        %s435 = scalar_lea.vmem [#allocation2], %s434
        %p436 = pneg %p55
        %p437 = pneg %p52
        %p438 = pneg %p81
        %p439 = pneg %p78
        %s440 = smul.u32 9, %s13
        %p441 = scmp.lt.s32.totalorder %s440, 17
        %s442 = scalar_select %p441, %s440, 17
        %s443 = smul.addr %s442, 8
        %s444 = scalar_lea.vmem %s2, %s443
        %s445 = smul.u32 9, %s13
        %s446 = smul.u32 9, %s13
        %p447 = scmp.lt.s32.totalorder %s446, 17
        %s448 = scalar_select %p447, %s446, 17
        %s449 = smul.addr %s448, 8
        %s450 = scalar_lea.vmem %s2, %s449
        %s451 = smul.u32 9, %s13
        %v452 = vld [vmem:[%s0] sm:$0xff]
        %v453 = vld [vmem:[%s426] sm:$0xff]
        %v454 = vld [vmem:[%s426 + $0x8] sm:$0xff]
        %v455 = vld [vmem:[%s426 + $0x10] sm:$0xff]
        %v456 = vld [vmem:[%s426 + $0x18] sm:$0xff]
        %v457 = vld [vmem:[%s426 + $0x20] sm:$0xff]
        %v458 = vld [vmem:[%s426 + $0x28] sm:$0xff]
        %v459 = vld [vmem:[%s426 + $0x30] sm:$0xff]
        %v460 = vld [vmem:[%s426 + $0x38] sm:$0xff]
        %v461 = vld [vmem:[%s426 + $0x40] sm:$0xff]
        %v462 = vld [vmem:[%s426 + $0x48] sm:$0xff]
        %v463 = vld [vmem:[%s426 + $0x50] sm:$0xff]
        %v464 = vld [vmem:[%s426 + $0x58] sm:$0xff]
        %v465 = vld [vmem:[%s426 + $0x60] sm:$0xff]
        %v466 = vld [vmem:[%s426 + $0x68] sm:$0xff]
        %v467 = vld [vmem:[%s426 + $0x70] sm:$0xff]
        %v468 = vld [vmem:[%s426 + $0x78] sm:$0xff]
        %v469 = vld [vmem:[%s426 + $0x80] sm:$0xff]
        %v470 = vld [vmem:[%s426 + $0x88] sm:$0xff]
        %v471 = vld [vmem:[%s426 + $0x90] sm:$0xff]
        %v472 = vld [vmem:[%s426 + $0x98] sm:$0xff]
        %v473 = vld [vmem:[%s426 + $0xa0] sm:$0xff]
        %v474 = vld [vmem:[%s426 + $0xa8] sm:$0xff]
        %v475 = vld [vmem:[%s426 + $0xb0] sm:$0xff]
        %v476 = vld [vmem:[%s426 + $0xb8] sm:$0xff]
        %v477 = vld [vmem:[%s426 + $0xc0] sm:$0xff]
        %v478 = vld [vmem:[%s426 + $0xc8] sm:$0xff]
        %v479 = vld [vmem:[%s426 + $0xd0] sm:$0xff]
        %v480 = vld [vmem:[%s426 + $0xd8] sm:$0xff]
        %v481 = vld [vmem:[%s426 + $0xe0] sm:$0xff]
        %v482 = vld [vmem:[%s426 + $0xe8] sm:$0xff]
        %v483 = vld [vmem:[%s426 + $0xf0] sm:$0xff]
        %v484 = vld [vmem:[%s426 + $0xf8] sm:$0xff]
        %v485 = vld [vmem:[%s426 + $0x100] sm:$0xff]
        %v486 = vld [vmem:[%s426 + $0x108] sm:$0xff]
        %v487 = vld [vmem:[%s426 + $0x110] sm:$0xff]
        %v488 = vld [vmem:[%s426 + $0x118] sm:$0xff]
        %v489 = vld [vmem:[%s426 + $0x120] sm:$0xff]
        %v490 = vld [vmem:[%s426 + $0x128] sm:$0xff]
        %v491 = vld [vmem:[%s426 + $0x130] sm:$0xff]
        %v492 = vld [vmem:[%s426 + $0x138] sm:$0xff]
        %v493 = vld [vmem:[%s426 + $0x140] sm:$0xff]
        %v494 = vld [vmem:[%s426 + $0x148] sm:$0xff]
        %v495 = vld [vmem:[%s426 + $0x150] sm:$0xff]
        %v496 = vld [vmem:[%s426 + $0x158] sm:$0xff]
        %v497 = vld [vmem:[%s426 + $0x160] sm:$0xff]
        %v498 = vld [vmem:[%s426 + $0x168] sm:$0xff]
        %v499 = vld [vmem:[%s426 + $0x170] sm:$0xff]
        %v500 = vld [vmem:[%s426 + $0x178] sm:$0xff]
        %v501 = vld [vmem:[%s426 + $0x180] sm:$0xff]
        %v502 = vld [vmem:[%s426 + $0x188] sm:$0xff]
        %v503 = vld [vmem:[%s426 + $0x190] sm:$0xff]
        %v504 = vld [vmem:[%s426 + $0x198] sm:$0xff]
        %v505 = vld [vmem:[%s426 + $0x1a0] sm:$0xff]
        %v506 = vld [vmem:[%s426 + $0x1a8] sm:$0xff]
        %v507 = vld [vmem:[%s426 + $0x1b0] sm:$0xff]
        %v508 = vld [vmem:[%s426 + $0x1b8] sm:$0xff]
        %v509 = vld [vmem:[%s426 + $0x1c0] sm:$0xff]
        %v510 = vld [vmem:[%s426 + $0x1c8] sm:$0xff]
        %v511 = vld [vmem:[%s426 + $0x1d0] sm:$0xff]
        %v512 = vld [vmem:[%s426 + $0x1d8] sm:$0xff]
        %v513 = vld [vmem:[%s426 + $0x1e0] sm:$0xff]
        %v514 = vld [vmem:[%s426 + $0x1e8] sm:$0xff]
        %v515 = vld [vmem:[%s426 + $0x1f0] sm:$0xff]
        %v516 = vld [vmem:[%s426 + $0x1f8] sm:$0xff]
        %v517 = vld [vmem:[%s426 + $0x200] sm:$0xff]
        %v518 = vld [vmem:[%s426 + $0x208] sm:$0xff]
        %v519 = vld [vmem:[%s426 + $0x210] sm:$0xff]
        %v520 = vld [vmem:[%s426 + $0x218] sm:$0xff]
        %v521 = vld [vmem:[%s426 + $0x220] sm:$0xff]
        %v522 = vld [vmem:[%s426 + $0x228] sm:$0xff]
        %v523 = vld [vmem:[%s426 + $0x230] sm:$0xff]
        %v524 = vld [vmem:[%s426 + $0x238] sm:$0xff]
        %v525 = vld [vmem:[%s426 + $0x240] sm:$0xff]
        %v526 = vld [vmem:[%s426 + $0x248] sm:$0xff]
        %v527 = vld [vmem:[%s426 + $0x250] sm:$0xff]
        %v528 = vld [vmem:[%s426 + $0x258] sm:$0xff]
        %v529 = vld [vmem:[%s426 + $0x260] sm:$0xff]
        %v530 = vld [vmem:[%s426 + $0x268] sm:$0xff]
        %v531 = vld [vmem:[%s426 + $0x270] sm:$0xff]
        %v532 = vld [vmem:[%s426 + $0x278] sm:$0xff]
        %v533 = vld [vmem:[%s426 + $0x280] sm:$0xff]
        %v534 = vld [vmem:[%s426 + $0x288] sm:$0xff]
        %v535 = vld [vmem:[%s426 + $0x290] sm:$0xff]
        %v536 = vld [vmem:[%s426 + $0x298] sm:$0xff]
        %v537 = vld [vmem:[%s426 + $0x2a0] sm:$0xff]
        %v538 = vld [vmem:[%s426 + $0x2a8] sm:$0xff]
        %v539 = vld [vmem:[%s426 + $0x2b0] sm:$0xff]
        %v540 = vld [vmem:[%s426 + $0x2b8] sm:$0xff]
        %v541 = vld [vmem:[%s426 + $0x2c0] sm:$0xff]
        %v542 = vld [vmem:[%s426 + $0x2c8] sm:$0xff]
        %v543 = vld [vmem:[%s426 + $0x2d0] sm:$0xff]
        %v544 = vld [vmem:[%s426 + $0x2d8] sm:$0xff]
        %v545 = vld [vmem:[%s426 + $0x2e0] sm:$0xff]
        %v546 = vld [vmem:[%s426 + $0x2e8] sm:$0xff]
        %v547 = vld [vmem:[%s426 + $0x2f0] sm:$0xff]
        %v548 = vld [vmem:[%s426 + $0x2f8] sm:$0xff]
        %v549 = vld [vmem:[%s426 + $0x300] sm:$0xff]
        %v550 = vld [vmem:[%s426 + $0x308] sm:$0xff]
        %v551 = vld [vmem:[%s426 + $0x310] sm:$0xff]
        %v552 = vld [vmem:[%s426 + $0x318] sm:$0xff]
        %v553 = vld [vmem:[%s426 + $0x320] sm:$0xff]
        %v554 = vld [vmem:[%s426 + $0x328] sm:$0xff]
        %v555 = vld [vmem:[%s426 + $0x330] sm:$0xff]
        %v556 = vld [vmem:[%s426 + $0x338] sm:$0xff]
        %v557 = vld [vmem:[%s426 + $0x340] sm:$0xff]
        %v558 = vld [vmem:[%s426 + $0x348] sm:$0xff]
        %v559 = vld [vmem:[%s426 + $0x350] sm:$0xff]
        %v560 = vld [vmem:[%s426 + $0x358] sm:$0xff]
        %v561 = vld [vmem:[%s426 + $0x360] sm:$0xff]
        %v562 = vld [vmem:[%s426 + $0x368] sm:$0xff]
        %v563 = vld [vmem:[%s426 + $0x370] sm:$0xff]
        %v564 = vld [vmem:[%s426 + $0x378] sm:$0xff]
        %v565 = vld [vmem:[%s426 + $0x380] sm:$0xff]
        %v566 = vld [vmem:[%s426 + $0x388] sm:$0xff]
        %v567 = vld [vmem:[%s426 + $0x390] sm:$0xff]
        %v568 = vld [vmem:[%s426 + $0x398] sm:$0xff]
        %v569 = vld [vmem:[%s426 + $0x3a0] sm:$0xff]
        %v570 = vld [vmem:[%s426 + $0x3a8] sm:$0xff]
        %v571 = vld [vmem:[%s426 + $0x3b0] sm:$0xff]
        %v572 = vld [vmem:[%s426 + $0x3b8] sm:$0xff]
        %v573 = vld [vmem:[%s426 + $0x3c0] sm:$0xff]
        %v574 = vld [vmem:[%s426 + $0x3c8] sm:$0xff]
        %v575 = vld [vmem:[%s426 + $0x3d0] sm:$0xff]
        %v576 = vld [vmem:[%s426 + $0x3d8] sm:$0xff]
        %v577 = vld [vmem:[%s426 + $0x3e0] sm:$0xff]
        %v578 = vld [vmem:[%s426 + $0x3e8] sm:$0xff]
        %v579 = vld [vmem:[%s426 + $0x3f0] sm:$0xff]
        %v580 = vld [vmem:[%s426 + $0x3f8] sm:$0xff]
        %v581 = vld [vmem:[%s426 + $0x400] sm:$0xff]
        %v582 = vld [vmem:[%s426 + $0x408] sm:$0xff]
        %v583 = vld [vmem:[%s426 + $0x410] sm:$0xff]
        %v584 = vld [vmem:[%s426 + $0x418] sm:$0xff]
        %v585 = vld [vmem:[%s426 + $0x420] sm:$0xff]
        %v586 = vld [vmem:[%s426 + $0x428] sm:$0xff]
        %v587 = vld [vmem:[%s426 + $0x430] sm:$0xff]
        %v588 = vld [vmem:[%s426 + $0x438] sm:$0xff]
        %v589 = vld [vmem:[%s426 + $0x440] sm:$0xff]
        %v590 = vld [vmem:[%s426 + $0x448] sm:$0xff]
        %v591 = vld [vmem:[%s426 + $0x450] sm:$0xff]
        %v592 = vld [vmem:[%s426 + $0x458] sm:$0xff]
        %v593 = vld [vmem:[%s426 + $0x460] sm:$0xff]
        %v594 = vld [vmem:[%s426 + $0x468] sm:$0xff]
        %v595 = vld [vmem:[%s426 + $0x470] sm:$0xff]
        %v596 = vld [vmem:[%s426 + $0x478] sm:$0xff]
        %597 = vmatprep.subr.mxu0 %v589
        %598 = vmatpush1.msra.mxu0 %v588
        %599 = vmatprep.subr.mxu0 %v580
        %600 = vmatpush1.msra.mxu0 %v579
        %601 = vmatprep.subr.mxu0 %v571
        %602 = vmatpush1.msra.mxu0 %v570
        %603 = vmatprep.subr.mxu0 %v562
        %604 = vmatpush1.msra.mxu0 %v561
        %605 = vmatprep.subr.mxu0 %v553
        %606 = vmatpush1.msra.mxu0 %v552
        %607 = vmatprep.subr.mxu0 %v544
        %608 = vmatpush1.msra.mxu0 %v543
        %609 = vmatprep.subr.mxu0 %v535
        %610 = vmatpush1.msra.mxu0 %v534
        %611 = vmatprep.subr.mxu0 %v526
        %612 = vmatpush1.msra.mxu0 %v525
        %613 = vmatprep.subr.mxu0 %v517
        %614 = vmatpush1.msra.mxu0 %v516
        %615 = vmatprep.subr.mxu0 %v508
        %616 = vmatpush1.msra.mxu0 %v507
        %617 = vmatprep.subr.mxu0 %v499
        %618 = vmatpush1.msra.mxu0 %v498
        %619 = vmatprep.subr.mxu0 %v490
        %620 = vmatpush1.msra.mxu0 %v489
        %621 = vmatprep.subr.mxu0 %v481
        %622 = vmatpush1.msra.mxu0 %v480
        %623 = vmatprep.subr.mxu0 %v472
        %624 = vmatpush1.msra.mxu0 %v471
        %625 = vmatprep.subr.mxu0 %v463
        %626 = vmatpush1.msra.mxu0 %v462
        %627 = vmatprep.subr.mxu0 %v454
        %628 = vmatpush1.msra.mxu0 %v453
        %629 = vmatprep.subr.mxu0 0.0
        %630 = vmatpush2.msra.mxu0 0.0
        %631 = vmatprep.subr.mxu0 0.0
        %632 = vmatpush2.msra.mxu0 0.0
        %633 = vmatprep.subr.mxu0 0.0
        %634 = vmatpush2.msra.mxu0 0.0
        %635 = vmatprep.subr.mxu0 0.0
        %636 = vmatpush2.msra.mxu0 0.0
        %637 = vmatprep.subr.mxu0 0.0
        %638 = vmatpush2.msra.mxu0 0.0
        %639 = vmatprep.subr.mxu0 0.0
        %640 = vmatpush2.msra.mxu0 0.0
        %641 = vmatprep.subr.mxu0 0.0
        %642 = vmatpush2.msra.mxu0 0.0
        %643 = vmatprep.subr.mxu0 0.0
        %644 = vmatpush2.msra.mxu0 0.0
        %645 = vmatprep.subr.mxu0 0.0
        %646 = vmatpush2.msra.mxu0 0.0
        %647 = vmatprep.subr.mxu0 0.0
        %648 = vmatpush2.msra.mxu0 0.0
        %649 = vmatprep.subr.mxu0 0.0
        %650 = vmatpush2.msra.mxu0 0.0
        %651 = vmatprep.subr.mxu0 0.0
        %652 = vmatpush2.msra.mxu0 0.0
        %653 = vmatprep.subr.mxu0 0.0
        %654 = vmatpush2.msra.mxu0 0.0
        %655 = vmatprep.subr.mxu0 0.0
        %656 = vmatpush2.msra.mxu0 0.0
        %657 = vmatprep.subr.mxu0 0.0
        %658 = vmatpush2.msra.mxu0 0.0
        %659 = vmatprep.subr.mxu0 0.0
        %660 = vmatpush2.msra.mxu0 0.0
        %661 = vmatprep.mubr.f32.mxu0 0.0
        %662 = vmatmul.mubr.f32.gmra.mxu0 %v452
        %v663 = vpop.f32.mrf.mxu0
        %v664 = vadd.f32 0.0, %v663
        %v665 = vpop.f32.mrf.mxu0
        %v666 = vadd.f32 0.0, %v665
        %667 = vdwg.mxu0
        %668 = vmatprep.subr.mxu0 %v591
        %669 = vmatpush1.msra.mxu0 %v590
        %670 = vmatprep.subr.mxu0 %v582
        %671 = vmatpush1.msra.mxu0 %v581
        %672 = vmatprep.subr.mxu0 %v573
        %673 = vmatpush1.msra.mxu0 %v572
        %674 = vmatprep.subr.mxu0 %v564
        %675 = vmatpush1.msra.mxu0 %v563
        %676 = vmatprep.subr.mxu0 %v555
        %677 = vmatpush1.msra.mxu0 %v554
        %678 = vmatprep.subr.mxu0 %v546
        %679 = vmatpush1.msra.mxu0 %v545
        %680 = vmatprep.subr.mxu0 %v537
        %681 = vmatpush1.msra.mxu0 %v536
        %682 = vmatprep.subr.mxu0 %v528
        %683 = vmatpush1.msra.mxu0 %v527
        %684 = vmatprep.subr.mxu0 %v519
        %685 = vmatpush1.msra.mxu0 %v518
        %686 = vmatprep.subr.mxu0 %v510
        %687 = vmatpush1.msra.mxu0 %v509
        %688 = vmatprep.subr.mxu0 %v501
        %689 = vmatpush1.msra.mxu0 %v500
        %690 = vmatprep.subr.mxu0 %v492
        %691 = vmatpush1.msra.mxu0 %v491
        %692 = vmatprep.subr.mxu0 %v483
        %693 = vmatpush1.msra.mxu0 %v482
        %694 = vmatprep.subr.mxu0 %v474
        %695 = vmatpush1.msra.mxu0 %v473
        %696 = vmatprep.subr.mxu0 %v465
        %697 = vmatpush1.msra.mxu0 %v464
        %698 = vmatprep.subr.mxu0 %v456
        %699 = vmatpush1.msra.mxu0 %v455
        %700 = vmatprep.subr.mxu0 0.0
        %701 = vmatpush2.msra.mxu0 0.0
        %702 = vmatprep.subr.mxu0 0.0
        %703 = vmatpush2.msra.mxu0 0.0
        %704 = vmatprep.subr.mxu0 0.0
        %705 = vmatpush2.msra.mxu0 0.0
        %706 = vmatprep.subr.mxu0 0.0
        %707 = vmatpush2.msra.mxu0 0.0
        %708 = vmatprep.subr.mxu0 0.0
        %709 = vmatpush2.msra.mxu0 0.0
        %710 = vmatprep.subr.mxu0 0.0
        %711 = vmatpush2.msra.mxu0 0.0
        %712 = vmatprep.subr.mxu0 0.0
        %713 = vmatpush2.msra.mxu0 0.0
        %714 = vmatprep.subr.mxu0 0.0
        %715 = vmatpush2.msra.mxu0 0.0
        %716 = vmatprep.subr.mxu0 0.0
        %717 = vmatpush2.msra.mxu0 0.0
        %718 = vmatprep.subr.mxu0 0.0
        %719 = vmatpush2.msra.mxu0 0.0
        %720 = vmatprep.subr.mxu0 0.0
        %721 = vmatpush2.msra.mxu0 0.0
        %722 = vmatprep.subr.mxu0 0.0
        %723 = vmatpush2.msra.mxu0 0.0
        %724 = vmatprep.subr.mxu0 0.0
        %725 = vmatpush2.msra.mxu0 0.0
        %726 = vmatprep.subr.mxu0 0.0
        %727 = vmatpush2.msra.mxu0 0.0
        %728 = vmatprep.subr.mxu0 0.0
        %729 = vmatpush2.msra.mxu0 0.0
        %730 = vmatprep.subr.mxu0 0.0
        %731 = vmatpush2.msra.mxu0 0.0
        %732 = vmatprep.mubr.f32.mxu0 0.0
        %733 = vmatmul.mubr.f32.gmra.mxu0 %v452
        %v734 = vpop.f32.mrf.mxu0
        %v735 = vadd.f32 0.0, %v734
        %v736 = vpop.f32.mrf.mxu0
        %v737 = vadd.f32 0.0, %v736
        %738 = vdwg.mxu0
        %739 = vmatprep.subr.mxu0 %v593
        %740 = vmatpush1.msra.mxu0 %v592
        %741 = vmatprep.subr.mxu0 %v584
        %742 = vmatpush1.msra.mxu0 %v583
        %743 = vmatprep.subr.mxu0 %v575
        %744 = vmatpush1.msra.mxu0 %v574
        %745 = vmatprep.subr.mxu0 %v566
        %746 = vmatpush1.msra.mxu0 %v565
        %747 = vmatprep.subr.mxu0 %v557
        %748 = vmatpush1.msra.mxu0 %v556
        %749 = vmatprep.subr.mxu0 %v548
        %750 = vmatpush1.msra.mxu0 %v547
        %751 = vmatprep.subr.mxu0 %v539
        %752 = vmatpush1.msra.mxu0 %v538
        %753 = vmatprep.subr.mxu0 %v530
        %754 = vmatpush1.msra.mxu0 %v529
        %755 = vmatprep.subr.mxu0 %v521
        %756 = vmatpush1.msra.mxu0 %v520
        %757 = vmatprep.subr.mxu0 %v512
        %758 = vmatpush1.msra.mxu0 %v511
        %759 = vmatprep.subr.mxu0 %v503
        %760 = vmatpush1.msra.mxu0 %v502
        %761 = vmatprep.subr.mxu0 %v494
        %762 = vmatpush1.msra.mxu0 %v493
        %763 = vmatprep.subr.mxu0 %v485
        %764 = vmatpush1.msra.mxu0 %v484
        %765 = vmatprep.subr.mxu0 %v476
        %766 = vmatpush1.msra.mxu0 %v475
        %767 = vmatprep.subr.mxu0 %v467
        %768 = vmatpush1.msra.mxu0 %v466
        %769 = vmatprep.subr.mxu0 %v458
        %770 = vmatpush1.msra.mxu0 %v457
        %771 = vmatprep.subr.mxu0 0.0
        %772 = vmatpush2.msra.mxu0 0.0
        %773 = vmatprep.subr.mxu0 0.0
        %774 = vmatpush2.msra.mxu0 0.0
        %775 = vmatprep.subr.mxu0 0.0
        %776 = vmatpush2.msra.mxu0 0.0
        %777 = vmatprep.subr.mxu0 0.0
        %778 = vmatpush2.msra.mxu0 0.0
        %779 = vmatprep.subr.mxu0 0.0
        %780 = vmatpush2.msra.mxu0 0.0
        %781 = vmatprep.subr.mxu0 0.0
        %782 = vmatpush2.msra.mxu0 0.0
        %783 = vmatprep.subr.mxu0 0.0
        %784 = vmatpush2.msra.mxu0 0.0
        %785 = vmatprep.subr.mxu0 0.0
        %786 = vmatpush2.msra.mxu0 0.0
        %787 = vmatprep.subr.mxu0 0.0
        %788 = vmatpush2.msra.mxu0 0.0
        %789 = vmatprep.subr.mxu0 0.0
        %790 = vmatpush2.msra.mxu0 0.0
        %791 = vmatprep.subr.mxu0 0.0
        %792 = vmatpush2.msra.mxu0 0.0
        %793 = vmatprep.subr.mxu0 0.0
        %794 = vmatpush2.msra.mxu0 0.0
        %795 = vmatprep.subr.mxu0 0.0
        %796 = vmatpush2.msra.mxu0 0.0
        %797 = vmatprep.subr.mxu0 0.0
        %798 = vmatpush2.msra.mxu0 0.0
        %799 = vmatprep.subr.mxu0 0.0
        %800 = vmatpush2.msra.mxu0 0.0
        %801 = vmatprep.subr.mxu0 0.0
        %802 = vmatpush2.msra.mxu0 0.0
        %803 = vmatprep.mubr.f32.mxu0 0.0
        %804 = vmatmul.mubr.f32.gmra.mxu0 %v452
        %v805 = vpop.f32.mrf.mxu0
        %v806 = vadd.f32 0.0, %v805
        %v807 = vpop.f32.mrf.mxu0
        %v808 = vadd.f32 0.0, %v807
        %809 = vdwg.mxu0
        %810 = vmatprep.subr.mxu0 %v595
        %811 = vmatpush1.msra.mxu0 %v594
        %812 = vmatprep.subr.mxu0 %v586
        %813 = vmatpush1.msra.mxu0 %v585
        %814 = vmatprep.subr.mxu0 %v577
        %815 = vmatpush1.msra.mxu0 %v576
        %816 = vmatprep.subr.mxu0 %v568
        %817 = vmatpush1.msra.mxu0 %v567
        %818 = vmatprep.subr.mxu0 %v559
        %819 = vmatpush1.msra.mxu0 %v558
        %820 = vmatprep.subr.mxu0 %v550
        %821 = vmatpush1.msra.mxu0 %v549
        %822 = vmatprep.subr.mxu0 %v541
        %823 = vmatpush1.msra.mxu0 %v540
        %824 = vmatprep.subr.mxu0 %v532
        %825 = vmatpush1.msra.mxu0 %v531
        %826 = vmatprep.subr.mxu0 %v523
        %827 = vmatpush1.msra.mxu0 %v522
        %828 = vmatprep.subr.mxu0 %v514
        %829 = vmatpush1.msra.mxu0 %v513
        %830 = vmatprep.subr.mxu0 %v505
        %831 = vmatpush1.msra.mxu0 %v504
        %832 = vmatprep.subr.mxu0 %v496
        %833 = vmatpush1.msra.mxu0 %v495
        %834 = vmatprep.subr.mxu0 %v487
        %835 = vmatpush1.msra.mxu0 %v486
        %836 = vmatprep.subr.mxu0 %v478
        %837 = vmatpush1.msra.mxu0 %v477
        %838 = vmatprep.subr.mxu0 %v469
        %839 = vmatpush1.msra.mxu0 %v468
        %840 = vmatprep.subr.mxu0 %v460
        %841 = vmatpush1.msra.mxu0 %v459
        %842 = vmatprep.subr.mxu0 0.0
        %843 = vmatpush2.msra.mxu0 0.0
        %844 = vmatprep.subr.mxu0 0.0
        %845 = vmatpush2.msra.mxu0 0.0
        %846 = vmatprep.subr.mxu0 0.0
        %847 = vmatpush2.msra.mxu0 0.0
        %848 = vmatprep.subr.mxu0 0.0
        %849 = vmatpush2.msra.mxu0 0.0
        %850 = vmatprep.subr.mxu0 0.0
        %851 = vmatpush2.msra.mxu0 0.0
        %852 = vmatprep.subr.mxu0 0.0
        %853 = vmatpush2.msra.mxu0 0.0
        %854 = vmatprep.subr.mxu0 0.0
        %855 = vmatpush2.msra.mxu0 0.0
        %856 = vmatprep.subr.mxu0 0.0
        %857 = vmatpush2.msra.mxu0 0.0
        %858 = vmatprep.subr.mxu0 0.0
        %859 = vmatpush2.msra.mxu0 0.0
        %860 = vmatprep.subr.mxu0 0.0
        %861 = vmatpush2.msra.mxu0 0.0
        %862 = vmatprep.subr.mxu0 0.0
        %863 = vmatpush2.msra.mxu0 0.0
        %864 = vmatprep.subr.mxu0 0.0
        %865 = vmatpush2.msra.mxu0 0.0
        %866 = vmatprep.subr.mxu0 0.0
        %867 = vmatpush2.msra.mxu0 0.0
        %868 = vmatprep.subr.mxu0 0.0
        %869 = vmatpush2.msra.mxu0 0.0
        %870 = vmatprep.subr.mxu0 0.0
        %871 = vmatpush2.msra.mxu0 0.0
        %872 = vmatprep.subr.mxu0 0.0
        %873 = vmatpush2.msra.mxu0 0.0
        %874 = vmatprep.mubr.f32.mxu0 0.0
        %875 = vmatmul.mubr.f32.gmra.mxu0 %v452
        %v876 = vpop.f32.mrf.mxu0
        %v877 = vadd.f32 0.0, %v876
        %v878 = vpop.f32.mrf.mxu0
        %v879 = vadd.f32 0.0, %v878
        %880 = vdwg.mxu0
        %881 = vmatprep.subr.mxu0 0.0
        %882 = vmatpush1.msra.mxu0 %v596
        %883 = vmatprep.subr.mxu0 0.0
        %884 = vmatpush1.msra.mxu0 %v587
        %885 = vmatprep.subr.mxu0 0.0
        %886 = vmatpush1.msra.mxu0 %v578
        %887 = vmatprep.subr.mxu0 0.0
        %888 = vmatpush1.msra.mxu0 %v569
        %889 = vmatprep.subr.mxu0 0.0
        %890 = vmatpush1.msra.mxu0 %v560
        %891 = vmatprep.subr.mxu0 0.0
        %892 = vmatpush1.msra.mxu0 %v551
        %893 = vmatprep.subr.mxu0 0.0
        %894 = vmatpush1.msra.mxu0 %v542
        %895 = vmatprep.subr.mxu0 0.0
        %896 = vmatpush1.msra.mxu0 %v533
        %897 = vmatprep.subr.mxu0 0.0
        %898 = vmatpush1.msra.mxu0 %v524
        %899 = vmatprep.subr.mxu0 0.0
        %900 = vmatpush1.msra.mxu0 %v515
        %901 = vmatprep.subr.mxu0 0.0
        %902 = vmatpush1.msra.mxu0 %v506
        %903 = vmatprep.subr.mxu0 0.0
        %904 = vmatpush1.msra.mxu0 %v497
        %905 = vmatprep.subr.mxu0 0.0
        %906 = vmatpush1.msra.mxu0 %v488
        %907 = vmatprep.subr.mxu0 0.0
        %908 = vmatpush1.msra.mxu0 %v479
        %909 = vmatprep.subr.mxu0 0.0
        %910 = vmatpush1.msra.mxu0 %v470
        %911 = vmatprep.subr.mxu0 0.0
        %912 = vmatpush1.msra.mxu0 %v461
        %913 = vmatprep.subr.mxu0 0.0
        %914 = vmatpush2.msra.mxu0 0.0
        %915 = vmatprep.subr.mxu0 0.0
        %916 = vmatpush2.msra.mxu0 0.0
        %917 = vmatprep.subr.mxu0 0.0
        %918 = vmatpush2.msra.mxu0 0.0
        %919 = vmatprep.subr.mxu0 0.0
        %920 = vmatpush2.msra.mxu0 0.0
        %921 = vmatprep.subr.mxu0 0.0
        %922 = vmatpush2.msra.mxu0 0.0
        %923 = vmatprep.subr.mxu0 0.0
        %924 = vmatpush2.msra.mxu0 0.0
        %925 = vmatprep.subr.mxu0 0.0
        %926 = vmatpush2.msra.mxu0 0.0
        %927 = vmatprep.subr.mxu0 0.0
        %928 = vmatpush2.msra.mxu0 0.0
        %929 = vmatprep.subr.mxu0 0.0
        %930 = vmatpush2.msra.mxu0 0.0
        %931 = vmatprep.subr.mxu0 0.0
        %932 = vmatpush2.msra.mxu0 0.0
        %933 = vmatprep.subr.mxu0 0.0
        %934 = vmatpush2.msra.mxu0 0.0
        %935 = vmatprep.subr.mxu0 0.0
        %936 = vmatpush2.msra.mxu0 0.0
        %937 = vmatprep.subr.mxu0 0.0
        %938 = vmatpush2.msra.mxu0 0.0
        %939 = vmatprep.subr.mxu0 0.0
        %940 = vmatpush2.msra.mxu0 0.0
        %941 = vmatprep.subr.mxu0 0.0
        %942 = vmatpush2.msra.mxu0 0.0
        %943 = vmatprep.subr.mxu0 0.0
        %944 = vmatpush2.msra.mxu0 0.0
        %945 = vmatprep.mubr.f32.mxu0 0.0
        %946 = vmatmul.mubr.f32.gmra.mxu0 %v452
        %v947 = vpop.f32.mrf.mxu0
        %v948 = vadd.f32 0.0, %v947
        %v949 = vpop.f32.mrf.mxu0
        %950 = vdwg.mxu0
        %v951 = vtanh.pop %v664
        %v952 = vtanh.pop %v666
        %v953 = vtanh.pop %v735
        %v954 = vtanh.pop %v737
        %v955 = vtanh.pop %v806
        %v956 = vtanh.pop %v808
        %v957 = vtanh.pop %v877
        %v958 = vtanh.pop %v879
        %v959 = vtanh.pop %v948
        %960 = vst [vmem:[%s450] sm:$0xff] %v951
        %961 = vst [vmem:[%s450 + $0x8] sm:$0xff] %v952
        %962 = vst [vmem:[%s450 + $0x10] sm:$0xff] %v953
        %963 = vst [vmem:[%s450 + $0x18] sm:$0xff] %v954
        %964 = vst [vmem:[%s450 + $0x20] sm:$0xff] %v955
        %965 = vst [vmem:[%s450 + $0x28] sm:$0xff] %v956
        %966 = vst [vmem:[%s450 + $0x30] sm:$0xff] %v957
        %967 = vst [vmem:[%s450 + $0x38] sm:$0xff] %v958
        %968 = vst [vmem:[%s450 + $0x40] sm:$0xff] %v959
        %s969 = smul.u32 9, %s13
        %p970 = scmp.lt.s32.totalorder %s969, 17
        %s971 = scalar_select %p970, %s969, 17
        %s972 = smul.addr %s971, 8
        %s973 = scalar_lea.vmem %s2, %s972
        // Predicated region
        $region52: #{generator_forward.9} parent=46 // pred_check
          %p974 = pneg %p78
        $region53: #{generator_forward.9} parent=46 // pred_check_branch
          %976 = sbr.rel (%p974) target = $region55
        $region54: #{generator_forward.9} parent=46 // pred_region
          %s977 = smul.u32 9, %s13
        $region55: #{generator_forward.9} parent=46 // pred_fallthru
          _
      $region47: #{generator_forward.9} parent=5 // pred_fallthru
        _
      %p978 = scmp.le.s32.totalorder 2, %s8
      // Predicated region
      $region56: #{generator_forward.9} parent=5 // pred_check
        %p979 = pneg %p978
      $region57: #{generator_forward.9} parent=5 // pred_check_branch
        %981 = sbr.rel (%p979) target = $region59
      $region58: #{generator_forward.9} parent=5 // pred_region
        %s982 = ssub.s32 %s8, 2
        // Predicated region
        $region60: #{generator_forward.9} parent=58 // pred_check
          %p983 = pneg %p84
        $region61: #{generator_forward.9} parent=58 // pred_check_branch
          %985 = sbr.rel (%p983) target = $region63
        $region62: #{generator_forward.9} parent=58 // pred_region
          %s986 = smul.u32 9, %s14
          %p987 = scmp.lt.s32.totalorder %s986, 17
          %s988 = scalar_select %p987, %s986, 17
          %s989 = smul.addr %s988, 8
          %s990 = scalar_lea.vmem %s2, %s989
        $region63: #{generator_forward.9} parent=58 // pred_fallthru
          _
      $region59: #{generator_forward.9} parent=5 // pred_fallthru
        _
    $region6: #{generator_forward.9} parent=1 // loop_footer
      %s12 = sadd.s32 1, %s8
    $region7: #{generator_forward.9} parent=1 // loop_footer_branch
      %7 = sbr.rel target = $region3
    $region8: #{generator_forward.9} parent=1 // loop_exit
      _

</llo_original>
